<compile_context>
chip_gen: v6e
topology: v6e:2x2x1
jax: 0.10.0
libtpu: 0.0.40
codegen_flags: <defaults>
</compile_context>

<pallas_src>
import functools
import math

import jax
import jax.numpy as jnp
from jax import lax
from jax.experimental import pallas as pl
from jax.experimental.pallas import tpu as pltpu

LANE = 128
_VMEM_LIMIT = 64 * 1024 * 1024  # safe on v5e/v6e/v7x; well above actual usage


def _round_up(x, m):
    return (x + m - 1) // m * m


# ---------------------------------------------------------------------------
# Plain-JAX helpers (glue / tiny ops)
# ---------------------------------------------------------------------------
def _layernorm_jax(x, g, b, eps=1e-5):
    mu = jnp.mean(x, axis=-1, keepdims=True)
    var = jnp.mean((x - mu) ** 2, axis=-1, keepdims=True)
    return (x - mu) * lax.rsqrt(var + eps) * g + b


def to_patches(img, p):
    # 'b c (h p1) (w p2) -> b (h w) (p1 p2 c)'
    B, C, H, W = img.shape
    h, w = H // p, W // p
    x = img.reshape(B, C, h, p, w, p)
    x = x.transpose(0, 2, 4, 3, 5, 1)          # (B, h, w, p1, p2, C)
    return x.reshape(B, h * w, p * p * C)


# ---------------------------------------------------------------------------
# Kernel 1: patch embedding (gridded over batch, fused bias + pos-emb epilogue)
# ---------------------------------------------------------------------------
def patch_embed_kernel(x_ref, w_ref, add_ref, o_ref):
    x = x_ref[...]                                          # (n, patch_dim) f32
    y = jnp.dot(x.astype(jnp.bfloat16), w_ref[...],
                preferred_element_type=jnp.float32)         # (n, Dp), lane-dense
    o_ref[...] = y + add_ref[...]


def patch_embed(patches, w_bf16, add):
    B, n, K = patches.shape
    Dp = w_bf16.shape[1]
    return pl.pallas_call(
        patch_embed_kernel,
        out_shape=jax.ShapeDtypeStruct((B, n, Dp), jnp.float32),
        grid=(B,),
        in_specs=[
            pl.BlockSpec((None, n, K), lambda b: (b, 0, 0)),   # patches (pipelined)
            pl.BlockSpec((K, Dp), lambda b: (0, 0)),           # weight (resident)
            pl.BlockSpec((None, n, Dp), lambda b: (0, 0, 0)),  # bias + pos (resident)
        ],
        out_specs=pl.BlockSpec((None, n, Dp), lambda b: (b, 0, 0)),
        compiler_params=pltpu.CompilerParams(
            dimension_semantics=("parallel",),
            vmem_limit_bytes=_VMEM_LIMIT),
    )(patches, w_bf16, add)


# ---------------------------------------------------------------------------
# Kernel 2: the full transformer stack, grid = (batch, layer)
# ---------------------------------------------------------------------------
def transformer_layers_kernel(heads, dim_head, dim, eps,
                              x_ref, ln1g_ref, ln1b_ref,
                              wq_ref, wk_ref, wv_ref, wo_ref, bo_ref,
                              ln2g_ref, ln2b_ref, w1_ref, b1_ref, w2_ref,
                              b2_ref, o_ref):
    layer = pl.program_id(1)

    @pl.when(layer == 0)
    def _init():
        # Load the embedded tokens once; the residual stream then stays
        # resident in the output VMEM block across the layer axis.
        o_ref[...] = x_ref[...]

    x = o_ref[...]                                # (N, Dp) f32 residual stream
    scale = jnp.float32(dim_head ** -0.5)
    inv_d = jnp.float32(1.0 / dim)
    bf16 = jnp.bfloat16

    def masked_layernorm(v, g, b):
        # Lanes >= dim hold zero padding; keep them out of mean/variance.
        lane = lax.broadcasted_iota(jnp.int32, v.shape, 1)
        mu = jnp.sum(v, axis=-1, keepdims=True) * inv_d
        c = jnp.where(lane < dim, v - mu, 0.0)
        var = jnp.sum(c * c, axis=-1, keepdims=True) * inv_d
        return c * lax.rsqrt(var + eps) * g + b   # padded lanes -> 0 (g,b padded 0)

    # ---- attention branch: x = x + Attn(LN(x)) @ Wo + bo ----
    h = masked_layernorm(x, ln1g_ref[...], ln1b_ref[...])           # (N, Dp) f32
    hb = jnp.broadcast_to(h.astype(bf16), (heads,) + h.shape)       # (H, N, Dp)
    q = jnp.einsum('hnd,hde->hne', hb, wq_ref[...],
                   preferred_element_type=jnp.float32)              # (H, N, dh)
    k = jnp.einsum('hnd,hde->hne', hb, wk_ref[...],
                   preferred_element_type=jnp.float32)
    v = jnp.einsum('hnd,hde->hne', hb, wv_ref[...],
                   preferred_element_type=jnp.float32)

    dots = jnp.einsum('hqd,hkd->hqk', q.astype(bf16), k.astype(bf16),
                      preferred_element_type=jnp.float32) * scale   # (H, N, N)
    m = jnp.max(dots, axis=-1, keepdims=True)
    p = jnp.exp(dots - m)
    attn = p * pl.reciprocal(jnp.sum(p, axis=-1, keepdims=True), approx=True)
    ctx = jnp.einsum('hqk,hkd->hqd', attn.astype(bf16), v.astype(bf16),
                     preferred_element_type=jnp.float32)            # (H, N, dh)
    # concat-over-heads @ Wo  ==  sum_h ctx[h] @ Wo[h]
    proj = jnp.einsum('hnd,hde->hne', ctx.astype(bf16), wo_ref[...],
                      preferred_element_type=jnp.float32)           # (H, N, Dp)
    x = x + jnp.sum(proj, axis=0) + bo_ref[...]

    # ---- feed-forward branch: x = x + W2 GELU(W1 LN(x) + b1) + b2 ----
    h2 = masked_layernorm(x, ln2g_ref[...], ln2b_ref[...])
    hid = jnp.dot(h2.astype(bf16), w1_ref[...],
                  preferred_element_type=jnp.float32) + b1_ref[...]  # (N, Mp)
    hid = 0.5 * hid * (1.0 + lax.erf(hid * jnp.float32(1.0 / math.sqrt(2.0))))
    ff = jnp.dot(hid.astype(bf16), w2_ref[...],
                 preferred_element_type=jnp.float32) + b2_ref[...]   # (N, Dp)

    o_ref[...] = x + ff


def transformer_stack(seq, packed, heads, dim_head, dim):
    B, N, Dp = seq.shape
    depth = packed['wq'].shape[0]
    Mp = packed['w1'].shape[-1]
    dh = dim_head

    kernel = functools.partial(transformer_layers_kernel,
                               heads, dim_head, dim, 1e-5)

    act = lambda b, l: (b, 0, 0)        # activation block: resident across layers
    w3 = lambda b, l: (l, 0, 0)         # per-layer 3-D weights/biases
    w4 = lambda b, l: (l, 0, 0, 0)      # per-layer per-head 4-D weights

    return pl.pallas_call(
        kernel,
        out_shape=jax.ShapeDtypeStruct((B, N, Dp), jnp.float32),
        grid=(B, depth),
        in_specs=[
            pl.BlockSpec((None, N, Dp), act),              # tokens
            pl.BlockSpec((None, 1, Dp), w3),               # ln1 gamma
            pl.BlockSpec((None, 1, Dp), w3),               # ln1 beta
            pl.BlockSpec((None, heads, Dp, dh), w4),       # Wq  (per head)
            pl.BlockSpec((None, heads, Dp, dh), w4),       # Wk
            pl.BlockSpec((None, heads, Dp, dh), w4),       # Wv
            pl.BlockSpec((None, heads, dh, Dp), w4),       # Wo  (per head)
            pl.BlockSpec((None, 1, Dp), w3),               # bo
            pl.BlockSpec((None, 1, Dp), w3),               # ln2 gamma
            pl.BlockSpec((None, 1, Dp), w3),               # ln2 beta
            pl.BlockSpec((None, Dp, Mp), w3),              # W1
            pl.BlockSpec((None, 1, Mp), w3),               # b1
            pl.BlockSpec((None, Mp, Dp), w3),              # W2
            pl.BlockSpec((None, 1, Dp), w3),               # b2
        ],
        out_specs=pl.BlockSpec((None, N, Dp), act),
        compiler_params=pltpu.CompilerParams(
            dimension_semantics=("parallel", "arbitrary"),
            vmem_limit_bytes=_VMEM_LIMIT),
    )(seq, packed['ln1_g'], packed['ln1_b'], packed['wq'], packed['wk'],
      packed['wv'], packed['wo'], packed['bo'], packed['ln2_g'],
      packed['ln2_b'], packed['w1'], packed['b1'], packed['w2'], packed['b2'])


# ---------------------------------------------------------------------------
# Parameter init (logical shapes follow ViT_local.__init__) and device packing
# ---------------------------------------------------------------------------
def init_params(key, *, image_size, patch_size, channels, dim, depth,
                heads, dim_head, mlp_dim):
    h = image_size // patch_size
    num_patches = h * h
    patch_dim = channels * patch_size * patch_size
    inner = heads * dim_head

    def nrm(k, shape, scale=0.02):
        return scale * jax.random.normal(k, shape, jnp.float32)

    keys = jax.random.split(key, 8 + depth)
    params = {
        'patch_w': nrm(keys[0], (patch_dim, dim)),
        'patch_b': jnp.zeros((dim,), jnp.float32),
        'pos_inter': jax.random.normal(keys[1], (1, num_patches, dim), jnp.float32),
        'pos_x': jax.random.normal(keys[2], (1, 1, dim), jnp.float32),
        'pos_y': jax.random.normal(keys[3], (1, 1, dim), jnp.float32),
        'pos_z': jax.random.normal(keys[4], (1, 1, dim), jnp.float32),
        'cls1': jax.random.normal(keys[5], (1, 1, dim), jnp.float32),
        'cls2': jax.random.normal(keys[6], (1, 1, dim), jnp.float32),
        'cls3': jax.random.normal(keys[7], (1, 1, dim), jnp.float32),
        'final_g': jnp.ones((dim,), jnp.float32),
        'final_b': jnp.zeros((dim,), jnp.float32),
        'layers': [],
    }
    for l in range(depth):
        lk = jax.random.split(keys[8 + l], 4)
        params['layers'].append({
            'ln1_g': jnp.ones((dim,), jnp.float32),
            'ln1_b': jnp.zeros((dim,), jnp.float32),
            'wqkv': nrm(lk[0], (dim, 3 * inner)),      # to_qkv (no bias)
            'wo': nrm(lk[1], (inner, dim)),
            'bo': jnp.zeros((dim,), jnp.float32),
            'ln2_g': jnp.ones((dim,), jnp.float32),
            'ln2_b': jnp.zeros((dim,), jnp.float32),
            'w1': nrm(lk[2], (dim, mlp_dim)),
            'b1': jnp.zeros((mlp_dim,), jnp.float32),
            'w2': nrm(lk[3], (mlp_dim, dim)),
            'b2': jnp.zeros((dim,), jnp.float32),
        })
    return params


def pack_params(params, cfg):
    """Pad to lane-dense (128) layouts, split qkv per head, stack over layers,
    cast matmul weights to bf16 (biases / LN params stay f32)."""
    dim, heads, dh = cfg['dim'], cfg['heads'], cfg['dim_head']
    mlp, _ = cfg['mlp_dim'], cfg['depth']
    inner = heads * dh
    Dp = _round_up(dim, LANE)
    Mp = _round_up(mlp, LANE)
    layers = params['layers']

    def pad_last(a, size):
        return jnp.pad(a, [(0, 0)] * (a.ndim - 1) + [(0, size - a.shape[-1])])

    def per_head_in(w):   # (dim, inner) -> (heads, Dp, dh)
        w = w.reshape(dim, heads, dh).transpose(1, 0, 2)
        return jnp.pad(w, ((0, 0), (0, Dp - dim), (0, 0)))

    def per_head_out(w):  # (inner, dim) -> (heads, dh, Dp)
        return pad_last(w.reshape(heads, dh, dim), Dp)

    def stack_vec(name, size):
        return jnp.stack([pad_last(lp[name].reshape(1, -1), size)
                          for lp in layers])          # (depth, 1, size) f32

    bf16 = jnp.bfloat16
    packed = {
        'wq': jnp.stack([per_head_in(lp['wqkv'][:, 0 * inner:1 * inner])
                         for lp in layers]).astype(bf16),
        'wk': jnp.stack([per_head_in(lp['wqkv'][:, 1 * inner:2 * inner])
                         for lp in layers]).astype(bf16),
        'wv': jnp.stack([per_head_in(lp['wqkv'][:, 2 * inner:3 * inner])
                         for lp in layers]).astype(bf16),
        'wo': jnp.stack([per_head_out(lp['wo']) for lp in layers]).astype(bf16),
        'w1': jnp.stack([jnp.pad(lp['w1'], ((0, Dp - dim), (0, Mp - mlp)))
                         for lp in layers]).astype(bf16),
        'w2': jnp.stack([jnp.pad(lp['w2'], ((0, Mp - mlp), (0, Dp - dim)))
                         for lp in layers]).astype(bf16),
        'ln1_g': stack_vec('ln1_g', Dp), 'ln1_b': stack_vec('ln1_b', Dp),
        'ln2_g': stack_vec('ln2_g', Dp), 'ln2_b': stack_vec('ln2_b', Dp),
        'bo': stack_vec('bo', Dp), 'b1': stack_vec('b1', Mp),
        'b2': stack_vec('b2', Dp),
        'patch_w': pad_last(params['patch_w'], Dp).astype(bf16),
        'patch_b': pad_last(params['patch_b'].reshape(1, 1, dim), Dp),
        'pos_inter': pad_last(params['pos_inter'], Dp),
        'pos_x': pad_last(params['pos_x'], Dp),
        'pos_y': pad_last(params['pos_y'], Dp),
        'pos_z': pad_last(params['pos_z'], Dp),
        'cls1': pad_last(params['cls1'], Dp),
        'cls2': pad_last(params['cls2'], Dp),
        'cls3': pad_last(params['cls3'], Dp),
        'final_g': params['final_g'],
        'final_b': params['final_b'],
    }
    return packed


# ---------------------------------------------------------------------------
# Forward pass (glue in JAX, compute in Pallas)
# ---------------------------------------------------------------------------
def vit_local_forward(packed, cfg, img1, img2, img3):
    p, dim = cfg['patch_size'], cfg['dim']
    heads, dh = cfg['heads'], cfg['dim_head']
    B = img1.shape[0]
    Dp = packed['patch_w'].shape[1]

    def embed(img, pos_intra):
        patches = to_patches(img, p)                              # (B, n, patch_dim)
        n = patches.shape[1]
        # bias + intra + inter positional embedding fused into kernel epilogue
        add = packed['patch_b'] + pos_intra + packed['pos_inter'][:, :n]
        return patch_embed(patches, packed['patch_w'], add)       # (B, n, Dp)

    x = embed(img1, packed['pos_x'])
    y = embed(img2, packed['pos_y'])
    z = embed(img3, packed['pos_z'])

    cls1 = jnp.broadcast_to(packed['cls1'] + packed['pos_x'], (B, 1, Dp))
    cls2 = jnp.broadcast_to(packed['cls2'] + packed['pos_y'], (B, 1, Dp))
    cls3 = jnp.broadcast_to(packed['cls3'] + packed['pos_z'], (B, 1, Dp))

    seq = jnp.concatenate((cls1, cls2, cls3, x, y, z), axis=1)    # (B, 3+3n, Dp)
    # TODO(synk): dropout layers are identity at inference (p=0.0); omitted.

    seq = transformer_stack(seq, packed, heads, dh, dim)

    cls = seq[:, 0:3, :dim]                                       # pool == 'cls'
    cls = _layernorm_jax(cls, packed['final_g'], packed['final_b'])
    return cls[:, 0], cls[:, 1], cls[:, 2]


# ---------------------------------------------------------------------------
if __name__ == "__main__":
    cfg = dict(image_size=16, patch_size=8, channels=4, dim=32, depth=2,
               heads=4, dim_head=8, mlp_dim=64)

    root = jax.random.PRNGKey(0)
    pkey, dkey = jax.random.split(root)
    params = init_params(pkey, **cfg)
    packed = pack_params(params, cfg)

    k1, k2, k3 = jax.random.split(dkey, 3)
    img_shape = (2, cfg['channels'], cfg['image_size'], cfg['image_size'])
    img1 = jax.random.normal(k1, img_shape, jnp.float32)
    img2 = jax.random.normal(k2, img_shape, jnp.float32)
    img3 = jax.random.normal(k3, img_shape, jnp.float32)

    fwd = jax.jit(lambda pk, a, b, c: vit_local_forward(pk, cfg, a, b, c))
    e1, e2, e3 = fwd(packed, img1, img2, img3)
    jax.block_until_ready((e1, e2, e3))

    assert e1.shape == (2, cfg['dim'])
    assert e2.shape == (2, cfg['dim'])
    assert e3.shape == (2, cfg['dim'])
    assert bool(jnp.all(jnp.isfinite(e1)) & jnp.all(jnp.isfinite(e2))
                & jnp.all(jnp.isfinite(e3)))
    print("KERNEL_OK")
</pallas_src>

<mosaic_0001>
module attributes {stable_mosaic.version = 11 : i64} {
  func.func @patch_embed_kernel(%arg0: i32, %arg1: memref<1x4x256xf32, #tpu.memory_space<vmem>>, %arg2: memref<256x128xbf16, #tpu.memory_space<vmem>>, %arg3: memref<1x4x128xf32, #tpu.memory_space<vmem>>, %arg4: memref<1x4x128xf32, #tpu.memory_space<vmem>>) attributes {dimension_semantics = [#tpu.dimension_semantics<parallel>], iteration_bounds = array<i64: 2>, scalar_prefetch = 0 : i64, scratch_operands = 0 : i64, tpu.core_type = #tpu.core_type<tc>, window_params = [{transform_indices = @transform_0, window_bounds = array<i64: 1, 4, 256>}, {pipeline_mode = #tpu.pipeline_mode<synchronous>, transform_indices = @transform_1, window_bounds = array<i64: 256, 128>}, {pipeline_mode = #tpu.pipeline_mode<synchronous>, transform_indices = @transform_2, window_bounds = array<i64: 1, 4, 128>}, {transform_indices = @transform_3, window_bounds = array<i64: 1, 4, 128>}]} {
    %c0 = arith.constant 0 : index
    %c0_0 = arith.constant 0 : index
    %c0_1 = arith.constant 0 : index
    %0 = vector.load %arg1[%c0, %c0_0, %c0_1] : memref<1x4x256xf32, #tpu.memory_space<vmem>>, vector<1x4x256xf32>
    %1 = vector.shape_cast %0 : vector<1x4x256xf32> to vector<4x256xf32>
    %2 = arith.truncf %1 : vector<4x256xf32> to vector<4x256xbf16>
    %c0_2 = arith.constant 0 : index
    %c0_3 = arith.constant 0 : index
    %3 = vector.load %arg2[%c0_2, %c0_3] : memref<256x128xbf16, #tpu.memory_space<vmem>>, vector<256x128xbf16>
    %cst = arith.constant dense<0.000000e+00> : vector<4x128xf32>
    %4 = tpu.matmul %2, %3, %cst {dimension_numbers = #tpu.dot_dimension_numbers<[1], [0], [0], [1], [0, 0, 1, 1], [], []>} : vector<4x256xbf16>, vector<256x128xbf16>, vector<4x128xf32> -> vector<4x128xf32>
    %c0_4 = arith.constant 0 : index
    %c0_5 = arith.constant 0 : index
    %c0_6 = arith.constant 0 : index
    %5 = vector.load %arg3[%c0_4, %c0_5, %c0_6] : memref<1x4x128xf32, #tpu.memory_space<vmem>>, vector<1x4x128xf32>
    %6 = vector.shape_cast %5 : vector<1x4x128xf32> to vector<4x128xf32>
    %7 = arith.addf %4, %6 : vector<4x128xf32>
    %c0_7 = arith.constant 0 : index
    %c0_8 = arith.constant 0 : index
    %c0_9 = arith.constant 0 : index
    %8 = vector.load %arg4[%c0_7, %c0_8, %c0_9] : memref<1x4x128xf32, #tpu.memory_space<vmem>>, vector<1x4x128xf32>
    %9 = vector.shape_cast %8 : vector<1x4x128xf32> to vector<4x128xf32>
    %10 = vector.shape_cast %7 : vector<4x128xf32> to vector<1x4x128xf32>
    tpu.vector_store %arg4[%c0_7, %c0_8, %c0_9], %10 {strides = array<i32>} : memref<1x4x128xf32, #tpu.memory_space<vmem>>, vector<1x4x128xf32>,
    return
  }
  func.func @transform_0(%arg0: i32) -> (i32, i32, i32) {
    %c0_i32 = arith.constant 0 : i32
    %c0_i32_0 = arith.constant 0 : i32
    %c0_i32_1 = arith.constant 0 : i32
    return %arg0, %c0_i32, %c0_i32_0 : i32, i32, i32
  }
  func.func @transform_1(%arg0: i32) -> (i32, i32) {
    %c0_i32 = arith.constant 0 : i32
    %c0_i32_0 = arith.constant 0 : i32
    %c0_i32_1 = arith.constant 0 : i32
    return %c0_i32, %c0_i32_0 : i32, i32
  }
  func.func @transform_2(%arg0: i32) -> (i32, i32, i32) {
    %c0_i32 = arith.constant 0 : i32
    %c0_i32_0 = arith.constant 0 : i32
    %c0_i32_1 = arith.constant 0 : i32
    %c0_i32_2 = arith.constant 0 : i32
    return %c0_i32, %c0_i32_0, %c0_i32_1 : i32, i32, i32
  }
  func.func @transform_3(%arg0: i32) -> (i32, i32, i32) {
    %c0_i32 = arith.constant 0 : i32
    %c0_i32_0 = arith.constant 0 : i32
    %c0_i32_1 = arith.constant 0 : i32
    return %arg0, %c0_i32, %c0_i32_0 : i32, i32, i32
  }
}

module attributes {stable_mosaic.version = 11 : i64} {
  func.func @transformer_layers_kernel(%arg0: i32, %arg1: i32, %arg2: memref<1x15x128xf32, #tpu.memory_space<vmem>>, %arg3: memref<1x1x128xf32, #tpu.memory_space<vmem>>, %arg4: memref<1x1x128xf32, #tpu.memory_space<vmem>>, %arg5: memref<1x4x128x8xbf16, #tpu.memory_space<vmem>>, %arg6: memref<1x4x128x8xbf16, #tpu.memory_space<vmem>>, %arg7: memref<1x4x128x8xbf16, #tpu.memory_space<vmem>>, %arg8: memref<1x4x8x128xbf16, #tpu.memory_space<vmem>>, %arg9: memref<1x1x128xf32, #tpu.memory_space<vmem>>, %arg10: memref<1x1x128xf32, #tpu.memory_space<vmem>>, %arg11: memref<1x1x128xf32, #tpu.memory_space<vmem>>, %arg12: memref<1x128x128xbf16, #tpu.memory_space<vmem>>, %arg13: memref<1x1x128xf32, #tpu.memory_space<vmem>>, %arg14: memref<1x128x128xbf16, #tpu.memory_space<vmem>>, %arg15: memref<1x1x128xf32, #tpu.memory_space<vmem>>, %arg16: memref<1x15x128xf32, #tpu.memory_space<vmem>>) attributes {dimension_semantics = [#tpu.dimension_semantics<parallel>, #tpu.dimension_semantics<arbitrary>], iteration_bounds = array<i64: 2, 2>, scalar_prefetch = 0 : i64, scratch_operands = 0 : i64, tpu.core_type = #tpu.core_type<tc>, window_params = [{transform_indices = @transform_0, window_bounds = array<i64: 1, 15, 128>}, {transform_indices = @transform_1, window_bounds = array<i64: 1, 1, 128>}, {transform_indices = @transform_2, window_bounds = array<i64: 1, 1, 128>}, {transform_indices = @transform_3, window_bounds = array<i64: 1, 4, 128, 8>}, {transform_indices = @transform_4, window_bounds = array<i64: 1, 4, 128, 8>}, {transform_indices = @transform_5, window_bounds = array<i64: 1, 4, 128, 8>}, {transform_indices = @transform_6, window_bounds = array<i64: 1, 4, 8, 128>}, {transform_indices = @transform_7, window_bounds = array<i64: 1, 1, 128>}, {transform_indices = @transform_8, window_bounds = array<i64: 1, 1, 128>}, {transform_indices = @transform_9, window_bounds = array<i64: 1, 1, 128>}, {transform_indices = @transform_10, window_bounds = array<i64: 1, 128, 128>}, {transform_indices = @transform_11, window_bounds = array<i64: 1, 1, 128>}, {transform_indices = @transform_12, window_bounds = array<i64: 1, 128, 128>}, {transform_indices = @transform_13, window_bounds = array<i64: 1, 1, 128>}, {transform_indices = @transform_14, window_bounds = array<i64: 1, 15, 128>}]} {
    %c0_i32 = arith.constant 0 : i32
    %0 = arith.cmpi eq, %arg1, %c0_i32 : i32
    %1 = arith.extui %0 : i1 to i32
    %c0_i32_0 = arith.constant 0 : i32
    %2 = arith.cmpi ne, %1, %c0_i32_0 : i32
    scf.if %2 {
      %c0_76 = arith.constant 0 : index
      %c0_77 = arith.constant 0 : index
      %c0_78 = arith.constant 0 : index
      %131 = vector.load %arg2[%c0_76, %c0_77, %c0_78] : memref<1x15x128xf32, #tpu.memory_space<vmem>>, vector<1x15x128xf32>
      %132 = vector.shape_cast %131 : vector<1x15x128xf32> to vector<15x128xf32>
      %c0_79 = arith.constant 0 : index
      %c0_80 = arith.constant 0 : index
      %c0_81 = arith.constant 0 : index
      %133 = vector.load %arg16[%c0_79, %c0_80, %c0_81] : memref<1x15x128xf32, #tpu.memory_space<vmem>>, vector<1x15x128xf32>
      %134 = vector.shape_cast %133 : vector<1x15x128xf32> to vector<15x128xf32>
      %135 = vector.shape_cast %132 : vector<15x128xf32> to vector<1x15x128xf32>
      tpu.vector_store %arg16[%c0_79, %c0_80, %c0_81], %135 {strides = array<i32>} : memref<1x15x128xf32, #tpu.memory_space<vmem>>, vector<1x15x128xf32>,
    } else {
    }
    %c0 = arith.constant 0 : index
    %c0_1 = arith.constant 0 : index
    %c0_2 = arith.constant 0 : index
    %3 = vector.load %arg16[%c0, %c0_1, %c0_2] : memref<1x15x128xf32, #tpu.memory_space<vmem>>, vector<1x15x128xf32>
    %4 = vector.shape_cast %3 : vector<1x15x128xf32> to vector<15x128xf32>
    %c0_3 = arith.constant 0 : index
    %c0_4 = arith.constant 0 : index
    %c0_5 = arith.constant 0 : index
    %5 = vector.load %arg3[%c0_3, %c0_4, %c0_5] : memref<1x1x128xf32, #tpu.memory_space<vmem>>, vector<1x1x128xf32>
    %6 = vector.shape_cast %5 : vector<1x1x128xf32> to vector<1x128xf32>
    %c0_6 = arith.constant 0 : index
    %c0_7 = arith.constant 0 : index
    %c0_8 = arith.constant 0 : index
    %7 = vector.load %arg4[%c0_6, %c0_7, %c0_8] : memref<1x1x128xf32, #tpu.memory_space<vmem>>, vector<1x1x128xf32>
    %8 = vector.shape_cast %7 : vector<1x1x128xf32> to vector<1x128xf32>
    %9 = tpu.iota {dimensions = array<i32: 1>} : vector<15x128xi32>
    %cst = arith.constant dense<0.000000e+00> : vector<15xf32>
    %10 = vector.multi_reduction <add>, %4, %cst [1] : vector<15x128xf32> to vector<15xf32>
    %11 = vector.shape_cast %10 : vector<15xf32> to vector<15x1xf32>
    %cst_9 = arith.constant 3.125000e-02 : f32
    %12 = vector.broadcast %cst_9 : f32 to vector<15x1xf32>
    %13 = arith.mulf %11, %12 : vector<15x1xf32>
    %c32_i32 = arith.constant 32 : i32
    %14 = vector.broadcast %c32_i32 : i32 to vector<15x128xi32>
    %15 = arith.cmpi slt, %9, %14 : vector<15x128xi32>
    %16 = vector.broadcast %13 : vector<15x1xf32> to vector<15x128xf32>
    %17 = arith.subf %4, %16 : vector<15x128xf32>
    %cst_10 = arith.constant 0.000000e+00 : f32
    %18 = vector.broadcast %cst_10 : f32 to vector<15x128xf32>
    %19 = arith.select %15, %17, %18 : vector<15x128xi1>, vector<15x128xf32>
    %20 = arith.mulf %19, %19 : vector<15x128xf32>
    %cst_11 = arith.constant dense<0.000000e+00> : vector<15xf32>
    %21 = vector.multi_reduction <add>, %20, %cst_11 [1] : vector<15x128xf32> to vector<15xf32>
    %22 = vector.shape_cast %21 : vector<15xf32> to vector<15x1xf32>
    %cst_12 = arith.constant 3.125000e-02 : f32
    %23 = vector.broadcast %cst_12 : f32 to vector<15x1xf32>
    %24 = arith.mulf %22, %23 : vector<15x1xf32>
    %cst_13 = arith.constant 9.99999974E-6 : f32
    %25 = vector.broadcast %cst_13 : f32 to vector<15x1xf32>
    %26 = arith.addf %24, %25 : vector<15x1xf32>
    %27 = math.rsqrt %26 : vector<15x1xf32>
    %28 = vector.broadcast %27 : vector<15x1xf32> to vector<15x128xf32>
    %29 = arith.mulf %19, %28 : vector<15x128xf32>
    %30 = vector.broadcast %6 : vector<1x128xf32> to vector<15x128xf32>
    %31 = arith.mulf %29, %30 : vector<15x128xf32>
    %32 = vector.broadcast %8 : vector<1x128xf32> to vector<15x128xf32>
    %33 = arith.addf %31, %32 : vector<15x128xf32>
    %34 = arith.truncf %33 : vector<15x128xf32> to vector<15x128xbf16>
    %35 = vector.shape_cast %34 : vector<15x128xbf16> to vector<1x15x128xbf16>
    %36 = vector.broadcast %35 : vector<1x15x128xbf16> to vector<4x15x128xbf16>
    %c0_14 = arith.constant 0 : index
    %c0_15 = arith.constant 0 : index
    %c0_16 = arith.constant 0 : index
    %c0_17 = arith.constant 0 : index
    %37 = vector.load %arg5[%c0_14, %c0_15, %c0_16, %c0_17] : memref<1x4x128x8xbf16, #tpu.memory_space<vmem>>, vector<1x4x128x8xbf16>
    %38 = vector.shape_cast %37 : vector<1x4x128x8xbf16> to vector<4x128x8xbf16>
    "tpu.trace_start"() <{level = 10 : i32, message = "hnd,hde->hne"}> : () -> ()
    %cst_18 = arith.constant dense<0.000000e+00> : vector<4x15x8xf32>
    %39 = tpu.matmul %36, %38, %cst_18 {dimension_numbers = #tpu.dot_dimension_numbers<[2], [1], [1], [2], [0, 0, 0, 1, 1, 2], [0], [0]>} : vector<4x15x128xbf16>, vector<4x128x8xbf16>, vector<4x15x8xf32> -> vector<4x15x8xf32>
    "tpu.trace_stop"() : () -> ()
    %c0_19 = arith.constant 0 : index
    %c0_20 = arith.constant 0 : index
    %c0_21 = arith.constant 0 : index
    %c0_22 = arith.constant 0 : index
    %40 = vector.load %arg6[%c0_19, %c0_20, %c0_21, %c0_22] : memref<1x4x128x8xbf16, #tpu.memory_space<vmem>>, vector<1x4x128x8xbf16>
    %41 = vector.shape_cast %40 : vector<1x4x128x8xbf16> to vector<4x128x8xbf16>
    "tpu.trace_start"() <{level = 10 : i32, message = "hnd,hde->hne"}> : () -> ()
    %cst_23 = arith.constant dense<0.000000e+00> : vector<4x15x8xf32>
    %42 = tpu.matmul %36, %41, %cst_23 {dimension_numbers = #tpu.dot_dimension_numbers<[2], [1], [1], [2], [0, 0, 0, 1, 1, 2], [0], [0]>} : vector<4x15x128xbf16>, vector<4x128x8xbf16>, vector<4x15x8xf32> -> vector<4x15x8xf32>
    "tpu.trace_stop"() : () -> ()
    %c0_24 = arith.constant 0 : index
    %c0_25 = arith.constant 0 : index
    %c0_26 = arith.constant 0 : index
    %c0_27 = arith.constant 0 : index
    %43 = vector.load %arg7[%c0_24, %c0_25, %c0_26, %c0_27] : memref<1x4x128x8xbf16, #tpu.memory_space<vmem>>, vector<1x4x128x8xbf16>
    %44 = vector.shape_cast %43 : vector<1x4x128x8xbf16> to vector<4x128x8xbf16>
    "tpu.trace_start"() <{level = 10 : i32, message = "hnd,hde->hne"}> : () -> ()
    %cst_28 = arith.constant dense<0.000000e+00> : vector<4x15x8xf32>
    %45 = tpu.matmul %36, %44, %cst_28 {dimension_numbers = #tpu.dot_dimension_numbers<[2], [1], [1], [2], [0, 0, 0, 1, 1, 2], [0], [0]>} : vector<4x15x128xbf16>, vector<4x128x8xbf16>, vector<4x15x8xf32> -> vector<4x15x8xf32>
    "tpu.trace_stop"() : () -> ()
    %46 = arith.truncf %39 : vector<4x15x8xf32> to vector<4x15x8xbf16>
    %47 = arith.truncf %42 : vector<4x15x8xf32> to vector<4x15x8xbf16>
    "tpu.trace_start"() <{level = 10 : i32, message = "hqd,hkd->hqk"}> : () -> ()
    %cst_29 = arith.constant dense<0.000000e+00> : vector<4x15x15xf32>
    %48 = tpu.matmul %46, %47, %cst_29 {dimension_numbers = #tpu.dot_dimension_numbers<[2], [2], [1], [1], [0, 0, 0, 1, 1, 1], [0], [0]>} : vector<4x15x8xbf16>, vector<4x15x8xbf16>, vector<4x15x15xf32> -> vector<4x15x15xf32>
    "tpu.trace_stop"() : () -> ()
    %cst_30 = arith.constant 0.353553385 : f32
    %49 = vector.broadcast %cst_30 : f32 to vector<4x15x15xf32>
    %50 = arith.mulf %48, %49 : vector<4x15x15xf32>
    %cst_31 = arith.constant dense<0xFF800000> : vector<4x15xf32>
    %51 = vector.multi_reduction <maximumf>, %50, %cst_31 [2] : vector<4x15x15xf32> to vector<4x15xf32>
    %52 = vector.shape_cast %51 : vector<4x15xf32> to vector<4x15x1xf32>
    %53 = vector.broadcast %52 : vector<4x15x1xf32> to vector<4x15x15xf32>
    %54 = arith.subf %50, %53 : vector<4x15x15xf32>
    %55 = math.exp %54 : vector<4x15x15xf32>
    %cst_32 = arith.constant dense<0.000000e+00> : vector<4x15xf32>
    %56 = vector.multi_reduction <add>, %55, %cst_32 [2] : vector<4x15x15xf32> to vector<4x15xf32>
    %57 = vector.shape_cast %56 : vector<4x15xf32> to vector<4x15x1xf32>
    %58 = tpu.reciprocal %57 {approx = true} : vector<4x15x1xf32> -> vector<4x15x1xf32>
    %59 = vector.broadcast %58 : vector<4x15x1xf32> to vector<4x15x15xf32>
    %60 = arith.mulf %55, %59 : vector<4x15x15xf32>
    %61 = arith.truncf %60 : vector<4x15x15xf32> to vector<4x15x15xbf16>
    %62 = arith.truncf %45 : vector<4x15x8xf32> to vector<4x15x8xbf16>
    "tpu.trace_start"() <{level = 10 : i32, message = "hqk,hkd->hqd"}> : () -> ()
    %cst_33 = arith.constant dense<0.000000e+00> : vector<4x15x8xf32>
    %63 = tpu.matmul %61, %62, %cst_33 {dimension_numbers = #tpu.dot_dimension_numbers<[2], [1], [1], [2], [0, 0, 0, 1, 1, 2], [0], [0]>} : vector<4x15x15xbf16>, vector<4x15x8xbf16>, vector<4x15x8xf32> -> vector<4x15x8xf32>
    "tpu.trace_stop"() : () -> ()
    %64 = arith.truncf %63 : vector<4x15x8xf32> to vector<4x15x8xbf16>
    %c0_34 = arith.constant 0 : index
    %c0_35 = arith.constant 0 : index
    %c0_36 = arith.constant 0 : index
    %c0_37 = arith.constant 0 : index
    %65 = vector.load %arg8[%c0_34, %c0_35, %c0_36, %c0_37] : memref<1x4x8x128xbf16, #tpu.memory_space<vmem>>, vector<1x4x8x128xbf16>
    %66 = vector.shape_cast %65 : vector<1x4x8x128xbf16> to vector<4x8x128xbf16>
    "tpu.trace_start"() <{level = 10 : i32, message = "hnd,hde->hne"}> : () -> ()
    %cst_38 = arith.constant dense<0.000000e+00> : vector<4x15x128xf32>
    %67 = tpu.matmul %64, %66, %cst_38 {dimension_numbers = #tpu.dot_dimension_numbers<[2], [1], [1], [2], [0, 0, 0, 1, 1, 2], [0], [0]>} : vector<4x15x8xbf16>, vector<4x8x128xbf16>, vector<4x15x128xf32> -> vector<4x15x128xf32>
    "tpu.trace_stop"() : () -> ()
    %cst_39 = arith.constant dense<0.000000e+00> : vector<15x128xf32>
    %68 = vector.multi_reduction <add>, %67, %cst_39 [0] : vector<4x15x128xf32> to vector<15x128xf32>
    %69 = arith.addf %4, %68 : vector<15x128xf32>
    %c0_40 = arith.constant 0 : index
    %c0_41 = arith.constant 0 : index
    %c0_42 = arith.constant 0 : index
    %70 = vector.load %arg9[%c0_40, %c0_41, %c0_42] : memref<1x1x128xf32, #tpu.memory_space<vmem>>, vector<1x1x128xf32>
    %71 = vector.shape_cast %70 : vector<1x1x128xf32> to vector<1x128xf32>
    %72 = vector.broadcast %71 : vector<1x128xf32> to vector<15x128xf32>
    %73 = arith.addf %69, %72 : vector<15x128xf32>
    %c0_43 = arith.constant 0 : index
    %c0_44 = arith.constant 0 : index
    %c0_45 = arith.constant 0 : index
    %74 = vector.load %arg10[%c0_43, %c0_44, %c0_45] : memref<1x1x128xf32, #tpu.memory_space<vmem>>, vector<1x1x128xf32>
    %75 = vector.shape_cast %74 : vector<1x1x128xf32> to vector<1x128xf32>
    %c0_46 = arith.constant 0 : index
    %c0_47 = arith.constant 0 : index
    %c0_48 = arith.constant 0 : index
    %76 = vector.load %arg11[%c0_46, %c0_47, %c0_48] : memref<1x1x128xf32, #tpu.memory_space<vmem>>, vector<1x1x128xf32>
    %77 = vector.shape_cast %76 : vector<1x1x128xf32> to vector<1x128xf32>
    %78 = tpu.iota {dimensions = array<i32: 1>} : vector<15x128xi32>
    %cst_49 = arith.constant dense<0.000000e+00> : vector<15xf32>
    %79 = vector.multi_reduction <add>, %73, %cst_49 [1] : vector<15x128xf32> to vector<15xf32>
    %80 = vector.shape_cast %79 : vector<15xf32> to vector<15x1xf32>
    %cst_50 = arith.constant 3.125000e-02 : f32
    %81 = vector.broadcast %cst_50 : f32 to vector<15x1xf32>
    %82 = arith.mulf %80, %81 : vector<15x1xf32>
    %c32_i32_51 = arith.constant 32 : i32
    %83 = vector.broadcast %c32_i32_51 : i32 to vector<15x128xi32>
    %84 = arith.cmpi slt, %78, %83 : vector<15x128xi32>
    %85 = vector.broadcast %82 : vector<15x1xf32> to vector<15x128xf32>
    %86 = arith.subf %73, %85 : vector<15x128xf32>
    %cst_52 = arith.constant 0.000000e+00 : f32
    %87 = vector.broadcast %cst_52 : f32 to vector<15x128xf32>
    %88 = arith.select %84, %86, %87 : vector<15x128xi1>, vector<15x128xf32>
    %89 = arith.mulf %88, %88 : vector<15x128xf32>
    %cst_53 = arith.constant dense<0.000000e+00> : vector<15xf32>
    %90 = vector.multi_reduction <add>, %89, %cst_53 [1] : vector<15x128xf32> to vector<15xf32>
    %91 = vector.shape_cast %90 : vector<15xf32> to vector<15x1xf32>
    %cst_54 = arith.constant 3.125000e-02 : f32
    %92 = vector.broadcast %cst_54 : f32 to vector<15x1xf32>
    %93 = arith.mulf %91, %92 : vector<15x1xf32>
    %cst_55 = arith.constant 9.99999974E-6 : f32
    %94 = vector.broadcast %cst_55 : f32 to vector<15x1xf32>
    %95 = arith.addf %93, %94 : vector<15x1xf32>
    %96 = math.rsqrt %95 : vector<15x1xf32>
    %97 = vector.broadcast %96 : vector<15x1xf32> to vector<15x128xf32>
    %98 = arith.mulf %88, %97 : vector<15x128xf32>
    %99 = vector.broadcast %75 : vector<1x128xf32> to vector<15x128xf32>
    %100 = arith.mulf %98, %99 : vector<15x128xf32>
    %101 = vector.broadcast %77 : vector<1x128xf32> to vector<15x128xf32>
    %102 = arith.addf %100, %101 : vector<15x128xf32>
    %103 = arith.truncf %102 : vector<15x128xf32> to vector<15x128xbf16>
    %c0_56 = arith.constant 0 : index
    %c0_57 = arith.constant 0 : index
    %c0_58 = arith.constant 0 : index
    %104 = vector.load %arg12[%c0_56, %c0_57, %c0_58] : memref<1x128x128xbf16, #tpu.memory_space<vmem>>, vector<1x128x128xbf16>
    %105 = vector.shape_cast %104 : vector<1x128x128xbf16> to vector<128x128xbf16>
    %cst_59 = arith.constant dense<0.000000e+00> : vector<15x128xf32>
    %106 = tpu.matmul %103, %105, %cst_59 {dimension_numbers = #tpu.dot_dimension_numbers<[1], [0], [0], [1], [0, 0, 1, 1], [], []>} : vector<15x128xbf16>, vector<128x128xbf16>, vector<15x128xf32> -> vector<15x128xf32>
    %c0_60 = arith.constant 0 : index
    %c0_61 = arith.constant 0 : index
    %c0_62 = arith.constant 0 : index
    %107 = vector.load %arg13[%c0_60, %c0_61, %c0_62] : memref<1x1x128xf32, #tpu.memory_space<vmem>>, vector<1x1x128xf32>
    %108 = vector.shape_cast %107 : vector<1x1x128xf32> to vector<1x128xf32>
    %109 = vector.broadcast %108 : vector<1x128xf32> to vector<15x128xf32>
    %110 = arith.addf %106, %109 : vector<15x128xf32>
    %cst_63 = arith.constant 5.000000e-01 : f32
    %111 = vector.broadcast %cst_63 : f32 to vector<15x128xf32>
    %112 = arith.mulf %111, %110 : vector<15x128xf32>
    %cst_64 = arith.constant 0.707106769 : f32
    %113 = vector.broadcast %cst_64 : f32 to vector<15x128xf32>
    %114 = arith.mulf %110, %113 : vector<15x128xf32>
    %115 = math.erf %114 : vector<15x128xf32>
    %cst_65 = arith.constant 1.000000e+00 : f32
    %116 = vector.broadcast %cst_65 : f32 to vector<15x128xf32>
    %117 = arith.addf %116, %115 : vector<15x128xf32>
    %118 = arith.mulf %112, %117 : vector<15x128xf32>
    %119 = arith.truncf %118 : vector<15x128xf32> to vector<15x128xbf16>
    %c0_66 = arith.constant 0 : index
    %c0_67 = arith.constant 0 : index
    %c0_68 = arith.constant 0 : index
    %120 = vector.load %arg14[%c0_66, %c0_67, %c0_68] : memref<1x128x128xbf16, #tpu.memory_space<vmem>>, vector<1x128x128xbf16>
    %121 = vector.shape_cast %120 : vector<1x128x128xbf16> to vector<128x128xbf16>
    %cst_69 = arith.constant dense<0.000000e+00> : vector<15x128xf32>
    %122 = tpu.matmul %119, %121, %cst_69 {dimension_numbers = #tpu.dot_dimension_numbers<[1], [0], [0], [1], [0, 0, 1, 1], [], []>} : vector<15x128xbf16>, vector<128x128xbf16>, vector<15x128xf32> -> vector<15x128xf32>
    %c0_70 = arith.constant 0 : index
    %c0_71 = arith.constant 0 : index
    %c0_72 = arith.constant 0 : index
    %123 = vector.load %arg15[%c0_70, %c0_71, %c0_72] : memref<1x1x128xf32, #tpu.memory_space<vmem>>, vector<1x1x128xf32>
    %124 = vector.shape_cast %123 : vector<1x1x128xf32> to vector<1x128xf32>
    %125 = vector.broadcast %124 : vector<1x128xf32> to vector<15x128xf32>
    %126 = arith.addf %122, %125 : vector<15x128xf32>
    %127 = arith.addf %73, %126 : vector<15x128xf32>
    %c0_73 = arith.constant 0 : index
    %c0_74 = arith.constant 0 : index
    %c0_75 = arith.constant 0 : index
    %128 = vector.load %arg16[%c0_73, %c0_74, %c0_75] : memref<1x15x128xf32, #tpu.memory_space<vmem>>, vector<1x15x128xf32>
    %129 = vector.shape_cast %128 : vector<1x15x128xf32> to vector<15x128xf32>
    %130 = vector.shape_cast %127 : vector<15x128xf32> to vector<1x15x128xf32>
    tpu.vector_store %arg16[%c0_73, %c0_74, %c0_75], %130 {strides = array<i32>} : memref<1x15x128xf32, #tpu.memory_space<vmem>>, vector<1x15x128xf32>,
    return
  }
  func.func @transform_0(%arg0: i32, %arg1: i32) -> (i32, i32, i32) {
    %c0_i32 = arith.constant 0 : i32
    %c0_i32_0 = arith.constant 0 : i32
    %c0_i32_1 = arith.constant 0 : i32
    return %arg0, %c0_i32, %c0_i32_0 : i32, i32, i32
  }
  func.func @transform_1(%arg0: i32, %arg1: i32) -> (i32, i32, i32) {
    %c0_i32 = arith.constant 0 : i32
    %c0_i32_0 = arith.constant 0 : i32
    %c0_i32_1 = arith.constant 0 : i32
    return %arg1, %c0_i32, %c0_i32_0 : i32, i32, i32
  }
  func.func @transform_2(%arg0: i32, %arg1: i32) -> (i32, i32, i32) {
    %c0_i32 = arith.constant 0 : i32
    %c0_i32_0 = arith.constant 0 : i32
    %c0_i32_1 = arith.constant 0 : i32
    return %arg1, %c0_i32, %c0_i32_0 : i32, i32, i32
  }
  func.func @transform_3(%arg0: i32, %arg1: i32) -> (i32, i32, i32, i32) {
    %c0_i32 = arith.constant 0 : i32
    %c0_i32_0 = arith.constant 0 : i32
    %c0_i32_1 = arith.constant 0 : i32
    %c0_i32_2 = arith.constant 0 : i32
    return %arg1, %c0_i32, %c0_i32_0, %c0_i32_1 : i32, i32, i32, i32
  }
  func.func @transform_4(%arg0: i32, %arg1: i32) -> (i32, i32, i32, i32) {
    %c0_i32 = arith.constant 0 : i32
    %c0_i32_0 = arith.constant 0 : i32
    %c0_i32_1 = arith.constant 0 : i32
    %c0_i32_2 = arith.constant 0 : i32
    return %arg1, %c0_i32, %c0_i32_0, %c0_i32_1 : i32, i32, i32, i32
  }
  func.func @transform_5(%arg0: i32, %arg1: i32) -> (i32, i32, i32, i32) {
    %c0_i32 = arith.constant 0 : i32
    %c0_i32_0 = arith.constant 0 : i32
    %c0_i32_1 = arith.constant 0 : i32
    %c0_i32_2 = arith.constant 0 : i32
    return %arg1, %c0_i32, %c0_i32_0, %c0_i32_1 : i32, i32, i32, i32
  }
  func.func @transform_6(%arg0: i32, %arg1: i32) -> (i32, i32, i32, i32) {
    %c0_i32 = arith.constant 0 : i32
    %c0_i32_0 = arith.constant 0 : i32
    %c0_i32_1 = arith.constant 0 : i32
    %c0_i32_2 = arith.constant 0 : i32
    return %arg1, %c0_i32, %c0_i32_0, %c0_i32_1 : i32, i32, i32, i32
  }
  func.func @transform_7(%arg0: i32, %arg1: i32) -> (i32, i32, i32) {
    %c0_i32 = arith.constant 0 : i32
    %c0_i32_0 = arith.constant 0 : i32
    %c0_i32_1 = arith.constant 0 : i32
    return %arg1, %c0_i32, %c0_i32_0 : i32, i32, i32
  }
  func.func @transform_8(%arg0: i32, %arg1: i32) -> (i32, i32, i32) {
    %c0_i32 = arith.constant 0 : i32
    %c0_i32_0 = arith.constant 0 : i32
    %c0_i32_1 = arith.constant 0 : i32
    return %arg1, %c0_i32, %c0_i32_0 : i32, i32, i32
  }
  func.func @transform_9(%arg0: i32, %arg1: i32) -> (i32, i32, i32) {
    %c0_i32 = arith.constant 0 : i32
    %c0_i32_0 = arith.constant 0 : i32
    %c0_i32_1 = arith.constant 0 : i32
    return %arg1, %c0_i32, %c0_i32_0 : i32, i32, i32
  }
  func.func @transform_10(%arg0: i32, %arg1: i32) -> (i32, i32, i32) {
    %c0_i32 = arith.constant 0 : i32
    %c0_i32_0 = arith.constant 0 : i32
    %c0_i32_1 = arith.constant 0 : i32
    return %arg1, %c0_i32, %c0_i32_0 : i32, i32, i32
  }
  func.func @transform_11(%arg0: i32, %arg1: i32) -> (i32, i32, i32) {
    %c0_i32 = arith.constant 0 : i32
    %c0_i32_0 = arith.constant 0 : i32
    %c0_i32_1 = arith.constant 0 : i32
    return %arg1, %c0_i32, %c0_i32_0 : i32, i32, i32
  }
  func.func @transform_12(%arg0: i32, %arg1: i32) -> (i32, i32, i32) {
    %c0_i32 = arith.constant 0 : i32
    %c0_i32_0 = arith.constant 0 : i32
    %c0_i32_1 = arith.constant 0 : i32
    return %arg1, %c0_i32, %c0_i32_0 : i32, i32, i32
  }
  func.func @transform_13(%arg0: i32, %arg1: i32) -> (i32, i32, i32) {
    %c0_i32 = arith.constant 0 : i32
    %c0_i32_0 = arith.constant 0 : i32
    %c0_i32_1 = arith.constant 0 : i32
    return %arg1, %c0_i32, %c0_i32_0 : i32, i32, i32
  }
  func.func @transform_14(%arg0: i32, %arg1: i32) -> (i32, i32, i32) {
    %c0_i32 = arith.constant 0 : i32
    %c0_i32_0 = arith.constant 0 : i32
    %c0_i32_1 = arith.constant 0 : i32
    return %arg0, %c0_i32, %c0_i32_0 : i32, i32, i32
  }
}

</mosaic_0001>

<llo_original>
// kernel: _lambda_.4
$region0: #{_lambda_.4}
  #allocation0 [shape = 'u32[]', space=smem, size = 0x4, offset = 0x4, fixed_abs, tag = 'smem constant byte address 0x4 - core index']
  #allocation1 [shape = 'u32[144,128]{1,0:T(1,128)}', space=vmem, size = 0x12000, scoped, tag = 'internal scratch']
  %s0 = inlined_call_operand.vmem [shape: f32[2,4,256], index: 0, kind: input, shape index: {}]
  %s1 = inlined_call_operand.vmem [shape: bf16[256,128], index: 1, kind: input, shape index: {}]
  %s2 = inlined_call_operand.vmem [shape: f32[1,4,128], index: 2, kind: input, shape index: {}]
  %s3 = inlined_call_operand.vmem [shape: f32[2,4,128], index: 3, kind: output, shape index: {}]
  %s4 = sld [smem:[#allocation0]]
  $region45: #{_lambda_.4} parent=0
    _
  %s6 = ssub.s32 1, %s4
  %s7 = scalar_select 0, %s6, %s4
  loop: start=0, step=1, limit=4
  $region2: #{_lambda_.4} parent=0 // loop_pre_header
    _
  $region3: #{_lambda_.4} parent=0 // loop_header
    %s9 = sphi 0, %s13
    %p10 = scmp.ge.s32.totalorder %s9, 4
    %s19 = sphi 0, %s21
    %s22 = sphi 0, %s19
    %s23 = sphi 0, %s22
    %s39 = sphi 0, %s23
    %s43 = sphi 0, %s43
    %s45 = sphi 0, %s43
    %s46 = sphi 0, %s45
    %s60 = sphi 0, %s46
    %s64 = sphi 0, %s64
    %s66 = sphi 0, %s64
    %s67 = sphi 0, %s66
    %s81 = sphi 0, %s67
    %s87 = sphi 0, %s89
    %s90 = sphi 0, %s87
    %s91 = sphi 0, %s90
    %s107 = sphi 0, %s91
  $region4: #{_lambda_.4} parent=0 // loop_header_branch
    %12 = sbr.rel (%p10) target = $region8
  $region5: #{_lambda_.4} parent=0 // loop_body
    %s14 = ssub.s32 %s9, 1
    %s15 = ssub.s32 %s9, 2
    %s16 = sadd.s32 %s9, 1
    %s17 = ssub.s32 %s9, %s16
    %p18 = scmp.eq.s32.totalorder %s17, 0
    %s20 = sadd.s32 %s19, 1
    %s21 = scalar_select %p18, %s19, %s20
    %p24 = pneg %p18
    %p25 = scmp.eq.s32.totalorder %s9, 1
    %p26 = por %p24, %p25
    %p27 = scmp.ne.s32.totalorder %s19, %s22
    %p28 = scmp.eq.s32.totalorder %s9, 0
    %p29 = por %p27, %p28
    %p30 = scmp.ne.s32.totalorder %s19, %s22
    %p31 = scmp.eq.s32.totalorder %s14, 1
    %p32 = por %p30, %p31
    %p33 = scmp.ne.s32.totalorder %s22, %s23
    %p34 = scmp.eq.s32.totalorder %s14, 0
    %p35 = por %p33, %p34
    %p36 = scmp.ne.s32.totalorder %s22, %s23
    %p37 = scmp.eq.s32.totalorder %s15, 1
    %p38 = por %p36, %p37
    %p40 = scmp.ne.s32.totalorder %s23, %s39
    %p41 = scmp.eq.s32.totalorder %s15, 0
    %p42 = por %p40, %p41
    %s44 = sadd.s32 %s43, 1
    %p47 = scmp.eq.s32.totalorder %s9, 1
    %p48 = scmp.ne.s32.totalorder %s43, %s45
    %p49 = scmp.eq.s32.totalorder %s9, 0
    %p50 = por %p48, %p49
    %p51 = scmp.ne.s32.totalorder %s43, %s45
    %p52 = scmp.eq.s32.totalorder %s14, 1
    %p53 = por %p51, %p52
    %p54 = scmp.ne.s32.totalorder %s45, %s46
    %p55 = scmp.eq.s32.totalorder %s14, 0
    %p56 = por %p54, %p55
    %p57 = scmp.ne.s32.totalorder %s45, %s46
    %p58 = scmp.eq.s32.totalorder %s15, 1
    %p59 = por %p57, %p58
    %p61 = scmp.ne.s32.totalorder %s46, %s60
    %p62 = scmp.eq.s32.totalorder %s15, 0
    %p63 = por %p61, %p62
    %s65 = sadd.s32 %s64, 1
    %p68 = scmp.eq.s32.totalorder %s9, 1
    %p69 = scmp.ne.s32.totalorder %s64, %s66
    %p70 = scmp.eq.s32.totalorder %s9, 0
    %p71 = por %p69, %p70
    %p72 = scmp.ne.s32.totalorder %s64, %s66
    %p73 = scmp.eq.s32.totalorder %s14, 1
    %p74 = por %p72, %p73
    %p75 = scmp.ne.s32.totalorder %s66, %s67
    %p76 = scmp.eq.s32.totalorder %s14, 0
    %p77 = por %p75, %p76
    %p78 = scmp.ne.s32.totalorder %s66, %s67
    %p79 = scmp.eq.s32.totalorder %s15, 1
    %p80 = por %p78, %p79
    %p82 = scmp.ne.s32.totalorder %s67, %s81
    %p83 = scmp.eq.s32.totalorder %s15, 0
    %p84 = por %p82, %p83
    %s85 = ssub.s32 %s9, %s16
    %p86 = scmp.eq.s32.totalorder %s85, 0
    %s88 = sadd.s32 %s87, 1
    %s89 = scalar_select %p86, %s87, %s88
    %p92 = pneg %p86
    %p93 = scmp.eq.s32.totalorder %s9, 1
    %p94 = por %p92, %p93
    %p95 = scmp.ne.s32.totalorder %s87, %s90
    %p96 = scmp.eq.s32.totalorder %s9, 0
    %p97 = por %p95, %p96
    %p98 = scmp.ne.s32.totalorder %s87, %s90
    %p99 = scmp.eq.s32.totalorder %s14, 1
    %p100 = por %p98, %p99
    %p101 = scmp.ne.s32.totalorder %s90, %s91
    %p102 = scmp.eq.s32.totalorder %s14, 0
    %p103 = por %p101, %p102
    %p104 = scmp.ne.s32.totalorder %s90, %s91
    %p105 = scmp.eq.s32.totalorder %s15, 1
    %p106 = por %p104, %p105
    %p108 = scmp.ne.s32.totalorder %s91, %s107
    %p109 = scmp.eq.s32.totalorder %s15, 0
    %p110 = por %p108, %p109
    %p111 = scmp.le.s32.totalorder 1, %s9
    %p112 = scmp.lt.s32.totalorder %s9, 3
    %p113 = pnand %p111, %p112
    %p114 = pneg %p113
    // Predicated region
    $region9: #{_lambda_.4} parent=5 // pred_check
      _
    $region10: #{_lambda_.4} parent=5 // pred_check_branch
      %116 = sbr.rel (%p113) target = $region12
    $region11: #{_lambda_.4} parent=5 // pred_region
      %s117 = ssub.s32 %s9, 1
      // Predicated region
      $region13: #{_lambda_.4} parent=11 // pred_check
        %p118 = pneg %p56
      $region14: #{_lambda_.4} parent=11 // pred_check_branch
        %120 = sbr.rel (%p118) target = $region16
      $region15: #{_lambda_.4} parent=11 // pred_region
        _
      $region16: #{_lambda_.4} parent=11 // pred_fallthru
        _
      // Predicated region
      $region17: #{_lambda_.4} parent=11 // pred_check
        %p121 = pneg %p77
      $region18: #{_lambda_.4} parent=11 // pred_check_branch
        %123 = sbr.rel (%p121) target = $region20
      $region19: #{_lambda_.4} parent=11 // pred_region
        _
      $region20: #{_lambda_.4} parent=11 // pred_fallthru
        _
    $region12: #{_lambda_.4} parent=5 // pred_fallthru
      _
    %p124 = scmp.lt.s32.totalorder %s9, 2
    // Predicated region
    $region21: #{_lambda_.4} parent=5 // pred_check
      %p125 = pneg %p124
    $region22: #{_lambda_.4} parent=5 // pred_check_branch
      %127 = sbr.rel (%p125) target = $region24
    $region23: #{_lambda_.4} parent=5 // pred_region
      // Predicated region
      $region25: #{_lambda_.4} parent=23 // pred_check
        %p128 = pneg %p29
      $region26: #{_lambda_.4} parent=23 // pred_check_branch
        %130 = sbr.rel (%p128) target = $region28
      $region27: #{_lambda_.4} parent=23 // pred_region
        %p131 = scmp.lt.s32.totalorder %s9, 1
        %s132 = scalar_select %p131, %s9, 1
        %s133 = smul.addr %s132, 2
        %s134 = smul.addr %s133, 4
        %s135 = scalar_lea.vmem %s0, %s134
      $region28: #{_lambda_.4} parent=23 // pred_fallthru
        _
    $region24: #{_lambda_.4} parent=5 // pred_fallthru
      _
    %p136 = scmp.le.s32.totalorder 1, %s9
    %p137 = scmp.lt.s32.totalorder %s9, 3
    %p138 = pnand %p136, %p137
    %p139 = pneg %p138
    // Predicated region
    $region29: #{_lambda_.4} parent=5 // pred_check
      _
    $region30: #{_lambda_.4} parent=5 // pred_check_branch
      %141 = sbr.rel (%p138) target = $region32
    $region31: #{_lambda_.4} parent=5 // pred_region
      %s142 = ssub.s32 %s9, 1
      %p143 = scmp.lt.s32.totalorder %s14, 1
      %s144 = scalar_select %p143, %s14, 1
      %s145 = smul.addr %s144, 2
      %s146 = smul.addr %s145, 4
      %s147 = scalar_lea.vmem %s0, %s146
      %p148 = pneg %p35
      %p149 = pneg %p32
      %p150 = pneg %p56
      %p151 = pneg %p53
      %p152 = pneg %p77
      %p153 = pneg %p74
      %p154 = pneg %p103
      %p155 = pneg %p100
      %p156 = scmp.lt.s32.totalorder %s14, 1
      %s157 = scalar_select %p156, %s14, 1
      %s158 = smul.addr %s157, 4
      %s159 = scalar_lea.vmem %s3, %s158
      %p160 = scmp.lt.s32.totalorder %s14, 1
      %s161 = scalar_select %p160, %s14, 1
      %s162 = smul.addr %s161, 2
      %s163 = smul.addr %s162, 4
      %s164 = scalar_lea.vmem %s0, %s163
      %p165 = scmp.lt.s32.totalorder %s14, 1
      %s166 = scalar_select %p165, %s14, 1
      %s167 = smul.addr %s166, 4
      %s168 = scalar_lea.vmem %s3, %s167
      %v170 = vld [vmem:[%s164] sm:$0xff]
      %v172 = vcombine.high %v170, %v170
      %v174 = vpack.c.bf16 %v170, %v170
      %v175 = vpack.c.bf16 %v172, %v172
      %v176 = vld [vmem:[%s1] sm:$0xf]
      %v177 = vld [vmem:[%s1 + $0x4] sm:$0xf]
      %v178 = vld [vmem:[%s1 + $0x8] sm:$0xf]
      %v179 = vld [vmem:[%s1 + $0xc] sm:$0xf]
      %v180 = vld [vmem:[%s1 + $0x10] sm:$0xf]
      %v181 = vld [vmem:[%s1 + $0x14] sm:$0xf]
      %v182 = vld [vmem:[%s1 + $0x18] sm:$0xf]
      %v183 = vld [vmem:[%s1 + $0x1c] sm:$0xf]
      %v184 = vld [vmem:[%s1 + $0x20] sm:$0xf]
      %v185 = vld [vmem:[%s1 + $0x24] sm:$0xf]
      %v186 = vld [vmem:[%s1 + $0x28] sm:$0xf]
      %v187 = vld [vmem:[%s1 + $0x2c] sm:$0xf]
      %v188 = vld [vmem:[%s1 + $0x30] sm:$0xf]
      %v189 = vld [vmem:[%s1 + $0x34] sm:$0xf]
      %v190 = vld [vmem:[%s1 + $0x38] sm:$0xf]
      %v191 = vld [vmem:[%s1 + $0x3c] sm:$0xf]
      %v192 = vld [vmem:[%s1 + $0x40] sm:$0xf]
      %v193 = vld [vmem:[%s1 + $0x44] sm:$0xf]
      %v194 = vld [vmem:[%s1 + $0x48] sm:$0xf]
      %v195 = vld [vmem:[%s1 + $0x4c] sm:$0xf]
      %v196 = vld [vmem:[%s1 + $0x50] sm:$0xf]
      %v197 = vld [vmem:[%s1 + $0x54] sm:$0xf]
      %v198 = vld [vmem:[%s1 + $0x58] sm:$0xf]
      %v199 = vld [vmem:[%s1 + $0x5c] sm:$0xf]
      %v200 = vld [vmem:[%s1 + $0x60] sm:$0xf]
      %v201 = vld [vmem:[%s1 + $0x64] sm:$0xf]
      %v202 = vld [vmem:[%s1 + $0x68] sm:$0xf]
      %v203 = vld [vmem:[%s1 + $0x6c] sm:$0xf]
      %v204 = vld [vmem:[%s1 + $0x70] sm:$0xf]
      %v205 = vld [vmem:[%s1 + $0x74] sm:$0xf]
      %v206 = vld [vmem:[%s1 + $0x78] sm:$0xf]
      %v207 = vld [vmem:[%s1 + $0x7c] sm:$0xf]
      %v208 = vld [vmem:[%s2] sm:$0xf]
      %v241 = vunpack.c.l.b16 %v176
      %v242 = vunpack.c.l.b16 %v177
      %v243 = vunpack.c.l.b16 %v178
      %v244 = vunpack.c.l.b16 %v179
      %v245 = vunpack.c.l.b16 %v180
      %v246 = vunpack.c.l.b16 %v181
      %v247 = vunpack.c.l.b16 %v182
      %v248 = vunpack.c.l.b16 %v183
      %v249 = vunpack.c.l.b16 %v184
      %v250 = vunpack.c.l.b16 %v185
      %v251 = vunpack.c.l.b16 %v186
      %v252 = vunpack.c.l.b16 %v187
      %v253 = vunpack.c.l.b16 %v188
      %v254 = vunpack.c.l.b16 %v189
      %v255 = vunpack.c.l.b16 %v190
      %v256 = vunpack.c.l.b16 %v191
      %v257 = vunpack.c.l.b16 %v192
      %v258 = vunpack.c.l.b16 %v193
      %v259 = vunpack.c.l.b16 %v194
      %v260 = vunpack.c.l.b16 %v195
      %v261 = vunpack.c.l.b16 %v196
      %v262 = vunpack.c.l.b16 %v197
      %v263 = vunpack.c.l.b16 %v198
      %v264 = vunpack.c.l.b16 %v199
      %v265 = vunpack.c.l.b16 %v200
      %v266 = vunpack.c.l.b16 %v201
      %v267 = vunpack.c.l.b16 %v202
      %v268 = vunpack.c.l.b16 %v203
      %v269 = vunpack.c.l.b16 %v204
      %v270 = vunpack.c.l.b16 %v205
      %v271 = vunpack.c.l.b16 %v206
      %v272 = vunpack.c.l.b16 %v207
      %v273 = vpack.c.b16 %v242, %v241
      %v274 = vpack.c.b16 %v244, %v243
      %v275 = vpack.c.b16 %v246, %v245
      %v276 = vpack.c.b16 %v248, %v247
      %v277 = vpack.c.b16 %v250, %v249
      %v278 = vpack.c.b16 %v252, %v251
      %v279 = vpack.c.b16 %v254, %v253
      %v280 = vpack.c.b16 %v256, %v255
      %v281 = vpack.c.b16 %v258, %v257
      %v282 = vpack.c.b16 %v260, %v259
      %v283 = vpack.c.b16 %v262, %v261
      %v284 = vpack.c.b16 %v264, %v263
      %v285 = vpack.c.b16 %v266, %v265
      %v286 = vpack.c.b16 %v268, %v267
      %v287 = vpack.c.b16 %v270, %v269
      %v288 = vpack.c.b16 %v272, %v271
      %305 = vmatprep.subr.bf16.mxu0 0
      %306 = vmatpush1.bf16.msra.mxu0 %v280
      %307 = vmatprep.subr.bf16.mxu0 0
      %308 = vmatpush1.bf16.msra.mxu0 %v279
      %309 = vmatprep.subr.bf16.mxu0 0
      %310 = vmatpush1.bf16.msra.mxu0 %v278
      %311 = vmatprep.subr.bf16.mxu0 0
      %312 = vmatpush1.bf16.msra.mxu0 %v277
      %313 = vmatprep.subr.bf16.mxu0 0
      %314 = vmatpush1.bf16.msra.mxu0 %v276
      %315 = vmatprep.subr.bf16.mxu0 0
      %316 = vmatpush1.bf16.msra.mxu0 %v275
      %317 = vmatprep.subr.bf16.mxu0 0
      %318 = vmatpush1.bf16.msra.mxu0 %v274
      %319 = vmatprep.subr.bf16.mxu0 0
      %320 = vmatpush1.bf16.msra.mxu0 %v273
      %321 = vmatprep.subr.bf16.mxu0 0
      %322 = vmatpush2.bf16.msra.mxu0 %v288
      %323 = vmatprep.subr.bf16.mxu0 0
      %324 = vmatpush2.bf16.msra.mxu0 %v287
      %325 = vmatprep.subr.bf16.mxu0 0
      %326 = vmatpush2.bf16.msra.mxu0 %v286
      %327 = vmatprep.subr.bf16.mxu0 0
      %328 = vmatpush2.bf16.msra.mxu0 %v285
      %329 = vmatprep.subr.bf16.mxu0 0
      %330 = vmatpush2.bf16.msra.mxu0 %v284
      %331 = vmatprep.subr.bf16.mxu0 0
      %332 = vmatpush2.bf16.msra.mxu0 %v283
      %333 = vmatprep.subr.bf16.mxu0 0
      %334 = vmatpush2.bf16.msra.mxu0 %v282
      %335 = vmatprep.subr.bf16.mxu0 0
      %336 = vmatpush2.bf16.msra.mxu0 %v281
      %337 = vmatprep.mubr.bf16.mxu0 %v175
      %338 = vmatmul.mubr.bf16.gmra.mxu0 %v174
      %v339 = vpop.f32.mrf.mxu0
      %v340 = vadd.f32 %v208, %v339
      %v341 = vpop.f32.mrf.mxu0
      %v342 = vpop.f32.mrf.mxu0
      %v343 = vpop.f32.mrf.mxu0
      %344 = vdwg.mxu0
      %345 = vst [vmem:[%s168] sm:$0xf] %v340
      %p346 = scmp.lt.s32.totalorder %s14, 1
      %s347 = scalar_select %p346, %s14, 1
      %s348 = smul.addr %s347, 4
      %s349 = scalar_lea.vmem %s3, %s348
      // Predicated region
      $region33: #{_lambda_.4} parent=31 // pred_check
        %p350 = pneg %p100
      $region34: #{_lambda_.4} parent=31 // pred_check_branch
        %352 = sbr.rel (%p350) target = $region36
      $region35: #{_lambda_.4} parent=31 // pred_region
        _
      $region36: #{_lambda_.4} parent=31 // pred_fallthru
        _
    $region32: #{_lambda_.4} parent=5 // pred_fallthru
      _
    %p353 = scmp.le.s32.totalorder 2, %s9
    // Predicated region
    $region37: #{_lambda_.4} parent=5 // pred_check
      %p354 = pneg %p353
    $region38: #{_lambda_.4} parent=5 // pred_check_branch
      %356 = sbr.rel (%p354) target = $region40
    $region39: #{_lambda_.4} parent=5 // pred_region
      %s357 = ssub.s32 %s9, 2
      // Predicated region
      $region41: #{_lambda_.4} parent=39 // pred_check
        %p358 = pneg %p106
      $region42: #{_lambda_.4} parent=39 // pred_check_branch
        %360 = sbr.rel (%p358) target = $region44
      $region43: #{_lambda_.4} parent=39 // pred_region
        %p361 = scmp.lt.s32.totalorder %s15, 1
        %s362 = scalar_select %p361, %s15, 1
        %s363 = smul.addr %s362, 4
        %s364 = scalar_lea.vmem %s3, %s363
      $region44: #{_lambda_.4} parent=39 // pred_fallthru
        _
    $region40: #{_lambda_.4} parent=5 // pred_fallthru
      _
  $region6: #{_lambda_.4} parent=0 // loop_footer
    %s13 = sadd.s32 1, %s9
  $region7: #{_lambda_.4} parent=0 // loop_footer_branch
    %8 = sbr.rel target = $region3
  $region8: #{_lambda_.4} parent=0 // loop_exit
    _

// kernel: _lambda_.7
$region0: #{_lambda_.7}
  #allocation0 [shape = 'u32[]', space=smem, size = 0x4, offset = 0x4, fixed_abs, tag = 'smem constant byte address 0x4 - core index']
  #allocation1 [shape = 'u32[144,128]{1,0:T(1,128)}', space=vmem, size = 0x12000, scoped, tag = 'internal scratch']
  %s0 = inlined_call_operand.vmem [shape: f32[2,15,128], index: 0, kind: input, shape index: {}]
  %s1 = inlined_call_operand.vmem [shape: f32[2,1,128], index: 1, kind: input, shape index: {}]
  %s2 = inlined_call_operand.vmem [shape: f32[2,1,128], index: 2, kind: input, shape index: {}]
  %s3 = inlined_call_operand.vmem [shape: bf16[2,4,128,8], index: 3, kind: input, shape index: {}]
  %s4 = inlined_call_operand.vmem [shape: bf16[2,4,128,8], index: 4, kind: input, shape index: {}]
  %s5 = inlined_call_operand.vmem [shape: bf16[2,4,128,8], index: 5, kind: input, shape index: {}]
  %s6 = inlined_call_operand.vmem [shape: bf16[2,4,8,128], index: 6, kind: input, shape index: {}]
  %s7 = inlined_call_operand.vmem [shape: f32[2,1,128], index: 7, kind: input, shape index: {}]
  %s8 = inlined_call_operand.vmem [shape: f32[2,1,128], index: 8, kind: input, shape index: {}]
  %s9 = inlined_call_operand.vmem [shape: f32[2,1,128], index: 9, kind: input, shape index: {}]
  %s10 = inlined_call_operand.vmem [shape: bf16[2,128,128], index: 10, kind: input, shape index: {}]
  %s11 = inlined_call_operand.vmem [shape: f32[2,1,128], index: 11, kind: input, shape index: {}]
  %s12 = inlined_call_operand.vmem [shape: bf16[2,128,128], index: 12, kind: input, shape index: {}]
  %s13 = inlined_call_operand.vmem [shape: f32[2,1,128], index: 13, kind: input, shape index: {}]
  %s14 = inlined_call_operand.vmem [shape: f32[2,15,128], index: 14, kind: output, shape index: {}]
  %s15 = sld [smem:[#allocation0]]
  $region93: #{_lambda_.7} parent=0
    _
  %s17 = ssub.s32 1, %s15
  %s18 = scalar_select 0, %s17, %s15
  loop: start=0, step=1, limit=6
  $region2: #{_lambda_.7} parent=0 // loop_pre_header
    _
  $region3: #{_lambda_.7} parent=0 // loop_header
    %s20 = sphi 0, %s24
    %p21 = scmp.ge.s32.totalorder %s20, 6
    %s27 = sphi 0, %s39
    %s28 = sphi 0, %s35
    %s29 = sphi 0, %s27
    %s30 = sphi 0, %s28
    %s31 = sphi 0, %s29
    %s32 = sphi 0, %s30
    %s42 = sphi 0, %s44
    %s45 = sphi 0, %s42
    %s46 = sphi 0, %s45
    %s62 = sphi 0, %s46
    %s68 = sphi 0, %s70
    %s71 = sphi 0, %s68
    %s72 = sphi 0, %s71
    %s88 = sphi 0, %s72
    %s94 = sphi 0, %s96
    %s97 = sphi 0, %s94
    %s98 = sphi 0, %s97
    %s114 = sphi 0, %s98
    %s120 = sphi 0, %s122
    %s123 = sphi 0, %s120
    %s124 = sphi 0, %s123
    %s140 = sphi 0, %s124
    %s146 = sphi 0, %s148
    %s149 = sphi 0, %s146
    %s150 = sphi 0, %s149
    %s166 = sphi 0, %s150
    %s172 = sphi 0, %s174
    %s175 = sphi 0, %s172
    %s176 = sphi 0, %s175
    %s192 = sphi 0, %s176
    %s198 = sphi 0, %s200
    %s201 = sphi 0, %s198
    %s202 = sphi 0, %s201
    %s218 = sphi 0, %s202
    %s224 = sphi 0, %s226
    %s227 = sphi 0, %s224
    %s228 = sphi 0, %s227
    %s244 = sphi 0, %s228
    %s250 = sphi 0, %s252
    %s253 = sphi 0, %s250
    %s254 = sphi 0, %s253
    %s270 = sphi 0, %s254
    %s276 = sphi 0, %s278
    %s279 = sphi 0, %s276
    %s280 = sphi 0, %s279
    %s296 = sphi 0, %s280
    %s302 = sphi 0, %s304
    %s305 = sphi 0, %s302
    %s306 = sphi 0, %s305
    %s322 = sphi 0, %s306
    %s328 = sphi 0, %s330
    %s331 = sphi 0, %s328
    %s332 = sphi 0, %s331
    %s348 = sphi 0, %s332
    %s354 = sphi 0, %s356
    %s357 = sphi 0, %s354
    %s358 = sphi 0, %s357
    %s374 = sphi 0, %s358
    %s380 = sphi 0, %s382
    %s383 = sphi 0, %s380
    %s384 = sphi 0, %s383
    %s400 = sphi 0, %s384
    %s406 = sphi 0, %s408
    %s409 = sphi 0, %s406
    %s410 = sphi 0, %s409
    %s426 = sphi 0, %s410
  $region4: #{_lambda_.7} parent=0 // loop_header_branch
    %23 = sbr.rel (%p21) target = $region8
  $region5: #{_lambda_.7} parent=0 // loop_body
    %s25 = ssub.s32 %s20, 1
    %s26 = ssub.s32 %s20, 2
    %s33 = sadd.s32 1, %s28
    %p34 = scmp.ge.s32.totalorder %s33, 2
    %s35 = scalar_select %p34, 0, %s33
    %s36 = sadd.s32 1, %s27
    %s37 = scalar_select %p34, %s36, %s27
    %p38 = scmp.ge.s32.totalorder %s37, 2
    %s39 = scalar_select %p38, 0, %s37
    %s40 = ssub.s32 %s27, %s39
    %p41 = scmp.eq.s32.totalorder %s40, 0
    %s43 = sadd.s32 %s42, 1
    %s44 = scalar_select %p41, %s42, %s43
    %p47 = pneg %p41
    %p48 = scmp.eq.s32.totalorder %s20, 3
    %p49 = por %p47, %p48
    %p50 = scmp.ne.s32.totalorder %s42, %s45
    %p51 = scmp.eq.s32.totalorder %s20, 0
    %p52 = por %p50, %p51
    %p53 = scmp.ne.s32.totalorder %s42, %s45
    %p54 = scmp.eq.s32.totalorder %s25, 3
    %p55 = por %p53, %p54
    %p56 = scmp.ne.s32.totalorder %s45, %s46
    %p57 = scmp.eq.s32.totalorder %s25, 0
    %p58 = por %p56, %p57
    %p59 = scmp.ne.s32.totalorder %s45, %s46
    %p60 = scmp.eq.s32.totalorder %s26, 3
    %p61 = por %p59, %p60
    %p63 = scmp.ne.s32.totalorder %s46, %s62
    %p64 = scmp.eq.s32.totalorder %s26, 0
    %p65 = por %p63, %p64
    %s66 = ssub.s32 %s28, %s35
    %p67 = scmp.eq.s32.totalorder %s66, 0
    %s69 = sadd.s32 %s68, 1
    %s70 = scalar_select %p67, %s68, %s69
    %p73 = pneg %p67
    %p74 = scmp.eq.s32.totalorder %s20, 3
    %p75 = por %p73, %p74
    %p76 = scmp.ne.s32.totalorder %s68, %s71
    %p77 = scmp.eq.s32.totalorder %s20, 0
    %p78 = por %p76, %p77
    %p79 = scmp.ne.s32.totalorder %s68, %s71
    %p80 = scmp.eq.s32.totalorder %s25, 3
    %p81 = por %p79, %p80
    %p82 = scmp.ne.s32.totalorder %s71, %s72
    %p83 = scmp.eq.s32.totalorder %s25, 0
    %p84 = por %p82, %p83
    %p85 = scmp.ne.s32.totalorder %s71, %s72
    %p86 = scmp.eq.s32.totalorder %s26, 3
    %p87 = por %p85, %p86
    %p89 = scmp.ne.s32.totalorder %s72, %s88
    %p90 = scmp.eq.s32.totalorder %s26, 0
    %p91 = por %p89, %p90
    %s92 = ssub.s32 %s28, %s35
    %p93 = scmp.eq.s32.totalorder %s92, 0
    %s95 = sadd.s32 %s94, 1
    %s96 = scalar_select %p93, %s94, %s95
    %p99 = pneg %p93
    %p100 = scmp.eq.s32.totalorder %s20, 3
    %p101 = por %p99, %p100
    %p102 = scmp.ne.s32.totalorder %s94, %s97
    %p103 = scmp.eq.s32.totalorder %s20, 0
    %p104 = por %p102, %p103
    %p105 = scmp.ne.s32.totalorder %s94, %s97
    %p106 = scmp.eq.s32.totalorder %s25, 3
    %p107 = por %p105, %p106
    %p108 = scmp.ne.s32.totalorder %s97, %s98
    %p109 = scmp.eq.s32.totalorder %s25, 0
    %p110 = por %p108, %p109
    %p111 = scmp.ne.s32.totalorder %s97, %s98
    %p112 = scmp.eq.s32.totalorder %s26, 3
    %p113 = por %p111, %p112
    %p115 = scmp.ne.s32.totalorder %s98, %s114
    %p116 = scmp.eq.s32.totalorder %s26, 0
    %p117 = por %p115, %p116
    %s118 = ssub.s32 %s28, %s35
    %p119 = scmp.eq.s32.totalorder %s118, 0
    %s121 = sadd.s32 %s120, 1
    %s122 = scalar_select %p119, %s120, %s121
    %p125 = pneg %p119
    %p126 = scmp.eq.s32.totalorder %s20, 3
    %p127 = por %p125, %p126
    %p128 = scmp.ne.s32.totalorder %s120, %s123
    %p129 = scmp.eq.s32.totalorder %s20, 0
    %p130 = por %p128, %p129
    %p131 = scmp.ne.s32.totalorder %s120, %s123
    %p132 = scmp.eq.s32.totalorder %s25, 3
    %p133 = por %p131, %p132
    %p134 = scmp.ne.s32.totalorder %s123, %s124
    %p135 = scmp.eq.s32.totalorder %s25, 0
    %p136 = por %p134, %p135
    %p137 = scmp.ne.s32.totalorder %s123, %s124
    %p138 = scmp.eq.s32.totalorder %s26, 3
    %p139 = por %p137, %p138
    %p141 = scmp.ne.s32.totalorder %s124, %s140
    %p142 = scmp.eq.s32.totalorder %s26, 0
    %p143 = por %p141, %p142
    %s144 = ssub.s32 %s28, %s35
    %p145 = scmp.eq.s32.totalorder %s144, 0
    %s147 = sadd.s32 %s146, 1
    %s148 = scalar_select %p145, %s146, %s147
    %p151 = pneg %p145
    %p152 = scmp.eq.s32.totalorder %s20, 3
    %p153 = por %p151, %p152
    %p154 = scmp.ne.s32.totalorder %s146, %s149
    %p155 = scmp.eq.s32.totalorder %s20, 0
    %p156 = por %p154, %p155
    %p157 = scmp.ne.s32.totalorder %s146, %s149
    %p158 = scmp.eq.s32.totalorder %s25, 3
    %p159 = por %p157, %p158
    %p160 = scmp.ne.s32.totalorder %s149, %s150
    %p161 = scmp.eq.s32.totalorder %s25, 0
    %p162 = por %p160, %p161
    %p163 = scmp.ne.s32.totalorder %s149, %s150
    %p164 = scmp.eq.s32.totalorder %s26, 3
    %p165 = por %p163, %p164
    %p167 = scmp.ne.s32.totalorder %s150, %s166
    %p168 = scmp.eq.s32.totalorder %s26, 0
    %p169 = por %p167, %p168
    %s170 = ssub.s32 %s28, %s35
    %p171 = scmp.eq.s32.totalorder %s170, 0
    %s173 = sadd.s32 %s172, 1
    %s174 = scalar_select %p171, %s172, %s173
    %p177 = pneg %p171
    %p178 = scmp.eq.s32.totalorder %s20, 3
    %p179 = por %p177, %p178
    %p180 = scmp.ne.s32.totalorder %s172, %s175
    %p181 = scmp.eq.s32.totalorder %s20, 0
    %p182 = por %p180, %p181
    %p183 = scmp.ne.s32.totalorder %s172, %s175
    %p184 = scmp.eq.s32.totalorder %s25, 3
    %p185 = por %p183, %p184
    %p186 = scmp.ne.s32.totalorder %s175, %s176
    %p187 = scmp.eq.s32.totalorder %s25, 0
    %p188 = por %p186, %p187
    %p189 = scmp.ne.s32.totalorder %s175, %s176
    %p190 = scmp.eq.s32.totalorder %s26, 3
    %p191 = por %p189, %p190
    %p193 = scmp.ne.s32.totalorder %s176, %s192
    %p194 = scmp.eq.s32.totalorder %s26, 0
    %p195 = por %p193, %p194
    %s196 = ssub.s32 %s28, %s35
    %p197 = scmp.eq.s32.totalorder %s196, 0
    %s199 = sadd.s32 %s198, 1
    %s200 = scalar_select %p197, %s198, %s199
    %p203 = pneg %p197
    %p204 = scmp.eq.s32.totalorder %s20, 3
    %p205 = por %p203, %p204
    %p206 = scmp.ne.s32.totalorder %s198, %s201
    %p207 = scmp.eq.s32.totalorder %s20, 0
    %p208 = por %p206, %p207
    %p209 = scmp.ne.s32.totalorder %s198, %s201
    %p210 = scmp.eq.s32.totalorder %s25, 3
    %p211 = por %p209, %p210
    %p212 = scmp.ne.s32.totalorder %s201, %s202
    %p213 = scmp.eq.s32.totalorder %s25, 0
    %p214 = por %p212, %p213
    %p215 = scmp.ne.s32.totalorder %s201, %s202
    %p216 = scmp.eq.s32.totalorder %s26, 3
    %p217 = por %p215, %p216
    %p219 = scmp.ne.s32.totalorder %s202, %s218
    %p220 = scmp.eq.s32.totalorder %s26, 0
    %p221 = por %p219, %p220
    %s222 = ssub.s32 %s28, %s35
    %p223 = scmp.eq.s32.totalorder %s222, 0
    %s225 = sadd.s32 %s224, 1
    %s226 = scalar_select %p223, %s224, %s225
    %p229 = pneg %p223
    %p230 = scmp.eq.s32.totalorder %s20, 3
    %p231 = por %p229, %p230
    %p232 = scmp.ne.s32.totalorder %s224, %s227
    %p233 = scmp.eq.s32.totalorder %s20, 0
    %p234 = por %p232, %p233
    %p235 = scmp.ne.s32.totalorder %s224, %s227
    %p236 = scmp.eq.s32.totalorder %s25, 3
    %p237 = por %p235, %p236
    %p238 = scmp.ne.s32.totalorder %s227, %s228
    %p239 = scmp.eq.s32.totalorder %s25, 0
    %p240 = por %p238, %p239
    %p241 = scmp.ne.s32.totalorder %s227, %s228
    %p242 = scmp.eq.s32.totalorder %s26, 3
    %p243 = por %p241, %p242
    %p245 = scmp.ne.s32.totalorder %s228, %s244
    %p246 = scmp.eq.s32.totalorder %s26, 0
    %p247 = por %p245, %p246
    %s248 = ssub.s32 %s28, %s35
    %p249 = scmp.eq.s32.totalorder %s248, 0
    %s251 = sadd.s32 %s250, 1
    %s252 = scalar_select %p249, %s250, %s251
    %p255 = pneg %p249
    %p256 = scmp.eq.s32.totalorder %s20, 3
    %p257 = por %p255, %p256
    %p258 = scmp.ne.s32.totalorder %s250, %s253
    %p259 = scmp.eq.s32.totalorder %s20, 0
    %p260 = por %p258, %p259
    %p261 = scmp.ne.s32.totalorder %s250, %s253
    %p262 = scmp.eq.s32.totalorder %s25, 3
    %p263 = por %p261, %p262
    %p264 = scmp.ne.s32.totalorder %s253, %s254
    %p265 = scmp.eq.s32.totalorder %s25, 0
    %p266 = por %p264, %p265
    %p267 = scmp.ne.s32.totalorder %s253, %s254
    %p268 = scmp.eq.s32.totalorder %s26, 3
    %p269 = por %p267, %p268
    %p271 = scmp.ne.s32.totalorder %s254, %s270
    %p272 = scmp.eq.s32.totalorder %s26, 0
    %p273 = por %p271, %p272
    %s274 = ssub.s32 %s28, %s35
    %p275 = scmp.eq.s32.totalorder %s274, 0
    %s277 = sadd.s32 %s276, 1
    %s278 = scalar_select %p275, %s276, %s277
    %p281 = pneg %p275
    %p282 = scmp.eq.s32.totalorder %s20, 3
    %p283 = por %p281, %p282
    %p284 = scmp.ne.s32.totalorder %s276, %s279
    %p285 = scmp.eq.s32.totalorder %s20, 0
    %p286 = por %p284, %p285
    %p287 = scmp.ne.s32.totalorder %s276, %s279
    %p288 = scmp.eq.s32.totalorder %s25, 3
    %p289 = por %p287, %p288
    %p290 = scmp.ne.s32.totalorder %s279, %s280
    %p291 = scmp.eq.s32.totalorder %s25, 0
    %p292 = por %p290, %p291
    %p293 = scmp.ne.s32.totalorder %s279, %s280
    %p294 = scmp.eq.s32.totalorder %s26, 3
    %p295 = por %p293, %p294
    %p297 = scmp.ne.s32.totalorder %s280, %s296
    %p298 = scmp.eq.s32.totalorder %s26, 0
    %p299 = por %p297, %p298
    %s300 = ssub.s32 %s28, %s35
    %p301 = scmp.eq.s32.totalorder %s300, 0
    %s303 = sadd.s32 %s302, 1
    %s304 = scalar_select %p301, %s302, %s303
    %p307 = pneg %p301
    %p308 = scmp.eq.s32.totalorder %s20, 3
    %p309 = por %p307, %p308
    %p310 = scmp.ne.s32.totalorder %s302, %s305
    %p311 = scmp.eq.s32.totalorder %s20, 0
    %p312 = por %p310, %p311
    %p313 = scmp.ne.s32.totalorder %s302, %s305
    %p314 = scmp.eq.s32.totalorder %s25, 3
    %p315 = por %p313, %p314
    %p316 = scmp.ne.s32.totalorder %s305, %s306
    %p317 = scmp.eq.s32.totalorder %s25, 0
    %p318 = por %p316, %p317
    %p319 = scmp.ne.s32.totalorder %s305, %s306
    %p320 = scmp.eq.s32.totalorder %s26, 3
    %p321 = por %p319, %p320
    %p323 = scmp.ne.s32.totalorder %s306, %s322
    %p324 = scmp.eq.s32.totalorder %s26, 0
    %p325 = por %p323, %p324
    %s326 = ssub.s32 %s28, %s35
    %p327 = scmp.eq.s32.totalorder %s326, 0
    %s329 = sadd.s32 %s328, 1
    %s330 = scalar_select %p327, %s328, %s329
    %p333 = pneg %p327
    %p334 = scmp.eq.s32.totalorder %s20, 3
    %p335 = por %p333, %p334
    %p336 = scmp.ne.s32.totalorder %s328, %s331
    %p337 = scmp.eq.s32.totalorder %s20, 0
    %p338 = por %p336, %p337
    %p339 = scmp.ne.s32.totalorder %s328, %s331
    %p340 = scmp.eq.s32.totalorder %s25, 3
    %p341 = por %p339, %p340
    %p342 = scmp.ne.s32.totalorder %s331, %s332
    %p343 = scmp.eq.s32.totalorder %s25, 0
    %p344 = por %p342, %p343
    %p345 = scmp.ne.s32.totalorder %s331, %s332
    %p346 = scmp.eq.s32.totalorder %s26, 3
    %p347 = por %p345, %p346
    %p349 = scmp.ne.s32.totalorder %s332, %s348
    %p350 = scmp.eq.s32.totalorder %s26, 0
    %p351 = por %p349, %p350
    %s352 = ssub.s32 %s28, %s35
    %p353 = scmp.eq.s32.totalorder %s352, 0
    %s355 = sadd.s32 %s354, 1
    %s356 = scalar_select %p353, %s354, %s355
    %p359 = pneg %p353
    %p360 = scmp.eq.s32.totalorder %s20, 3
    %p361 = por %p359, %p360
    %p362 = scmp.ne.s32.totalorder %s354, %s357
    %p363 = scmp.eq.s32.totalorder %s20, 0
    %p364 = por %p362, %p363
    %p365 = scmp.ne.s32.totalorder %s354, %s357
    %p366 = scmp.eq.s32.totalorder %s25, 3
    %p367 = por %p365, %p366
    %p368 = scmp.ne.s32.totalorder %s357, %s358
    %p369 = scmp.eq.s32.totalorder %s25, 0
    %p370 = por %p368, %p369
    %p371 = scmp.ne.s32.totalorder %s357, %s358
    %p372 = scmp.eq.s32.totalorder %s26, 3
    %p373 = por %p371, %p372
    %p375 = scmp.ne.s32.totalorder %s358, %s374
    %p376 = scmp.eq.s32.totalorder %s26, 0
    %p377 = por %p375, %p376
    %s378 = ssub.s32 %s28, %s35
    %p379 = scmp.eq.s32.totalorder %s378, 0
    %s381 = sadd.s32 %s380, 1
    %s382 = scalar_select %p379, %s380, %s381
    %p385 = pneg %p379
    %p386 = scmp.eq.s32.totalorder %s20, 3
    %p387 = por %p385, %p386
    %p388 = scmp.ne.s32.totalorder %s380, %s383
    %p389 = scmp.eq.s32.totalorder %s20, 0
    %p390 = por %p388, %p389
    %p391 = scmp.ne.s32.totalorder %s380, %s383
    %p392 = scmp.eq.s32.totalorder %s25, 3
    %p393 = por %p391, %p392
    %p394 = scmp.ne.s32.totalorder %s383, %s384
    %p395 = scmp.eq.s32.totalorder %s25, 0
    %p396 = por %p394, %p395
    %p397 = scmp.ne.s32.totalorder %s383, %s384
    %p398 = scmp.eq.s32.totalorder %s26, 3
    %p399 = por %p397, %p398
    %p401 = scmp.ne.s32.totalorder %s384, %s400
    %p402 = scmp.eq.s32.totalorder %s26, 0
    %p403 = por %p401, %p402
    %s404 = ssub.s32 %s27, %s39
    %p405 = scmp.eq.s32.totalorder %s404, 0
    %s407 = sadd.s32 %s406, 1
    %s408 = scalar_select %p405, %s406, %s407
    %p411 = pneg %p405
    %p412 = scmp.eq.s32.totalorder %s20, 3
    %p413 = por %p411, %p412
    %p414 = scmp.ne.s32.totalorder %s406, %s409
    %p415 = scmp.eq.s32.totalorder %s20, 0
    %p416 = por %p414, %p415
    %p417 = scmp.ne.s32.totalorder %s406, %s409
    %p418 = scmp.eq.s32.totalorder %s25, 3
    %p419 = por %p417, %p418
    %p420 = scmp.ne.s32.totalorder %s409, %s410
    %p421 = scmp.eq.s32.totalorder %s25, 0
    %p422 = por %p420, %p421
    %p423 = scmp.ne.s32.totalorder %s409, %s410
    %p424 = scmp.eq.s32.totalorder %s26, 3
    %p425 = por %p423, %p424
    %p427 = scmp.ne.s32.totalorder %s410, %s426
    %p428 = scmp.eq.s32.totalorder %s26, 0
    %p429 = por %p427, %p428
    %p430 = scmp.le.s32.totalorder 1, %s20
    %p431 = scmp.lt.s32.totalorder %s20, 5
    %p432 = pnand %p430, %p431
    %p433 = pneg %p432
    // Predicated region
    $region9: #{_lambda_.7} parent=5 // pred_check
      _
    $region10: #{_lambda_.7} parent=5 // pred_check_branch
      %435 = sbr.rel (%p432) target = $region12
    $region11: #{_lambda_.7} parent=5 // pred_region
      %s436 = ssub.s32 %s20, 1
    $region12: #{_lambda_.7} parent=5 // pred_fallthru
      _
    %p437 = scmp.lt.s32.totalorder %s20, 4
    // Predicated region
    $region13: #{_lambda_.7} parent=5 // pred_check
      %p438 = pneg %p437
    $region14: #{_lambda_.7} parent=5 // pred_check_branch
      %440 = sbr.rel (%p438) target = $region16
    $region15: #{_lambda_.7} parent=5 // pred_region
      // Predicated region
      $region17: #{_lambda_.7} parent=15 // pred_check
        %p441 = pneg %p52
      $region18: #{_lambda_.7} parent=15 // pred_check_branch
        %443 = sbr.rel (%p441) target = $region20
      $region19: #{_lambda_.7} parent=15 // pred_region
        %p444 = scmp.lt.s32.totalorder %s27, 1
        %s445 = scalar_select %p444, %s27, 1
        %s446 = smul.addr %s445, 2
        %s447 = smul.addr %s446, 8
        %s448 = scalar_lea.vmem %s0, %s447
      $region20: #{_lambda_.7} parent=15 // pred_fallthru
        _
      // Predicated region
      $region21: #{_lambda_.7} parent=15 // pred_check
        %p449 = pneg %p78
      $region22: #{_lambda_.7} parent=15 // pred_check_branch
        %451 = sbr.rel (%p449) target = $region24
      $region23: #{_lambda_.7} parent=15 // pred_region
        %p452 = scmp.lt.s32.totalorder %s28, 1
        %s453 = scalar_select %p452, %s28, 1
        %s454 = scalar_lea.vmem %s1, %s453
      $region24: #{_lambda_.7} parent=15 // pred_fallthru
        _
      // Predicated region
      $region25: #{_lambda_.7} parent=15 // pred_check
        %p455 = pneg %p104
      $region26: #{_lambda_.7} parent=15 // pred_check_branch
        %457 = sbr.rel (%p455) target = $region28
      $region27: #{_lambda_.7} parent=15 // pred_region
        %p458 = scmp.lt.s32.totalorder %s28, 1
        %s459 = scalar_select %p458, %s28, 1
        %s460 = scalar_lea.vmem %s2, %s459
      $region28: #{_lambda_.7} parent=15 // pred_fallthru
        _
      // Predicated region
      $region29: #{_lambda_.7} parent=15 // pred_check
        %p461 = pneg %p130
      $region30: #{_lambda_.7} parent=15 // pred_check_branch
        %463 = sbr.rel (%p461) target = $region32
      $region31: #{_lambda_.7} parent=15 // pred_region
        %p464 = scmp.lt.s32.totalorder %s28, 1
        %s465 = scalar_select %p464, %s28, 1
        %s466 = smul.addr %s465, 64
        %s467 = smul.addr %s466, 4
        %s468 = scalar_lea.vmem %s3, %s467
      $region32: #{_lambda_.7} parent=15 // pred_fallthru
        _
      // Predicated region
      $region33: #{_lambda_.7} parent=15 // pred_check
        %p469 = pneg %p156
      $region34: #{_lambda_.7} parent=15 // pred_check_branch
        %471 = sbr.rel (%p469) target = $region36
      $region35: #{_lambda_.7} parent=15 // pred_region
        %p472 = scmp.lt.s32.totalorder %s28, 1
        %s473 = scalar_select %p472, %s28, 1
        %s474 = smul.addr %s473, 64
        %s475 = smul.addr %s474, 4
        %s476 = scalar_lea.vmem %s4, %s475
      $region36: #{_lambda_.7} parent=15 // pred_fallthru
        _
      // Predicated region
      $region37: #{_lambda_.7} parent=15 // pred_check
        %p477 = pneg %p182
      $region38: #{_lambda_.7} parent=15 // pred_check_branch
        %479 = sbr.rel (%p477) target = $region40
      $region39: #{_lambda_.7} parent=15 // pred_region
        %p480 = scmp.lt.s32.totalorder %s28, 1
        %s481 = scalar_select %p480, %s28, 1
        %s482 = smul.addr %s481, 64
        %s483 = smul.addr %s482, 4
        %s484 = scalar_lea.vmem %s5, %s483
      $region40: #{_lambda_.7} parent=15 // pred_fallthru
        _
      // Predicated region
      $region41: #{_lambda_.7} parent=15 // pred_check
        %p485 = pneg %p208
      $region42: #{_lambda_.7} parent=15 // pred_check_branch
        %487 = sbr.rel (%p485) target = $region44
      $region43: #{_lambda_.7} parent=15 // pred_region
        %p488 = scmp.lt.s32.totalorder %s28, 1
        %s489 = scalar_select %p488, %s28, 1
        %s490 = smul.addr %s489, 4
        %s491 = smul.addr %s490, 4
        %s492 = scalar_lea.vmem %s6, %s491
      $region44: #{_lambda_.7} parent=15 // pred_fallthru
        _
      // Predicated region
      $region45: #{_lambda_.7} parent=15 // pred_check
        %p493 = pneg %p234
      $region46: #{_lambda_.7} parent=15 // pred_check_branch
        %495 = sbr.rel (%p493) target = $region48
      $region47: #{_lambda_.7} parent=15 // pred_region
        %p496 = scmp.lt.s32.totalorder %s28, 1
        %s497 = scalar_select %p496, %s28, 1
        %s498 = scalar_lea.vmem %s7, %s497
      $region48: #{_lambda_.7} parent=15 // pred_fallthru
        _
      // Predicated region
      $region49: #{_lambda_.7} parent=15 // pred_check
        %p499 = pneg %p260
      $region50: #{_lambda_.7} parent=15 // pred_check_branch
        %501 = sbr.rel (%p499) target = $region52
      $region51: #{_lambda_.7} parent=15 // pred_region
        %p502 = scmp.lt.s32.totalorder %s28, 1
        %s503 = scalar_select %p502, %s28, 1
        %s504 = scalar_lea.vmem %s8, %s503
      $region52: #{_lambda_.7} parent=15 // pred_fallthru
        _
      // Predicated region
      $region53: #{_lambda_.7} parent=15 // pred_check
        %p505 = pneg %p286
      $region54: #{_lambda_.7} parent=15 // pred_check_branch
        %507 = sbr.rel (%p505) target = $region56
      $region55: #{_lambda_.7} parent=15 // pred_region
        %p508 = scmp.lt.s32.totalorder %s28, 1
        %s509 = scalar_select %p508, %s28, 1
        %s510 = scalar_lea.vmem %s9, %s509
      $region56: #{_lambda_.7} parent=15 // pred_fallthru
        _
      // Predicated region
      $region57: #{_lambda_.7} parent=15 // pred_check
        %p511 = pneg %p312
      $region58: #{_lambda_.7} parent=15 // pred_check_branch
        %513 = sbr.rel (%p511) target = $region60
      $region59: #{_lambda_.7} parent=15 // pred_region
        %p514 = scmp.lt.s32.totalorder %s28, 1
        %s515 = scalar_select %p514, %s28, 1
        %s516 = smul.addr %s515, 16
        %s517 = smul.addr %s516, 4
        %s518 = scalar_lea.vmem %s10, %s517
      $region60: #{_lambda_.7} parent=15 // pred_fallthru
        _
      // Predicated region
      $region61: #{_lambda_.7} parent=15 // pred_check
        %p519 = pneg %p338
      $region62: #{_lambda_.7} parent=15 // pred_check_branch
        %521 = sbr.rel (%p519) target = $region64
      $region63: #{_lambda_.7} parent=15 // pred_region
        %p522 = scmp.lt.s32.totalorder %s28, 1
        %s523 = scalar_select %p522, %s28, 1
        %s524 = scalar_lea.vmem %s11, %s523
      $region64: #{_lambda_.7} parent=15 // pred_fallthru
        _
      // Predicated region
      $region65: #{_lambda_.7} parent=15 // pred_check
        %p525 = pneg %p364
      $region66: #{_lambda_.7} parent=15 // pred_check_branch
        %527 = sbr.rel (%p525) target = $region68
      $region67: #{_lambda_.7} parent=15 // pred_region
        %p528 = scmp.lt.s32.totalorder %s28, 1
        %s529 = scalar_select %p528, %s28, 1
        %s530 = smul.addr %s529, 16
        %s531 = smul.addr %s530, 4
        %s532 = scalar_lea.vmem %s12, %s531
      $region68: #{_lambda_.7} parent=15 // pred_fallthru
        _
      // Predicated region
      $region69: #{_lambda_.7} parent=15 // pred_check
        %p533 = pneg %p390
      $region70: #{_lambda_.7} parent=15 // pred_check_branch
        %535 = sbr.rel (%p533) target = $region72
      $region71: #{_lambda_.7} parent=15 // pred_region
        %p536 = scmp.lt.s32.totalorder %s28, 1
        %s537 = scalar_select %p536, %s28, 1
        %s538 = scalar_lea.vmem %s13, %s537
      $region72: #{_lambda_.7} parent=15 // pred_fallthru
        _
    $region16: #{_lambda_.7} parent=5 // pred_fallthru
      _
    %p539 = scmp.le.s32.totalorder 1, %s20
    %p540 = scmp.lt.s32.totalorder %s20, 5
    %p541 = pnand %p539, %p540
    %p542 = pneg %p541
    // Predicated region
    $region73: #{_lambda_.7} parent=5 // pred_check
      _
    $region74: #{_lambda_.7} parent=5 // pred_check_branch
      %544 = sbr.rel (%p541) target = $region76
    $region75: #{_lambda_.7} parent=5 // pred_region
      %s545 = ssub.s32 %s20, 1
      %p546 = scmp.lt.s32.totalorder %s29, 1
      %s547 = scalar_select %p546, %s29, 1
      %s548 = smul.addr %s547, 2
      %s549 = smul.addr %s548, 8
      %s550 = scalar_lea.vmem %s0, %s549
      %p551 = pneg %p58
      %p552 = pneg %p55
      %p553 = scmp.lt.s32.totalorder %s30, 1
      %s554 = scalar_select %p553, %s30, 1
      %s555 = scalar_lea.vmem %s1, %s554
      %p556 = pneg %p84
      %p557 = pneg %p81
      %p558 = scmp.lt.s32.totalorder %s30, 1
      %s559 = scalar_select %p558, %s30, 1
      %s560 = scalar_lea.vmem %s2, %s559
      %p561 = pneg %p110
      %p562 = pneg %p107
      %p563 = scmp.lt.s32.totalorder %s30, 1
      %s564 = scalar_select %p563, %s30, 1
      %s565 = smul.addr %s564, 64
      %s566 = smul.addr %s565, 4
      %s567 = scalar_lea.vmem %s3, %s566
      %p568 = pneg %p136
      %p569 = pneg %p133
      %p570 = scmp.lt.s32.totalorder %s30, 1
      %s571 = scalar_select %p570, %s30, 1
      %s572 = smul.addr %s571, 64
      %s573 = smul.addr %s572, 4
      %s574 = scalar_lea.vmem %s4, %s573
      %p575 = pneg %p162
      %p576 = pneg %p159
      %p577 = scmp.lt.s32.totalorder %s30, 1
      %s578 = scalar_select %p577, %s30, 1
      %s579 = smul.addr %s578, 64
      %s580 = smul.addr %s579, 4
      %s581 = scalar_lea.vmem %s5, %s580
      %p582 = pneg %p188
      %p583 = pneg %p185
      %p584 = scmp.lt.s32.totalorder %s30, 1
      %s585 = scalar_select %p584, %s30, 1
      %s586 = smul.addr %s585, 4
      %s587 = smul.addr %s586, 4
      %s588 = scalar_lea.vmem %s6, %s587
      %p589 = pneg %p214
      %p590 = pneg %p211
      %p591 = scmp.lt.s32.totalorder %s30, 1
      %s592 = scalar_select %p591, %s30, 1
      %s593 = scalar_lea.vmem %s7, %s592
      %p594 = pneg %p240
      %p595 = pneg %p237
      %p596 = scmp.lt.s32.totalorder %s30, 1
      %s597 = scalar_select %p596, %s30, 1
      %s598 = scalar_lea.vmem %s8, %s597
      %p599 = pneg %p266
      %p600 = pneg %p263
      %p601 = scmp.lt.s32.totalorder %s30, 1
      %s602 = scalar_select %p601, %s30, 1
      %s603 = scalar_lea.vmem %s9, %s602
      %p604 = pneg %p292
      %p605 = pneg %p289
      %p606 = scmp.lt.s32.totalorder %s30, 1
      %s607 = scalar_select %p606, %s30, 1
      %s608 = smul.addr %s607, 16
      %s609 = smul.addr %s608, 4
      %s610 = scalar_lea.vmem %s10, %s609
      %p611 = pneg %p318
      %p612 = pneg %p315
      %p613 = scmp.lt.s32.totalorder %s30, 1
      %s614 = scalar_select %p613, %s30, 1
      %s615 = scalar_lea.vmem %s11, %s614
      %p616 = pneg %p344
      %p617 = pneg %p341
      %p618 = scmp.lt.s32.totalorder %s30, 1
      %s619 = scalar_select %p618, %s30, 1
      %s620 = smul.addr %s619, 16
      %s621 = smul.addr %s620, 4
      %s622 = scalar_lea.vmem %s12, %s621
      %p623 = pneg %p370
      %p624 = pneg %p367
      %p625 = scmp.lt.s32.totalorder %s30, 1
      %s626 = scalar_select %p625, %s30, 1
      %s627 = scalar_lea.vmem %s13, %s626
      %p628 = pneg %p396
      %p629 = pneg %p393
      %p630 = pneg %p422
      %p631 = pneg %p419
      %p632 = scmp.lt.s32.totalorder %s29, 1
      %s633 = scalar_select %p632, %s29, 1
      %s634 = smul.addr %s633, 2
      %s635 = smul.addr %s634, 8
      %s636 = scalar_lea.vmem %s14, %s635
      %p637 = scmp.lt.s32.totalorder %s29, 1
      %s638 = scalar_select %p637, %s29, 1
      %s639 = smul.addr %s638, 2
      %s640 = smul.addr %s639, 8
      %s641 = scalar_lea.vmem %s0, %s640
      %p642 = scmp.lt.s32.totalorder %s30, 1
      %s643 = scalar_select %p642, %s30, 1
      %s644 = scalar_lea.vmem %s1, %s643
      %p645 = scmp.lt.s32.totalorder %s30, 1
      %s646 = scalar_select %p645, %s30, 1
      %s647 = scalar_lea.vmem %s2, %s646
      %p648 = scmp.lt.s32.totalorder %s30, 1
      %s649 = scalar_select %p648, %s30, 1
      %s650 = smul.addr %s649, 64
      %s651 = smul.addr %s650, 4
      %s652 = scalar_lea.vmem %s3, %s651
      %p653 = scmp.lt.s32.totalorder %s30, 1
      %s654 = scalar_select %p653, %s30, 1
      %s655 = smul.addr %s654, 64
      %s656 = smul.addr %s655, 4
      %s657 = scalar_lea.vmem %s4, %s656
      %p658 = scmp.lt.s32.totalorder %s30, 1
      %s659 = scalar_select %p658, %s30, 1
      %s660 = smul.addr %s659, 64
      %s661 = smul.addr %s660, 4
      %s662 = scalar_lea.vmem %s5, %s661
      %p663 = scmp.lt.s32.totalorder %s30, 1
      %s664 = scalar_select %p663, %s30, 1
      %s665 = smul.addr %s664, 4
      %s666 = smul.addr %s665, 4
      %s667 = scalar_lea.vmem %s6, %s666
      %p668 = scmp.lt.s32.totalorder %s30, 1
      %s669 = scalar_select %p668, %s30, 1
      %s670 = scalar_lea.vmem %s7, %s669
      %p671 = scmp.lt.s32.totalorder %s30, 1
      %s672 = scalar_select %p671, %s30, 1
      %s673 = scalar_lea.vmem %s8, %s672
      %p674 = scmp.lt.s32.totalorder %s30, 1
      %s675 = scalar_select %p674, %s30, 1
      %s676 = scalar_lea.vmem %s9, %s675
      %p677 = scmp.lt.s32.totalorder %s30, 1
      %s678 = scalar_select %p677, %s30, 1
      %s679 = smul.addr %s678, 16
      %s680 = smul.addr %s679, 4
      %s681 = scalar_lea.vmem %s10, %s680
      %p682 = scmp.lt.s32.totalorder %s30, 1
      %s683 = scalar_select %p682, %s30, 1
      %s684 = scalar_lea.vmem %s11, %s683
      %p685 = scmp.lt.s32.totalorder %s30, 1
      %s686 = scalar_select %p685, %s30, 1
      %s687 = smul.addr %s686, 16
      %s688 = smul.addr %s687, 4
      %s689 = scalar_lea.vmem %s12, %s688
      %p690 = scmp.lt.s32.totalorder %s30, 1
      %s691 = scalar_select %p690, %s30, 1
      %s692 = scalar_lea.vmem %s13, %s691
      %p693 = scmp.lt.s32.totalorder %s29, 1
      %s694 = scalar_select %p693, %s29, 1
      %s695 = smul.addr %s694, 2
      %s696 = smul.addr %s695, 8
      %s697 = scalar_lea.vmem %s14, %s696
      %p699 = scmp.eq.s32.totalorder %s30, 0
      // Predicated region
      $region77: #{_lambda_.7} parent=75 // pred_check
        %p700 = pneg %p699
      $region78: #{_lambda_.7} parent=75 // pred_check_branch
        %702 = sbr.rel (%p700) target = $region80
      $region79: #{_lambda_.7} parent=75 // pred_region
        %v703 = vld [vmem:[%s641] sm:$0xff]
        %v704 = vld [vmem:[%s641 + $0x8] sm:$0x7f]
        %705 = vst [vmem:[%s697] sm:$0xff] %v703
        %706 = vst [vmem:[%s697 + $0x8] sm:$0x7f] %v704
      $region80: #{_lambda_.7} parent=75 // pred_fallthru
        _
      %v707 = vld [vmem:[%s697] sm:$0xff]
      %v708 = vld [vmem:[%s697 + $0x8] sm:$0x7f]
      %v709 = vld [vmem:[%s644] sm:$0x1]
      %v710 = vld [vmem:[%s647] sm:$0x1]
      %v711 = vlaneseq
      %v712 = vand.u32 %v711, 127
      %713 = vadd.xlane.f32.xlu0 %v707
      %v714 = vpop.xlane.xlu0 %713
      %vm715 = vcmask 1046528
      %v716 = vsel %vm715, %v708, 0.0
      %717 = vadd.xlane.f32.xlu0 %v716
      %v718 = vpop.xlane.xlu0 %717
      %v719 = vmul.f32 %v714, 0.03125
      %v720 = vmul.f32 %v718, 0.03125
      %vm721 = vcmp.lt.s32.totalorder %v712, 32
      %v722 = vsub.f32 %v707, %v719
      %v723 = vsub.f32 %v708, %v720
      %v724 = vsel %vm721, %v722, 0.0
      %v725 = vsel %vm721, %v723, 0.0
      %v726 = vmul.f32 %v724, %v724
      %v727 = vmul.f32 %v725, %v725
      %728 = vadd.xlane.f32.xlu0 %v726
      %v729 = vpop.xlane.xlu0 %728
      %v730 = vsel %vm715, %v727, 0.0
      %731 = vadd.xlane.f32.xlu0 %v730
      %v732 = vpop.xlane.xlu0 %731
      %v733 = vmul.f32 %v729, 0.03125
      %v734 = vmul.f32 %v732, 0.03125
      %v735 = vadd.f32 %v733, 1e-05
      %v736 = vadd.f32 %v734, 1e-05
      %v737 = vrsqrt.pop %v735
      %v738 = vrsqrt.pop %v736
      %v739 = vmul.f32 %v724, %v737
      %v740 = vmul.f32 %v725, %v738
      %v742 = vlaneseq
      %v743 = vshrl.u32 %v742, 7
      %v744 = vsub.s32 0, %v743
      %v745 = vrot.slane %v709, %v744
      %v747 = vmul.f32 %v739, %v745
      %v748 = vmul.f32 %v740, %v745
      %v750 = vlaneseq
      %v751 = vshrl.u32 %v750, 7
      %v752 = vsub.s32 0, %v751
      %v753 = vrot.slane %v710, %v752
      %v755 = vadd.f32 %v747, %v753
      %v756 = vadd.f32 %v748, %v753
      %v757 = vpack.c.bf16 %v756, %v755
      %v758 = vld [vmem:[%s652] sm:$0xf]
      %v759 = vld [vmem:[%s652 + $0x4] sm:$0xf]
      %v760 = vld [vmem:[%s652 + $0x8] sm:$0xf]
      %v761 = vld [vmem:[%s652 + $0xc] sm:$0xf]
      %v762 = vld [vmem:[%s652 + $0x10] sm:$0xf]
      %v763 = vld [vmem:[%s652 + $0x14] sm:$0xf]
      %v764 = vld [vmem:[%s652 + $0x18] sm:$0xf]
      %v765 = vld [vmem:[%s652 + $0x1c] sm:$0xf]
      %v766 = vld [vmem:[%s652 + $0x20] sm:$0xf]
      %v767 = vld [vmem:[%s652 + $0x24] sm:$0xf]
      %v768 = vld [vmem:[%s652 + $0x28] sm:$0xf]
      %v769 = vld [vmem:[%s652 + $0x2c] sm:$0xf]
      %v770 = vld [vmem:[%s652 + $0x30] sm:$0xf]
      %v771 = vld [vmem:[%s652 + $0x34] sm:$0xf]
      %v772 = vld [vmem:[%s652 + $0x38] sm:$0xf]
      %v773 = vld [vmem:[%s652 + $0x3c] sm:$0xf]
      %v774 = vld [vmem:[%s652 + $0x40] sm:$0xf]
      %v775 = vld [vmem:[%s652 + $0x44] sm:$0xf]
      %v776 = vld [vmem:[%s652 + $0x48] sm:$0xf]
      %v777 = vld [vmem:[%s652 + $0x4c] sm:$0xf]
      %v778 = vld [vmem:[%s652 + $0x50] sm:$0xf]
      %v779 = vld [vmem:[%s652 + $0x54] sm:$0xf]
      %v780 = vld [vmem:[%s652 + $0x58] sm:$0xf]
      %v781 = vld [vmem:[%s652 + $0x5c] sm:$0xf]
      %v782 = vld [vmem:[%s652 + $0x60] sm:$0xf]
      %v783 = vld [vmem:[%s652 + $0x64] sm:$0xf]
      %v784 = vld [vmem:[%s652 + $0x68] sm:$0xf]
      %v785 = vld [vmem:[%s652 + $0x6c] sm:$0xf]
      %v786 = vld [vmem:[%s652 + $0x70] sm:$0xf]
      %v787 = vld [vmem:[%s652 + $0x74] sm:$0xf]
      %v788 = vld [vmem:[%s652 + $0x78] sm:$0xf]
      %v789 = vld [vmem:[%s652 + $0x7c] sm:$0xf]
      %v790 = vld [vmem:[%s652 + $0x80] sm:$0xf]
      %v791 = vld [vmem:[%s652 + $0x84] sm:$0xf]
      %v792 = vld [vmem:[%s652 + $0x88] sm:$0xf]
      %v793 = vld [vmem:[%s652 + $0x8c] sm:$0xf]
      %v794 = vld [vmem:[%s652 + $0x90] sm:$0xf]
      %v795 = vld [vmem:[%s652 + $0x94] sm:$0xf]
      %v796 = vld [vmem:[%s652 + $0x98] sm:$0xf]
      %v797 = vld [vmem:[%s652 + $0x9c] sm:$0xf]
      %v798 = vld [vmem:[%s652 + $0xa0] sm:$0xf]
      %v799 = vld [vmem:[%s652 + $0xa4] sm:$0xf]
      %v800 = vld [vmem:[%s652 + $0xa8] sm:$0xf]
      %v801 = vld [vmem:[%s652 + $0xac] sm:$0xf]
      %v802 = vld [vmem:[%s652 + $0xb0] sm:$0xf]
      %v803 = vld [vmem:[%s652 + $0xb4] sm:$0xf]
      %v804 = vld [vmem:[%s652 + $0xb8] sm:$0xf]
      %v805 = vld [vmem:[%s652 + $0xbc] sm:$0xf]
      %v806 = vld [vmem:[%s652 + $0xc0] sm:$0xf]
      %v807 = vld [vmem:[%s652 + $0xc4] sm:$0xf]
      %v808 = vld [vmem:[%s652 + $0xc8] sm:$0xf]
      %v809 = vld [vmem:[%s652 + $0xcc] sm:$0xf]
      %v810 = vld [vmem:[%s652 + $0xd0] sm:$0xf]
      %v811 = vld [vmem:[%s652 + $0xd4] sm:$0xf]
      %v812 = vld [vmem:[%s652 + $0xd8] sm:$0xf]
      %v813 = vld [vmem:[%s652 + $0xdc] sm:$0xf]
      %v814 = vld [vmem:[%s652 + $0xe0] sm:$0xf]
      %v815 = vld [vmem:[%s652 + $0xe4] sm:$0xf]
      %v816 = vld [vmem:[%s652 + $0xe8] sm:$0xf]
      %v817 = vld [vmem:[%s652 + $0xec] sm:$0xf]
      %v818 = vld [vmem:[%s652 + $0xf0] sm:$0xf]
      %v819 = vld [vmem:[%s652 + $0xf4] sm:$0xf]
      %v820 = vld [vmem:[%s652 + $0xf8] sm:$0xf]
      %v821 = vld [vmem:[%s652 + $0xfc] sm:$0xf]
      %v838 = vunpack.c.l.b16 %v758
      %v839 = vunpack.c.l.b16 %v759
      %v840 = vunpack.c.l.b16 %v760
      %v841 = vunpack.c.l.b16 %v761
      %v842 = vunpack.c.l.b16 %v762
      %v843 = vunpack.c.l.b16 %v763
      %v844 = vunpack.c.l.b16 %v764
      %v845 = vunpack.c.l.b16 %v765
      %v846 = vunpack.c.l.b16 %v766
      %v847 = vunpack.c.l.b16 %v767
      %v848 = vunpack.c.l.b16 %v768
      %v849 = vunpack.c.l.b16 %v769
      %v850 = vunpack.c.l.b16 %v770
      %v851 = vunpack.c.l.b16 %v771
      %v852 = vunpack.c.l.b16 %v772
      %v853 = vunpack.c.l.b16 %v773
      %v854 = vpack.c.b16 %v839, %v838
      %v855 = vpack.c.b16 %v841, %v840
      %v856 = vpack.c.b16 %v843, %v842
      %v857 = vpack.c.b16 %v845, %v844
      %v858 = vpack.c.b16 %v847, %v846
      %v859 = vpack.c.b16 %v849, %v848
      %v860 = vpack.c.b16 %v851, %v850
      %v861 = vpack.c.b16 %v853, %v852
      %870 = vmatprep.subr.bf16.mxu0 0
      %871 = vmatpush1.bf16.msra.mxu0 %v861
      %872 = vmatprep.subr.bf16.mxu0 0
      %873 = vmatpush1.bf16.msra.mxu0 %v860
      %874 = vmatprep.subr.bf16.mxu0 0
      %875 = vmatpush1.bf16.msra.mxu0 %v859
      %876 = vmatprep.subr.bf16.mxu0 0
      %877 = vmatpush1.bf16.msra.mxu0 %v858
      %878 = vmatprep.subr.bf16.mxu0 0
      %879 = vmatpush1.bf16.msra.mxu0 %v857
      %880 = vmatprep.subr.bf16.mxu0 0
      %881 = vmatpush1.bf16.msra.mxu0 %v856
      %882 = vmatprep.subr.bf16.mxu0 0
      %883 = vmatpush1.bf16.msra.mxu0 %v855
      %884 = vmatprep.subr.bf16.mxu0 0
      %885 = vmatpush1.bf16.msra.mxu0 %v854
      %886 = vmatprep.subr.bf16.mxu0 0
      %887 = vmatpush2.bf16.msra.mxu0 0
      %888 = vmatprep.subr.bf16.mxu0 0
      %889 = vmatpush2.bf16.msra.mxu0 0
      %890 = vmatprep.subr.bf16.mxu0 0
      %891 = vmatpush2.bf16.msra.mxu0 0
      %892 = vmatprep.subr.bf16.mxu0 0
      %893 = vmatpush2.bf16.msra.mxu0 0
      %894 = vmatprep.subr.bf16.mxu0 0
      %895 = vmatpush2.bf16.msra.mxu0 0
      %896 = vmatprep.subr.bf16.mxu0 0
      %897 = vmatpush2.bf16.msra.mxu0 0
      %898 = vmatprep.subr.bf16.mxu0 0
      %899 = vmatpush2.bf16.msra.mxu0 0
      %900 = vmatprep.subr.bf16.mxu0 0
      %901 = vmatpush2.bf16.msra.mxu0 0
      %902 = vmatprep.mubr.bf16.mxu0 0
      %903 = vmatmul.mubr.bf16.gmra.mxu0 %v757
      %v904 = vpop.f32.mrf.mxu0
      %v905 = vadd.f32 0.0, %v904
      %v906 = vpop.f32.mrf.mxu0
      %v907 = vpop.f32.mrf.mxu0
      %v908 = vadd.f32 0.0, %v907
      %v909 = vpop.f32.mrf.mxu0
      %910 = vdwg.mxu0
      %v927 = vunpack.c.l.b16 %v774
      %v928 = vunpack.c.l.b16 %v775
      %v929 = vunpack.c.l.b16 %v776
      %v930 = vunpack.c.l.b16 %v777
      %v931 = vunpack.c.l.b16 %v778
      %v932 = vunpack.c.l.b16 %v779
      %v933 = vunpack.c.l.b16 %v780
      %v934 = vunpack.c.l.b16 %v781
      %v935 = vunpack.c.l.b16 %v782
      %v936 = vunpack.c.l.b16 %v783
      %v937 = vunpack.c.l.b16 %v784
      %v938 = vunpack.c.l.b16 %v785
      %v939 = vunpack.c.l.b16 %v786
      %v940 = vunpack.c.l.b16 %v787
      %v941 = vunpack.c.l.b16 %v788
      %v942 = vunpack.c.l.b16 %v789
      %v943 = vpack.c.b16 %v928, %v927
      %v944 = vpack.c.b16 %v930, %v929
      %v945 = vpack.c.b16 %v932, %v931
      %v946 = vpack.c.b16 %v934, %v933
      %v947 = vpack.c.b16 %v936, %v935
      %v948 = vpack.c.b16 %v938, %v937
      %v949 = vpack.c.b16 %v940, %v939
      %v950 = vpack.c.b16 %v942, %v941
      %959 = vmatprep.subr.bf16.mxu0 0
      %960 = vmatpush1.bf16.msra.mxu0 %v950
      %961 = vmatprep.subr.bf16.mxu0 0
      %962 = vmatpush1.bf16.msra.mxu0 %v949
      %963 = vmatprep.subr.bf16.mxu0 0
      %964 = vmatpush1.bf16.msra.mxu0 %v948
      %965 = vmatprep.subr.bf16.mxu0 0
      %966 = vmatpush1.bf16.msra.mxu0 %v947
      %967 = vmatprep.subr.bf16.mxu0 0
      %968 = vmatpush1.bf16.msra.mxu0 %v946
      %969 = vmatprep.subr.bf16.mxu0 0
      %970 = vmatpush1.bf16.msra.mxu0 %v945
      %971 = vmatprep.subr.bf16.mxu0 0
      %972 = vmatpush1.bf16.msra.mxu0 %v944
      %973 = vmatprep.subr.bf16.mxu0 0
      %974 = vmatpush1.bf16.msra.mxu0 %v943
      %975 = vmatprep.subr.bf16.mxu0 0
      %976 = vmatpush2.bf16.msra.mxu0 0
      %977 = vmatprep.subr.bf16.mxu0 0
      %978 = vmatpush2.bf16.msra.mxu0 0
      %979 = vmatprep.subr.bf16.mxu0 0
      %980 = vmatpush2.bf16.msra.mxu0 0
      %981 = vmatprep.subr.bf16.mxu0 0
      %982 = vmatpush2.bf16.msra.mxu0 0
      %983 = vmatprep.subr.bf16.mxu0 0
      %984 = vmatpush2.bf16.msra.mxu0 0
      %985 = vmatprep.subr.bf16.mxu0 0
      %986 = vmatpush2.bf16.msra.mxu0 0
      %987 = vmatprep.subr.bf16.mxu0 0
      %988 = vmatpush2.bf16.msra.mxu0 0
      %989 = vmatprep.subr.bf16.mxu0 0
      %990 = vmatpush2.bf16.msra.mxu0 0
      %991 = vmatprep.mubr.bf16.mxu0 0
      %992 = vmatmul.mubr.bf16.gmra.mxu0 %v757
      %v993 = vpop.f32.mrf.mxu0
      %v994 = vadd.f32 0.0, %v993
      %v995 = vpop.f32.mrf.mxu0
      %v996 = vpop.f32.mrf.mxu0
      %v997 = vadd.f32 0.0, %v996
      %v998 = vpop.f32.mrf.mxu0
      %999 = vdwg.mxu0
      %v1016 = vunpack.c.l.b16 %v790
      %v1017 = vunpack.c.l.b16 %v791
      %v1018 = vunpack.c.l.b16 %v792
      %v1019 = vunpack.c.l.b16 %v793
      %v1020 = vunpack.c.l.b16 %v794
      %v1021 = vunpack.c.l.b16 %v795
      %v1022 = vunpack.c.l.b16 %v796
      %v1023 = vunpack.c.l.b16 %v797
      %v1024 = vunpack.c.l.b16 %v798
      %v1025 = vunpack.c.l.b16 %v799
      %v1026 = vunpack.c.l.b16 %v800
      %v1027 = vunpack.c.l.b16 %v801
      %v1028 = vunpack.c.l.b16 %v802
      %v1029 = vunpack.c.l.b16 %v803
      %v1030 = vunpack.c.l.b16 %v804
      %v1031 = vunpack.c.l.b16 %v805
      %v1032 = vpack.c.b16 %v1017, %v1016
      %v1033 = vpack.c.b16 %v1019, %v1018
      %v1034 = vpack.c.b16 %v1021, %v1020
      %v1035 = vpack.c.b16 %v1023, %v1022
      %v1036 = vpack.c.b16 %v1025, %v1024
      %v1037 = vpack.c.b16 %v1027, %v1026
      %v1038 = vpack.c.b16 %v1029, %v1028
      %v1039 = vpack.c.b16 %v1031, %v1030
      %1048 = vmatprep.subr.bf16.mxu0 0
      %1049 = vmatpush1.bf16.msra.mxu0 %v1039
      %1050 = vmatprep.subr.bf16.mxu0 0
      %1051 = vmatpush1.bf16.msra.mxu0 %v1038
      %1052 = vmatprep.subr.bf16.mxu0 0
      %1053 = vmatpush1.bf16.msra.mxu0 %v1037
      %1054 = vmatprep.subr.bf16.mxu0 0
      %1055 = vmatpush1.bf16.msra.mxu0 %v1036
      %1056 = vmatprep.subr.bf16.mxu0 0
      %1057 = vmatpush1.bf16.msra.mxu0 %v1035
      %1058 = vmatprep.subr.bf16.mxu0 0
      %1059 = vmatpush1.bf16.msra.mxu0 %v1034
      %1060 = vmatprep.subr.bf16.mxu0 0
      %1061 = vmatpush1.bf16.msra.mxu0 %v1033
      %1062 = vmatprep.subr.bf16.mxu0 0
      %1063 = vmatpush1.bf16.msra.mxu0 %v1032
      %1064 = vmatprep.subr.bf16.mxu0 0
      %1065 = vmatpush2.bf16.msra.mxu0 0
      %1066 = vmatprep.subr.bf16.mxu0 0
      %1067 = vmatpush2.bf16.msra.mxu0 0
      %1068 = vmatprep.subr.bf16.mxu0 0
      %1069 = vmatpush2.bf16.msra.mxu0 0
      %1070 = vmatprep.subr.bf16.mxu0 0
      %1071 = vmatpush2.bf16.msra.mxu0 0
      %1072 = vmatprep.subr.bf16.mxu0 0
      %1073 = vmatpush2.bf16.msra.mxu0 0
      %1074 = vmatprep.subr.bf16.mxu0 0
      %1075 = vmatpush2.bf16.msra.mxu0 0
      %1076 = vmatprep.subr.bf16.mxu0 0
      %1077 = vmatpush2.bf16.msra.mxu0 0
      %1078 = vmatprep.subr.bf16.mxu0 0
      %1079 = vmatpush2.bf16.msra.mxu0 0
      %1080 = vmatprep.mubr.bf16.mxu0 0
      %1081 = vmatmul.mubr.bf16.gmra.mxu0 %v757
      %v1082 = vpop.f32.mrf.mxu0
      %v1083 = vadd.f32 0.0, %v1082
      %v1084 = vpop.f32.mrf.mxu0
      %v1085 = vpop.f32.mrf.mxu0
      %v1086 = vadd.f32 0.0, %v1085
      %v1087 = vpop.f32.mrf.mxu0
      %1088 = vdwg.mxu0
      %v1105 = vunpack.c.l.b16 %v806
      %v1106 = vunpack.c.l.b16 %v807
      %v1107 = vunpack.c.l.b16 %v808
      %v1108 = vunpack.c.l.b16 %v809
      %v1109 = vunpack.c.l.b16 %v810
      %v1110 = vunpack.c.l.b16 %v811
      %v1111 = vunpack.c.l.b16 %v812
      %v1112 = vunpack.c.l.b16 %v813
      %v1113 = vunpack.c.l.b16 %v814
      %v1114 = vunpack.c.l.b16 %v815
      %v1115 = vunpack.c.l.b16 %v816
      %v1116 = vunpack.c.l.b16 %v817
      %v1117 = vunpack.c.l.b16 %v818
      %v1118 = vunpack.c.l.b16 %v819
      %v1119 = vunpack.c.l.b16 %v820
      %v1120 = vunpack.c.l.b16 %v821
      %v1121 = vpack.c.b16 %v1106, %v1105
      %v1122 = vpack.c.b16 %v1108, %v1107
      %v1123 = vpack.c.b16 %v1110, %v1109
      %v1124 = vpack.c.b16 %v1112, %v1111
      %v1125 = vpack.c.b16 %v1114, %v1113
      %v1126 = vpack.c.b16 %v1116, %v1115
      %v1127 = vpack.c.b16 %v1118, %v1117
      %v1128 = vpack.c.b16 %v1120, %v1119
      %1137 = vmatprep.subr.bf16.mxu0 0
      %1138 = vmatpush1.bf16.msra.mxu0 %v1128
      %1139 = vmatprep.subr.bf16.mxu0 0
      %1140 = vmatpush1.bf16.msra.mxu0 %v1127
      %1141 = vmatprep.subr.bf16.mxu0 0
      %1142 = vmatpush1.bf16.msra.mxu0 %v1126
      %1143 = vmatprep.subr.bf16.mxu0 0
      %1144 = vmatpush1.bf16.msra.mxu0 %v1125
      %1145 = vmatprep.subr.bf16.mxu0 0
      %1146 = vmatpush1.bf16.msra.mxu0 %v1124
      %1147 = vmatprep.subr.bf16.mxu0 0
      %1148 = vmatpush1.bf16.msra.mxu0 %v1123
      %1149 = vmatprep.subr.bf16.mxu0 0
      %1150 = vmatpush1.bf16.msra.mxu0 %v1122
      %1151 = vmatprep.subr.bf16.mxu0 0
      %1152 = vmatpush1.bf16.msra.mxu0 %v1121
      %1153 = vmatprep.subr.bf16.mxu0 0
      %1154 = vmatpush2.bf16.msra.mxu0 0
      %1155 = vmatprep.subr.bf16.mxu0 0
      %1156 = vmatpush2.bf16.msra.mxu0 0
      %1157 = vmatprep.subr.bf16.mxu0 0
      %1158 = vmatpush2.bf16.msra.mxu0 0
      %1159 = vmatprep.subr.bf16.mxu0 0
      %1160 = vmatpush2.bf16.msra.mxu0 0
      %1161 = vmatprep.subr.bf16.mxu0 0
      %1162 = vmatpush2.bf16.msra.mxu0 0
      %1163 = vmatprep.subr.bf16.mxu0 0
      %1164 = vmatpush2.bf16.msra.mxu0 0
      %1165 = vmatprep.subr.bf16.mxu0 0
      %1166 = vmatpush2.bf16.msra.mxu0 0
      %1167 = vmatprep.subr.bf16.mxu0 0
      %1168 = vmatpush2.bf16.msra.mxu0 0
      %1169 = vmatprep.mubr.bf16.mxu0 0
      %1170 = vmatmul.mubr.bf16.gmra.mxu0 %v757
      %v1171 = vpop.f32.mrf.mxu0
      %v1172 = vadd.f32 0.0, %v1171
      %v1173 = vpop.f32.mrf.mxu0
      %v1174 = vpop.f32.mrf.mxu0
      %v1175 = vadd.f32 0.0, %v1174
      %v1176 = vpop.f32.mrf.mxu0
      %1177 = vdwg.mxu0
      %v1178 = vld [vmem:[%s657] sm:$0xf]
      %v1179 = vld [vmem:[%s657 + $0x4] sm:$0xf]
      %v1180 = vld [vmem:[%s657 + $0x8] sm:$0xf]
      %v1181 = vld [vmem:[%s657 + $0xc] sm:$0xf]
      %v1182 = vld [vmem:[%s657 + $0x10] sm:$0xf]
      %v1183 = vld [vmem:[%s657 + $0x14] sm:$0xf]
      %v1184 = vld [vmem:[%s657 + $0x18] sm:$0xf]
      %v1185 = vld [vmem:[%s657 + $0x1c] sm:$0xf]
      %v1186 = vld [vmem:[%s657 + $0x20] sm:$0xf]
      %v1187 = vld [vmem:[%s657 + $0x24] sm:$0xf]
      %v1188 = vld [vmem:[%s657 + $0x28] sm:$0xf]
      %v1189 = vld [vmem:[%s657 + $0x2c] sm:$0xf]
      %v1190 = vld [vmem:[%s657 + $0x30] sm:$0xf]
      %v1191 = vld [vmem:[%s657 + $0x34] sm:$0xf]
      %v1192 = vld [vmem:[%s657 + $0x38] sm:$0xf]
      %v1193 = vld [vmem:[%s657 + $0x3c] sm:$0xf]
      %v1194 = vld [vmem:[%s657 + $0x40] sm:$0xf]
      %v1195 = vld [vmem:[%s657 + $0x44] sm:$0xf]
      %v1196 = vld [vmem:[%s657 + $0x48] sm:$0xf]
      %v1197 = vld [vmem:[%s657 + $0x4c] sm:$0xf]
      %v1198 = vld [vmem:[%s657 + $0x50] sm:$0xf]
      %v1199 = vld [vmem:[%s657 + $0x54] sm:$0xf]
      %v1200 = vld [vmem:[%s657 + $0x58] sm:$0xf]
      %v1201 = vld [vmem:[%s657 + $0x5c] sm:$0xf]
      %v1202 = vld [vmem:[%s657 + $0x60] sm:$0xf]
      %v1203 = vld [vmem:[%s657 + $0x64] sm:$0xf]
      %v1204 = vld [vmem:[%s657 + $0x68] sm:$0xf]
      %v1205 = vld [vmem:[%s657 + $0x6c] sm:$0xf]
      %v1206 = vld [vmem:[%s657 + $0x70] sm:$0xf]
      %v1207 = vld [vmem:[%s657 + $0x74] sm:$0xf]
      %v1208 = vld [vmem:[%s657 + $0x78] sm:$0xf]
      %v1209 = vld [vmem:[%s657 + $0x7c] sm:$0xf]
      %v1210 = vld [vmem:[%s657 + $0x80] sm:$0xf]
      %v1211 = vld [vmem:[%s657 + $0x84] sm:$0xf]
      %v1212 = vld [vmem:[%s657 + $0x88] sm:$0xf]
      %v1213 = vld [vmem:[%s657 + $0x8c] sm:$0xf]
      %v1214 = vld [vmem:[%s657 + $0x90] sm:$0xf]
      %v1215 = vld [vmem:[%s657 + $0x94] sm:$0xf]
      %v1216 = vld [vmem:[%s657 + $0x98] sm:$0xf]
      %v1217 = vld [vmem:[%s657 + $0x9c] sm:$0xf]
      %v1218 = vld [vmem:[%s657 + $0xa0] sm:$0xf]
      %v1219 = vld [vmem:[%s657 + $0xa4] sm:$0xf]
      %v1220 = vld [vmem:[%s657 + $0xa8] sm:$0xf]
      %v1221 = vld [vmem:[%s657 + $0xac] sm:$0xf]
      %v1222 = vld [vmem:[%s657 + $0xb0] sm:$0xf]
      %v1223 = vld [vmem:[%s657 + $0xb4] sm:$0xf]
      %v1224 = vld [vmem:[%s657 + $0xb8] sm:$0xf]
      %v1225 = vld [vmem:[%s657 + $0xbc] sm:$0xf]
      %v1226 = vld [vmem:[%s657 + $0xc0] sm:$0xf]
      %v1227 = vld [vmem:[%s657 + $0xc4] sm:$0xf]
      %v1228 = vld [vmem:[%s657 + $0xc8] sm:$0xf]
      %v1229 = vld [vmem:[%s657 + $0xcc] sm:$0xf]
      %v1230 = vld [vmem:[%s657 + $0xd0] sm:$0xf]
      %v1231 = vld [vmem:[%s657 + $0xd4] sm:$0xf]
      %v1232 = vld [vmem:[%s657 + $0xd8] sm:$0xf]
      %v1233 = vld [vmem:[%s657 + $0xdc] sm:$0xf]
      %v1234 = vld [vmem:[%s657 + $0xe0] sm:$0xf]
      %v1235 = vld [vmem:[%s657 + $0xe4] sm:$0xf]
      %v1236 = vld [vmem:[%s657 + $0xe8] sm:$0xf]
      %v1237 = vld [vmem:[%s657 + $0xec] sm:$0xf]
      %v1238 = vld [vmem:[%s657 + $0xf0] sm:$0xf]
      %v1239 = vld [vmem:[%s657 + $0xf4] sm:$0xf]
      %v1240 = vld [vmem:[%s657 + $0xf8] sm:$0xf]
      %v1241 = vld [vmem:[%s657 + $0xfc] sm:$0xf]
      %v1258 = vunpack.c.l.b16 %v1178
      %v1259 = vunpack.c.l.b16 %v1179
      %v1260 = vunpack.c.l.b16 %v1180
      %v1261 = vunpack.c.l.b16 %v1181
      %v1262 = vunpack.c.l.b16 %v1182
      %v1263 = vunpack.c.l.b16 %v1183
      %v1264 = vunpack.c.l.b16 %v1184
      %v1265 = vunpack.c.l.b16 %v1185
      %v1266 = vunpack.c.l.b16 %v1186
      %v1267 = vunpack.c.l.b16 %v1187
      %v1268 = vunpack.c.l.b16 %v1188
      %v1269 = vunpack.c.l.b16 %v1189
      %v1270 = vunpack.c.l.b16 %v1190
      %v1271 = vunpack.c.l.b16 %v1191
      %v1272 = vunpack.c.l.b16 %v1192
      %v1273 = vunpack.c.l.b16 %v1193
      %v1274 = vpack.c.b16 %v1259, %v1258
      %v1275 = vpack.c.b16 %v1261, %v1260
      %v1276 = vpack.c.b16 %v1263, %v1262
      %v1277 = vpack.c.b16 %v1265, %v1264
      %v1278 = vpack.c.b16 %v1267, %v1266
      %v1279 = vpack.c.b16 %v1269, %v1268
      %v1280 = vpack.c.b16 %v1271, %v1270
      %v1281 = vpack.c.b16 %v1273, %v1272
      %1290 = vmatprep.subr.bf16.mxu0 0
      %1291 = vmatpush1.bf16.msra.mxu0 %v1281
      %1292 = vmatprep.subr.bf16.mxu0 0
      %1293 = vmatpush1.bf16.msra.mxu0 %v1280
      %1294 = vmatprep.subr.bf16.mxu0 0
      %1295 = vmatpush1.bf16.msra.mxu0 %v1279
      %1296 = vmatprep.subr.bf16.mxu0 0
      %1297 = vmatpush1.bf16.msra.mxu0 %v1278
      %1298 = vmatprep.subr.bf16.mxu0 0
      %1299 = vmatpush1.bf16.msra.mxu0 %v1277
      %1300 = vmatprep.subr.bf16.mxu0 0
      %1301 = vmatpush1.bf16.msra.mxu0 %v1276
      %1302 = vmatprep.subr.bf16.mxu0 0
      %1303 = vmatpush1.bf16.msra.mxu0 %v1275
      %1304 = vmatprep.subr.bf16.mxu0 0
      %1305 = vmatpush1.bf16.msra.mxu0 %v1274
      %1306 = vmatprep.subr.bf16.mxu0 0
      %1307 = vmatpush2.bf16.msra.mxu0 0
      %1308 = vmatprep.subr.bf16.mxu0 0
      %1309 = vmatpush2.bf16.msra.mxu0 0
      %1310 = vmatprep.subr.bf16.mxu0 0
      %1311 = vmatpush2.bf16.msra.mxu0 0
      %1312 = vmatprep.subr.bf16.mxu0 0
      %1313 = vmatpush2.bf16.msra.mxu0 0
      %1314 = vmatprep.subr.bf16.mxu0 0
      %1315 = vmatpush2.bf16.msra.mxu0 0
      %1316 = vmatprep.subr.bf16.mxu0 0
      %1317 = vmatpush2.bf16.msra.mxu0 0
      %1318 = vmatprep.subr.bf16.mxu0 0
      %1319 = vmatpush2.bf16.msra.mxu0 0
      %1320 = vmatprep.subr.bf16.mxu0 0
      %1321 = vmatpush2.bf16.msra.mxu0 0
      %1322 = vmatprep.mubr.bf16.mxu0 0
      %1323 = vmatmul.mubr.bf16.gmra.mxu0 %v757
      %v1324 = vpop.f32.mrf.mxu0
      %v1325 = vadd.f32 0.0, %v1324
      %v1326 = vpop.f32.mrf.mxu0
      %v1327 = vpop.f32.mrf.mxu0
      %v1328 = vadd.f32 0.0, %v1327
      %v1329 = vpop.f32.mrf.mxu0
      %1330 = vdwg.mxu0
      %v1347 = vunpack.c.l.b16 %v1194
      %v1348 = vunpack.c.l.b16 %v1195
      %v1349 = vunpack.c.l.b16 %v1196
      %v1350 = vunpack.c.l.b16 %v1197
      %v1351 = vunpack.c.l.b16 %v1198
      %v1352 = vunpack.c.l.b16 %v1199
      %v1353 = vunpack.c.l.b16 %v1200
      %v1354 = vunpack.c.l.b16 %v1201
      %v1355 = vunpack.c.l.b16 %v1202
      %v1356 = vunpack.c.l.b16 %v1203
      %v1357 = vunpack.c.l.b16 %v1204
      %v1358 = vunpack.c.l.b16 %v1205
      %v1359 = vunpack.c.l.b16 %v1206
      %v1360 = vunpack.c.l.b16 %v1207
      %v1361 = vunpack.c.l.b16 %v1208
      %v1362 = vunpack.c.l.b16 %v1209
      %v1363 = vpack.c.b16 %v1348, %v1347
      %v1364 = vpack.c.b16 %v1350, %v1349
      %v1365 = vpack.c.b16 %v1352, %v1351
      %v1366 = vpack.c.b16 %v1354, %v1353
      %v1367 = vpack.c.b16 %v1356, %v1355
      %v1368 = vpack.c.b16 %v1358, %v1357
      %v1369 = vpack.c.b16 %v1360, %v1359
      %v1370 = vpack.c.b16 %v1362, %v1361
      %1379 = vmatprep.subr.bf16.mxu0 0
      %1380 = vmatpush1.bf16.msra.mxu0 %v1370
      %1381 = vmatprep.subr.bf16.mxu0 0
      %1382 = vmatpush1.bf16.msra.mxu0 %v1369
      %1383 = vmatprep.subr.bf16.mxu0 0
      %1384 = vmatpush1.bf16.msra.mxu0 %v1368
      %1385 = vmatprep.subr.bf16.mxu0 0
      %1386 = vmatpush1.bf16.msra.mxu0 %v1367
      %1387 = vmatprep.subr.bf16.mxu0 0
      %1388 = vmatpush1.bf16.msra.mxu0 %v1366
      %1389 = vmatprep.subr.bf16.mxu0 0
      %1390 = vmatpush1.bf16.msra.mxu0 %v1365
      %1391 = vmatprep.subr.bf16.mxu0 0
      %1392 = vmatpush1.bf16.msra.mxu0 %v1364
      %1393 = vmatprep.subr.bf16.mxu0 0
      %1394 = vmatpush1.bf16.msra.mxu0 %v1363
      %1395 = vmatprep.subr.bf16.mxu0 0
      %1396 = vmatpush2.bf16.msra.mxu0 0
      %1397 = vmatprep.subr.bf16.mxu0 0
      %1398 = vmatpush2.bf16.msra.mxu0 0
      %1399 = vmatprep.subr.bf16.mxu0 0
      %1400 = vmatpush2.bf16.msra.mxu0 0
      %1401 = vmatprep.subr.bf16.mxu0 0
      %1402 = vmatpush2.bf16.msra.mxu0 0
      %1403 = vmatprep.subr.bf16.mxu0 0
      %1404 = vmatpush2.bf16.msra.mxu0 0
      %1405 = vmatprep.subr.bf16.mxu0 0
      %1406 = vmatpush2.bf16.msra.mxu0 0
      %1407 = vmatprep.subr.bf16.mxu0 0
      %1408 = vmatpush2.bf16.msra.mxu0 0
      %1409 = vmatprep.subr.bf16.mxu0 0
      %1410 = vmatpush2.bf16.msra.mxu0 0
      %1411 = vmatprep.mubr.bf16.mxu0 0
      %1412 = vmatmul.mubr.bf16.gmra.mxu0 %v757
      %v1413 = vpop.f32.mrf.mxu0
      %v1414 = vadd.f32 0.0, %v1413
      %v1415 = vpop.f32.mrf.mxu0
      %v1416 = vpop.f32.mrf.mxu0
      %v1417 = vadd.f32 0.0, %v1416
      %v1418 = vpop.f32.mrf.mxu0
      %1419 = vdwg.mxu0
      %v1436 = vunpack.c.l.b16 %v1210
      %v1437 = vunpack.c.l.b16 %v1211
      %v1438 = vunpack.c.l.b16 %v1212
      %v1439 = vunpack.c.l.b16 %v1213
      %v1440 = vunpack.c.l.b16 %v1214
      %v1441 = vunpack.c.l.b16 %v1215
      %v1442 = vunpack.c.l.b16 %v1216
      %v1443 = vunpack.c.l.b16 %v1217
      %v1444 = vunpack.c.l.b16 %v1218
      %v1445 = vunpack.c.l.b16 %v1219
      %v1446 = vunpack.c.l.b16 %v1220
      %v1447 = vunpack.c.l.b16 %v1221
      %v1448 = vunpack.c.l.b16 %v1222
      %v1449 = vunpack.c.l.b16 %v1223
      %v1450 = vunpack.c.l.b16 %v1224
      %v1451 = vunpack.c.l.b16 %v1225
      %v1452 = vpack.c.b16 %v1437, %v1436
      %v1453 = vpack.c.b16 %v1439, %v1438
      %v1454 = vpack.c.b16 %v1441, %v1440
      %v1455 = vpack.c.b16 %v1443, %v1442
      %v1456 = vpack.c.b16 %v1445, %v1444
      %v1457 = vpack.c.b16 %v1447, %v1446
      %v1458 = vpack.c.b16 %v1449, %v1448
      %v1459 = vpack.c.b16 %v1451, %v1450
      %1468 = vmatprep.subr.bf16.mxu0 0
      %1469 = vmatpush1.bf16.msra.mxu0 %v1459
      %1470 = vmatprep.subr.bf16.mxu0 0
      %1471 = vmatpush1.bf16.msra.mxu0 %v1458
      %1472 = vmatprep.subr.bf16.mxu0 0
      %1473 = vmatpush1.bf16.msra.mxu0 %v1457
      %1474 = vmatprep.subr.bf16.mxu0 0
      %1475 = vmatpush1.bf16.msra.mxu0 %v1456
      %1476 = vmatprep.subr.bf16.mxu0 0
      %1477 = vmatpush1.bf16.msra.mxu0 %v1455
      %1478 = vmatprep.subr.bf16.mxu0 0
      %1479 = vmatpush1.bf16.msra.mxu0 %v1454
      %1480 = vmatprep.subr.bf16.mxu0 0
      %1481 = vmatpush1.bf16.msra.mxu0 %v1453
      %1482 = vmatprep.subr.bf16.mxu0 0
      %1483 = vmatpush1.bf16.msra.mxu0 %v1452
      %1484 = vmatprep.subr.bf16.mxu0 0
      %1485 = vmatpush2.bf16.msra.mxu0 0
      %1486 = vmatprep.subr.bf16.mxu0 0
      %1487 = vmatpush2.bf16.msra.mxu0 0
      %1488 = vmatprep.subr.bf16.mxu0 0
      %1489 = vmatpush2.bf16.msra.mxu0 0
      %1490 = vmatprep.subr.bf16.mxu0 0
      %1491 = vmatpush2.bf16.msra.mxu0 0
      %1492 = vmatprep.subr.bf16.mxu0 0
      %1493 = vmatpush2.bf16.msra.mxu0 0
      %1494 = vmatprep.subr.bf16.mxu0 0
      %1495 = vmatpush2.bf16.msra.mxu0 0
      %1496 = vmatprep.subr.bf16.mxu0 0
      %1497 = vmatpush2.bf16.msra.mxu0 0
      %1498 = vmatprep.subr.bf16.mxu0 0
      %1499 = vmatpush2.bf16.msra.mxu0 0
      %1500 = vmatprep.mubr.bf16.mxu0 0
      %1501 = vmatmul.mubr.bf16.gmra.mxu0 %v757
      %v1502 = vpop.f32.mrf.mxu0
      %v1503 = vadd.f32 0.0, %v1502
      %v1504 = vpop.f32.mrf.mxu0
      %v1505 = vpop.f32.mrf.mxu0
      %v1506 = vadd.f32 0.0, %v1505
      %v1507 = vpop.f32.mrf.mxu0
      %1508 = vdwg.mxu0
      %v1525 = vunpack.c.l.b16 %v1226
      %v1526 = vunpack.c.l.b16 %v1227
      %v1527 = vunpack.c.l.b16 %v1228
      %v1528 = vunpack.c.l.b16 %v1229
      %v1529 = vunpack.c.l.b16 %v1230
      %v1530 = vunpack.c.l.b16 %v1231
      %v1531 = vunpack.c.l.b16 %v1232
      %v1532 = vunpack.c.l.b16 %v1233
      %v1533 = vunpack.c.l.b16 %v1234
      %v1534 = vunpack.c.l.b16 %v1235
      %v1535 = vunpack.c.l.b16 %v1236
      %v1536 = vunpack.c.l.b16 %v1237
      %v1537 = vunpack.c.l.b16 %v1238
      %v1538 = vunpack.c.l.b16 %v1239
      %v1539 = vunpack.c.l.b16 %v1240
      %v1540 = vunpack.c.l.b16 %v1241
      %v1541 = vpack.c.b16 %v1526, %v1525
      %v1542 = vpack.c.b16 %v1528, %v1527
      %v1543 = vpack.c.b16 %v1530, %v1529
      %v1544 = vpack.c.b16 %v1532, %v1531
      %v1545 = vpack.c.b16 %v1534, %v1533
      %v1546 = vpack.c.b16 %v1536, %v1535
      %v1547 = vpack.c.b16 %v1538, %v1537
      %v1548 = vpack.c.b16 %v1540, %v1539
      %1557 = vmatprep.subr.bf16.mxu0 0
      %1558 = vmatpush1.bf16.msra.mxu0 %v1548
      %1559 = vmatprep.subr.bf16.mxu0 0
      %1560 = vmatpush1.bf16.msra.mxu0 %v1547
      %1561 = vmatprep.subr.bf16.mxu0 0
      %1562 = vmatpush1.bf16.msra.mxu0 %v1546
      %1563 = vmatprep.subr.bf16.mxu0 0
      %1564 = vmatpush1.bf16.msra.mxu0 %v1545
      %1565 = vmatprep.subr.bf16.mxu0 0
      %1566 = vmatpush1.bf16.msra.mxu0 %v1544
      %1567 = vmatprep.subr.bf16.mxu0 0
      %1568 = vmatpush1.bf16.msra.mxu0 %v1543
      %1569 = vmatprep.subr.bf16.mxu0 0
      %1570 = vmatpush1.bf16.msra.mxu0 %v1542
      %1571 = vmatprep.subr.bf16.mxu0 0
      %1572 = vmatpush1.bf16.msra.mxu0 %v1541
      %1573 = vmatprep.subr.bf16.mxu0 0
      %1574 = vmatpush2.bf16.msra.mxu0 0
      %1575 = vmatprep.subr.bf16.mxu0 0
      %1576 = vmatpush2.bf16.msra.mxu0 0
      %1577 = vmatprep.subr.bf16.mxu0 0
      %1578 = vmatpush2.bf16.msra.mxu0 0
      %1579 = vmatprep.subr.bf16.mxu0 0
      %1580 = vmatpush2.bf16.msra.mxu0 0
      %1581 = vmatprep.subr.bf16.mxu0 0
      %1582 = vmatpush2.bf16.msra.mxu0 0
      %1583 = vmatprep.subr.bf16.mxu0 0
      %1584 = vmatpush2.bf16.msra.mxu0 0
      %1585 = vmatprep.subr.bf16.mxu0 0
      %1586 = vmatpush2.bf16.msra.mxu0 0
      %1587 = vmatprep.subr.bf16.mxu0 0
      %1588 = vmatpush2.bf16.msra.mxu0 0
      %1589 = vmatprep.mubr.bf16.mxu0 0
      %1590 = vmatmul.mubr.bf16.gmra.mxu0 %v757
      %v1591 = vpop.f32.mrf.mxu0
      %v1592 = vadd.f32 0.0, %v1591
      %v1593 = vpop.f32.mrf.mxu0
      %v1594 = vpop.f32.mrf.mxu0
      %v1595 = vadd.f32 0.0, %v1594
      %v1596 = vpop.f32.mrf.mxu0
      %1597 = vdwg.mxu0
      %v1598 = vld [vmem:[%s662] sm:$0xf]
      %v1599 = vld [vmem:[%s662 + $0x4] sm:$0xf]
      %v1600 = vld [vmem:[%s662 + $0x8] sm:$0xf]
      %v1601 = vld [vmem:[%s662 + $0xc] sm:$0xf]
      %v1602 = vld [vmem:[%s662 + $0x10] sm:$0xf]
      %v1603 = vld [vmem:[%s662 + $0x14] sm:$0xf]
      %v1604 = vld [vmem:[%s662 + $0x18] sm:$0xf]
      %v1605 = vld [vmem:[%s662 + $0x1c] sm:$0xf]
      %v1606 = vld [vmem:[%s662 + $0x20] sm:$0xf]
      %v1607 = vld [vmem:[%s662 + $0x24] sm:$0xf]
      %v1608 = vld [vmem:[%s662 + $0x28] sm:$0xf]
      %v1609 = vld [vmem:[%s662 + $0x2c] sm:$0xf]
      %v1610 = vld [vmem:[%s662 + $0x30] sm:$0xf]
      %v1611 = vld [vmem:[%s662 + $0x34] sm:$0xf]
      %v1612 = vld [vmem:[%s662 + $0x38] sm:$0xf]
      %v1613 = vld [vmem:[%s662 + $0x3c] sm:$0xf]
      %v1614 = vld [vmem:[%s662 + $0x40] sm:$0xf]
      %v1615 = vld [vmem:[%s662 + $0x44] sm:$0xf]
      %v1616 = vld [vmem:[%s662 + $0x48] sm:$0xf]
      %v1617 = vld [vmem:[%s662 + $0x4c] sm:$0xf]
      %v1618 = vld [vmem:[%s662 + $0x50] sm:$0xf]
      %v1619 = vld [vmem:[%s662 + $0x54] sm:$0xf]
      %v1620 = vld [vmem:[%s662 + $0x58] sm:$0xf]
      %v1621 = vld [vmem:[%s662 + $0x5c] sm:$0xf]
      %v1622 = vld [vmem:[%s662 + $0x60] sm:$0xf]
      %v1623 = vld [vmem:[%s662 + $0x64] sm:$0xf]
      %v1624 = vld [vmem:[%s662 + $0x68] sm:$0xf]
      %v1625 = vld [vmem:[%s662 + $0x6c] sm:$0xf]
      %v1626 = vld [vmem:[%s662 + $0x70] sm:$0xf]
      %v1627 = vld [vmem:[%s662 + $0x74] sm:$0xf]
      %v1628 = vld [vmem:[%s662 + $0x78] sm:$0xf]
      %v1629 = vld [vmem:[%s662 + $0x7c] sm:$0xf]
      %v1630 = vld [vmem:[%s662 + $0x80] sm:$0xf]
      %v1631 = vld [vmem:[%s662 + $0x84] sm:$0xf]
      %v1632 = vld [vmem:[%s662 + $0x88] sm:$0xf]
      %v1633 = vld [vmem:[%s662 + $0x8c] sm:$0xf]
      %v1634 = vld [vmem:[%s662 + $0x90] sm:$0xf]
      %v1635 = vld [vmem:[%s662 + $0x94] sm:$0xf]
      %v1636 = vld [vmem:[%s662 + $0x98] sm:$0xf]
      %v1637 = vld [vmem:[%s662 + $0x9c] sm:$0xf]
      %v1638 = vld [vmem:[%s662 + $0xa0] sm:$0xf]
      %v1639 = vld [vmem:[%s662 + $0xa4] sm:$0xf]
      %v1640 = vld [vmem:[%s662 + $0xa8] sm:$0xf]
      %v1641 = vld [vmem:[%s662 + $0xac] sm:$0xf]
      %v1642 = vld [vmem:[%s662 + $0xb0] sm:$0xf]
      %v1643 = vld [vmem:[%s662 + $0xb4] sm:$0xf]
      %v1644 = vld [vmem:[%s662 + $0xb8] sm:$0xf]
      %v1645 = vld [vmem:[%s662 + $0xbc] sm:$0xf]
      %v1646 = vld [vmem:[%s662 + $0xc0] sm:$0xf]
      %v1647 = vld [vmem:[%s662 + $0xc4] sm:$0xf]
      %v1648 = vld [vmem:[%s662 + $0xc8] sm:$0xf]
      %v1649 = vld [vmem:[%s662 + $0xcc] sm:$0xf]
      %v1650 = vld [vmem:[%s662 + $0xd0] sm:$0xf]
      %v1651 = vld [vmem:[%s662 + $0xd4] sm:$0xf]
      %v1652 = vld [vmem:[%s662 + $0xd8] sm:$0xf]
      %v1653 = vld [vmem:[%s662 + $0xdc] sm:$0xf]
      %v1654 = vld [vmem:[%s662 + $0xe0] sm:$0xf]
      %v1655 = vld [vmem:[%s662 + $0xe4] sm:$0xf]
      %v1656 = vld [vmem:[%s662 + $0xe8] sm:$0xf]
      %v1657 = vld [vmem:[%s662 + $0xec] sm:$0xf]
      %v1658 = vld [vmem:[%s662 + $0xf0] sm:$0xf]
      %v1659 = vld [vmem:[%s662 + $0xf4] sm:$0xf]
      %v1660 = vld [vmem:[%s662 + $0xf8] sm:$0xf]
      %v1661 = vld [vmem:[%s662 + $0xfc] sm:$0xf]
      %v1678 = vunpack.c.l.b16 %v1598
      %v1679 = vunpack.c.l.b16 %v1599
      %v1680 = vunpack.c.l.b16 %v1600
      %v1681 = vunpack.c.l.b16 %v1601
      %v1682 = vunpack.c.l.b16 %v1602
      %v1683 = vunpack.c.l.b16 %v1603
      %v1684 = vunpack.c.l.b16 %v1604
      %v1685 = vunpack.c.l.b16 %v1605
      %v1686 = vunpack.c.l.b16 %v1606
      %v1687 = vunpack.c.l.b16 %v1607
      %v1688 = vunpack.c.l.b16 %v1608
      %v1689 = vunpack.c.l.b16 %v1609
      %v1690 = vunpack.c.l.b16 %v1610
      %v1691 = vunpack.c.l.b16 %v1611
      %v1692 = vunpack.c.l.b16 %v1612
      %v1693 = vunpack.c.l.b16 %v1613
      %v1694 = vpack.c.b16 %v1679, %v1678
      %v1695 = vpack.c.b16 %v1681, %v1680
      %v1696 = vpack.c.b16 %v1683, %v1682
      %v1697 = vpack.c.b16 %v1685, %v1684
      %v1698 = vpack.c.b16 %v1687, %v1686
      %v1699 = vpack.c.b16 %v1689, %v1688
      %v1700 = vpack.c.b16 %v1691, %v1690
      %v1701 = vpack.c.b16 %v1693, %v1692
      %1710 = vmatprep.subr.bf16.mxu0 0
      %1711 = vmatpush1.bf16.msra.mxu0 %v1701
      %1712 = vmatprep.subr.bf16.mxu0 0
      %1713 = vmatpush1.bf16.msra.mxu0 %v1700
      %1714 = vmatprep.subr.bf16.mxu0 0
      %1715 = vmatpush1.bf16.msra.mxu0 %v1699
      %1716 = vmatprep.subr.bf16.mxu0 0
      %1717 = vmatpush1.bf16.msra.mxu0 %v1698
      %1718 = vmatprep.subr.bf16.mxu0 0
      %1719 = vmatpush1.bf16.msra.mxu0 %v1697
      %1720 = vmatprep.subr.bf16.mxu0 0
      %1721 = vmatpush1.bf16.msra.mxu0 %v1696
      %1722 = vmatprep.subr.bf16.mxu0 0
      %1723 = vmatpush1.bf16.msra.mxu0 %v1695
      %1724 = vmatprep.subr.bf16.mxu0 0
      %1725 = vmatpush1.bf16.msra.mxu0 %v1694
      %1726 = vmatprep.subr.bf16.mxu0 0
      %1727 = vmatpush2.bf16.msra.mxu0 0
      %1728 = vmatprep.subr.bf16.mxu0 0
      %1729 = vmatpush2.bf16.msra.mxu0 0
      %1730 = vmatprep.subr.bf16.mxu0 0
      %1731 = vmatpush2.bf16.msra.mxu0 0
      %1732 = vmatprep.subr.bf16.mxu0 0
      %1733 = vmatpush2.bf16.msra.mxu0 0
      %1734 = vmatprep.subr.bf16.mxu0 0
      %1735 = vmatpush2.bf16.msra.mxu0 0
      %1736 = vmatprep.subr.bf16.mxu0 0
      %1737 = vmatpush2.bf16.msra.mxu0 0
      %1738 = vmatprep.subr.bf16.mxu0 0
      %1739 = vmatpush2.bf16.msra.mxu0 0
      %1740 = vmatprep.subr.bf16.mxu0 0
      %1741 = vmatpush2.bf16.msra.mxu0 0
      %1742 = vmatprep.mubr.bf16.mxu0 0
      %1743 = vmatmul.mubr.bf16.gmra.mxu0 %v757
      %v1744 = vpop.f32.mrf.mxu0
      %v1745 = vadd.f32 0.0, %v1744
      %v1746 = vpop.f32.mrf.mxu0
      %v1747 = vpop.f32.mrf.mxu0
      %v1748 = vadd.f32 0.0, %v1747
      %v1749 = vpop.f32.mrf.mxu0
      %1750 = vdwg.mxu0
      %v1767 = vunpack.c.l.b16 %v1614
      %v1768 = vunpack.c.l.b16 %v1615
      %v1769 = vunpack.c.l.b16 %v1616
      %v1770 = vunpack.c.l.b16 %v1617
      %v1771 = vunpack.c.l.b16 %v1618
      %v1772 = vunpack.c.l.b16 %v1619
      %v1773 = vunpack.c.l.b16 %v1620
      %v1774 = vunpack.c.l.b16 %v1621
      %v1775 = vunpack.c.l.b16 %v1622
      %v1776 = vunpack.c.l.b16 %v1623
      %v1777 = vunpack.c.l.b16 %v1624
      %v1778 = vunpack.c.l.b16 %v1625
      %v1779 = vunpack.c.l.b16 %v1626
      %v1780 = vunpack.c.l.b16 %v1627
      %v1781 = vunpack.c.l.b16 %v1628
      %v1782 = vunpack.c.l.b16 %v1629
      %v1783 = vpack.c.b16 %v1768, %v1767
      %v1784 = vpack.c.b16 %v1770, %v1769
      %v1785 = vpack.c.b16 %v1772, %v1771
      %v1786 = vpack.c.b16 %v1774, %v1773
      %v1787 = vpack.c.b16 %v1776, %v1775
      %v1788 = vpack.c.b16 %v1778, %v1777
      %v1789 = vpack.c.b16 %v1780, %v1779
      %v1790 = vpack.c.b16 %v1782, %v1781
      %1799 = vmatprep.subr.bf16.mxu0 0
      %1800 = vmatpush1.bf16.msra.mxu0 %v1790
      %1801 = vmatprep.subr.bf16.mxu0 0
      %1802 = vmatpush1.bf16.msra.mxu0 %v1789
      %1803 = vmatprep.subr.bf16.mxu0 0
      %1804 = vmatpush1.bf16.msra.mxu0 %v1788
      %1805 = vmatprep.subr.bf16.mxu0 0
      %1806 = vmatpush1.bf16.msra.mxu0 %v1787
      %1807 = vmatprep.subr.bf16.mxu0 0
      %1808 = vmatpush1.bf16.msra.mxu0 %v1786
      %1809 = vmatprep.subr.bf16.mxu0 0
      %1810 = vmatpush1.bf16.msra.mxu0 %v1785
      %1811 = vmatprep.subr.bf16.mxu0 0
      %1812 = vmatpush1.bf16.msra.mxu0 %v1784
      %1813 = vmatprep.subr.bf16.mxu0 0
      %1814 = vmatpush1.bf16.msra.mxu0 %v1783
      %1815 = vmatprep.subr.bf16.mxu0 0
      %1816 = vmatpush2.bf16.msra.mxu0 0
      %1817 = vmatprep.subr.bf16.mxu0 0
      %1818 = vmatpush2.bf16.msra.mxu0 0
      %1819 = vmatprep.subr.bf16.mxu0 0
      %1820 = vmatpush2.bf16.msra.mxu0 0
      %1821 = vmatprep.subr.bf16.mxu0 0
      %1822 = vmatpush2.bf16.msra.mxu0 0
      %1823 = vmatprep.subr.bf16.mxu0 0
      %1824 = vmatpush2.bf16.msra.mxu0 0
      %1825 = vmatprep.subr.bf16.mxu0 0
      %1826 = vmatpush2.bf16.msra.mxu0 0
      %1827 = vmatprep.subr.bf16.mxu0 0
      %1828 = vmatpush2.bf16.msra.mxu0 0
      %1829 = vmatprep.subr.bf16.mxu0 0
      %1830 = vmatpush2.bf16.msra.mxu0 0
      %1831 = vmatprep.mubr.bf16.mxu0 0
      %1832 = vmatmul.mubr.bf16.gmra.mxu0 %v757
      %v1833 = vpop.f32.mrf.mxu0
      %v1834 = vadd.f32 0.0, %v1833
      %v1835 = vpop.f32.mrf.mxu0
      %v1836 = vpop.f32.mrf.mxu0
      %v1837 = vadd.f32 0.0, %v1836
      %v1838 = vpop.f32.mrf.mxu0
      %1839 = vdwg.mxu0
      %v1856 = vunpack.c.l.b16 %v1630
      %v1857 = vunpack.c.l.b16 %v1631
      %v1858 = vunpack.c.l.b16 %v1632
      %v1859 = vunpack.c.l.b16 %v1633
      %v1860 = vunpack.c.l.b16 %v1634
      %v1861 = vunpack.c.l.b16 %v1635
      %v1862 = vunpack.c.l.b16 %v1636
      %v1863 = vunpack.c.l.b16 %v1637
      %v1864 = vunpack.c.l.b16 %v1638
      %v1865 = vunpack.c.l.b16 %v1639
      %v1866 = vunpack.c.l.b16 %v1640
      %v1867 = vunpack.c.l.b16 %v1641
      %v1868 = vunpack.c.l.b16 %v1642
      %v1869 = vunpack.c.l.b16 %v1643
      %v1870 = vunpack.c.l.b16 %v1644
      %v1871 = vunpack.c.l.b16 %v1645
      %v1872 = vpack.c.b16 %v1857, %v1856
      %v1873 = vpack.c.b16 %v1859, %v1858
      %v1874 = vpack.c.b16 %v1861, %v1860
      %v1875 = vpack.c.b16 %v1863, %v1862
      %v1876 = vpack.c.b16 %v1865, %v1864
      %v1877 = vpack.c.b16 %v1867, %v1866
      %v1878 = vpack.c.b16 %v1869, %v1868
      %v1879 = vpack.c.b16 %v1871, %v1870
      %1888 = vmatprep.subr.bf16.mxu0 0
      %1889 = vmatpush1.bf16.msra.mxu0 %v1879
      %1890 = vmatprep.subr.bf16.mxu0 0
      %1891 = vmatpush1.bf16.msra.mxu0 %v1878
      %1892 = vmatprep.subr.bf16.mxu0 0
      %1893 = vmatpush1.bf16.msra.mxu0 %v1877
      %1894 = vmatprep.subr.bf16.mxu0 0
      %1895 = vmatpush1.bf16.msra.mxu0 %v1876
      %1896 = vmatprep.subr.bf16.mxu0 0
      %1897 = vmatpush1.bf16.msra.mxu0 %v1875
      %1898 = vmatprep.subr.bf16.mxu0 0
      %1899 = vmatpush1.bf16.msra.mxu0 %v1874
      %1900 = vmatprep.subr.bf16.mxu0 0
      %1901 = vmatpush1.bf16.msra.mxu0 %v1873
      %1902 = vmatprep.subr.bf16.mxu0 0
      %1903 = vmatpush1.bf16.msra.mxu0 %v1872
      %1904 = vmatprep.subr.bf16.mxu0 0
      %1905 = vmatpush2.bf16.msra.mxu0 0
      %1906 = vmatprep.subr.bf16.mxu0 0
      %1907 = vmatpush2.bf16.msra.mxu0 0
      %1908 = vmatprep.subr.bf16.mxu0 0
      %1909 = vmatpush2.bf16.msra.mxu0 0
      %1910 = vmatprep.subr.bf16.mxu0 0
      %1911 = vmatpush2.bf16.msra.mxu0 0
      %1912 = vmatprep.subr.bf16.mxu0 0
      %1913 = vmatpush2.bf16.msra.mxu0 0
      %1914 = vmatprep.subr.bf16.mxu0 0
      %1915 = vmatpush2.bf16.msra.mxu0 0
      %1916 = vmatprep.subr.bf16.mxu0 0
      %1917 = vmatpush2.bf16.msra.mxu0 0
      %1918 = vmatprep.subr.bf16.mxu0 0
      %1919 = vmatpush2.bf16.msra.mxu0 0
      %1920 = vmatprep.mubr.bf16.mxu0 0
      %1921 = vmatmul.mubr.bf16.gmra.mxu0 %v757
      %v1922 = vpop.f32.mrf.mxu0
      %v1923 = vadd.f32 0.0, %v1922
      %v1924 = vpop.f32.mrf.mxu0
      %v1925 = vpop.f32.mrf.mxu0
      %v1926 = vadd.f32 0.0, %v1925
      %v1927 = vpop.f32.mrf.mxu0
      %1928 = vdwg.mxu0
      %v1945 = vunpack.c.l.b16 %v1646
      %v1946 = vunpack.c.l.b16 %v1647
      %v1947 = vunpack.c.l.b16 %v1648
      %v1948 = vunpack.c.l.b16 %v1649
      %v1949 = vunpack.c.l.b16 %v1650
      %v1950 = vunpack.c.l.b16 %v1651
      %v1951 = vunpack.c.l.b16 %v1652
      %v1952 = vunpack.c.l.b16 %v1653
      %v1953 = vunpack.c.l.b16 %v1654
      %v1954 = vunpack.c.l.b16 %v1655
      %v1955 = vunpack.c.l.b16 %v1656
      %v1956 = vunpack.c.l.b16 %v1657
      %v1957 = vunpack.c.l.b16 %v1658
      %v1958 = vunpack.c.l.b16 %v1659
      %v1959 = vunpack.c.l.b16 %v1660
      %v1960 = vunpack.c.l.b16 %v1661
      %v1961 = vpack.c.b16 %v1946, %v1945
      %v1962 = vpack.c.b16 %v1948, %v1947
      %v1963 = vpack.c.b16 %v1950, %v1949
      %v1964 = vpack.c.b16 %v1952, %v1951
      %v1965 = vpack.c.b16 %v1954, %v1953
      %v1966 = vpack.c.b16 %v1956, %v1955
      %v1967 = vpack.c.b16 %v1958, %v1957
      %v1968 = vpack.c.b16 %v1960, %v1959
      %1977 = vmatprep.subr.bf16.mxu0 0
      %1978 = vmatpush1.bf16.msra.mxu0 %v1968
      %1979 = vmatprep.subr.bf16.mxu0 0
      %1980 = vmatpush1.bf16.msra.mxu0 %v1967
      %1981 = vmatprep.subr.bf16.mxu0 0
      %1982 = vmatpush1.bf16.msra.mxu0 %v1966
      %1983 = vmatprep.subr.bf16.mxu0 0
      %1984 = vmatpush1.bf16.msra.mxu0 %v1965
      %1985 = vmatprep.subr.bf16.mxu0 0
      %1986 = vmatpush1.bf16.msra.mxu0 %v1964
      %1987 = vmatprep.subr.bf16.mxu0 0
      %1988 = vmatpush1.bf16.msra.mxu0 %v1963
      %1989 = vmatprep.subr.bf16.mxu0 0
      %1990 = vmatpush1.bf16.msra.mxu0 %v1962
      %1991 = vmatprep.subr.bf16.mxu0 0
      %1992 = vmatpush1.bf16.msra.mxu0 %v1961
      %1993 = vmatprep.subr.bf16.mxu0 0
      %1994 = vmatpush2.bf16.msra.mxu0 0
      %1995 = vmatprep.subr.bf16.mxu0 0
      %1996 = vmatpush2.bf16.msra.mxu0 0
      %1997 = vmatprep.subr.bf16.mxu0 0
      %1998 = vmatpush2.bf16.msra.mxu0 0
      %1999 = vmatprep.subr.bf16.mxu0 0
      %2000 = vmatpush2.bf16.msra.mxu0 0
      %2001 = vmatprep.subr.bf16.mxu0 0
      %2002 = vmatpush2.bf16.msra.mxu0 0
      %2003 = vmatprep.subr.bf16.mxu0 0
      %2004 = vmatpush2.bf16.msra.mxu0 0
      %2005 = vmatprep.subr.bf16.mxu0 0
      %2006 = vmatpush2.bf16.msra.mxu0 0
      %2007 = vmatprep.subr.bf16.mxu0 0
      %2008 = vmatpush2.bf16.msra.mxu0 0
      %2009 = vmatprep.mubr.bf16.mxu0 0
      %2010 = vmatmul.mubr.bf16.gmra.mxu0 %v757
      %v2011 = vpop.f32.mrf.mxu0
      %v2012 = vadd.f32 0.0, %v2011
      %v2013 = vpop.f32.mrf.mxu0
      %v2014 = vpop.f32.mrf.mxu0
      %v2015 = vadd.f32 0.0, %v2014
      %v2016 = vpop.f32.mrf.mxu0
      %2017 = vdwg.mxu0
      %v2018 = vpack.c.bf16 %v908, %v905
      %v2019 = vpack.c.bf16 %v997, %v994
      %v2020 = vpack.c.bf16 %v1086, %v1083
      %v2021 = vpack.c.bf16 %v1175, %v1172
      %v2022 = vpack.c.bf16 %v1328, %v1325
      %v2023 = vpack.c.bf16 %v1417, %v1414
      %v2024 = vpack.c.bf16 %v1506, %v1503
      %v2025 = vpack.c.bf16 %v1595, %v1592
      %vm2026 = vcmask 64512
      %v2028 = vsel %vm2026, %v2018, 0
      %v2031 = vsel %vm2026, %v2022, 0
      %2033 = vmatprep.subr.bf16.mxu0 0
      %2034 = vmatpush1.bf16.xpose.msra.mxu0 0
      %2035 = vmatprep.subr.bf16.mxu0 0
      %2036 = vmatpush1.bf16.xpose.msra.mxu0 0
      %2037 = vmatprep.subr.bf16.mxu0 0
      %2038 = vmatpush1.bf16.xpose.msra.mxu0 0
      %2039 = vmatprep.subr.bf16.mxu0 0
      %2040 = vmatpush1.bf16.xpose.msra.mxu0 0
      %2041 = vmatprep.subr.bf16.mxu0 0
      %2042 = vmatpush1.bf16.xpose.msra.mxu0 0
      %2043 = vmatprep.subr.bf16.mxu0 0
      %2044 = vmatpush1.bf16.xpose.msra.mxu0 0
      %2045 = vmatprep.subr.bf16.mxu0 0
      %2046 = vmatpush1.bf16.xpose.msra.mxu0 0
      %2047 = vmatprep.subr.bf16.mxu0 0
      %2048 = vmatpush1.bf16.xpose.msra.mxu0 %v2031
      %2049 = vmatprep.subr.bf16.mxu0 0
      %2050 = vmatpush2.bf16.xpose.msra.mxu0 0
      %2051 = vmatprep.subr.bf16.mxu0 0
      %2052 = vmatpush2.bf16.xpose.msra.mxu0 0
      %2053 = vmatprep.subr.bf16.mxu0 0
      %2054 = vmatpush2.bf16.xpose.msra.mxu0 0
      %2055 = vmatprep.subr.bf16.mxu0 0
      %2056 = vmatpush2.bf16.xpose.msra.mxu0 0
      %2057 = vmatprep.subr.bf16.mxu0 0
      %2058 = vmatpush2.bf16.xpose.msra.mxu0 0
      %2059 = vmatprep.subr.bf16.mxu0 0
      %2060 = vmatpush2.bf16.xpose.msra.mxu0 0
      %2061 = vmatprep.subr.bf16.mxu0 0
      %2062 = vmatpush2.bf16.xpose.msra.mxu0 0
      %2063 = vmatprep.subr.bf16.mxu0 0
      %2064 = vmatpush2.bf16.xpose.msra.mxu0 0
      %2065 = vmatprep.mubr.bf16.mxu0 0
      %2066 = vmatmul.mubr.bf16.gmra.mxu0 %v2028
      %v2067 = vpop.f32.mrf.mxu0
      %v2068 = vadd.f32 0.0, %v2067
      %v2069 = vpop.f32.mrf.mxu0
      %v2070 = vpop.f32.mrf.mxu0
      %v2071 = vadd.f32 0.0, %v2070
      %v2072 = vpop.f32.mrf.mxu0
      %2073 = vdwg.mxu0
      %v2075 = vsel %vm2026, %v2019, 0
      %v2078 = vsel %vm2026, %v2023, 0
      %2080 = vmatprep.subr.bf16.mxu0 0
      %2081 = vmatpush1.bf16.xpose.msra.mxu0 0
      %2082 = vmatprep.subr.bf16.mxu0 0
      %2083 = vmatpush1.bf16.xpose.msra.mxu0 0
      %2084 = vmatprep.subr.bf16.mxu0 0
      %2085 = vmatpush1.bf16.xpose.msra.mxu0 0
      %2086 = vmatprep.subr.bf16.mxu0 0
      %2087 = vmatpush1.bf16.xpose.msra.mxu0 0
      %2088 = vmatprep.subr.bf16.mxu0 0
      %2089 = vmatpush1.bf16.xpose.msra.mxu0 0
      %2090 = vmatprep.subr.bf16.mxu0 0
      %2091 = vmatpush1.bf16.xpose.msra.mxu0 0
      %2092 = vmatprep.subr.bf16.mxu0 0
      %2093 = vmatpush1.bf16.xpose.msra.mxu0 0
      %2094 = vmatprep.subr.bf16.mxu0 0
      %2095 = vmatpush1.bf16.xpose.msra.mxu0 %v2078
      %2096 = vmatprep.subr.bf16.mxu0 0
      %2097 = vmatpush2.bf16.xpose.msra.mxu0 0
      %2098 = vmatprep.subr.bf16.mxu0 0
      %2099 = vmatpush2.bf16.xpose.msra.mxu0 0
      %2100 = vmatprep.subr.bf16.mxu0 0
      %2101 = vmatpush2.bf16.xpose.msra.mxu0 0
      %2102 = vmatprep.subr.bf16.mxu0 0
      %2103 = vmatpush2.bf16.xpose.msra.mxu0 0
      %2104 = vmatprep.subr.bf16.mxu0 0
      %2105 = vmatpush2.bf16.xpose.msra.mxu0 0
      %2106 = vmatprep.subr.bf16.mxu0 0
      %2107 = vmatpush2.bf16.xpose.msra.mxu0 0
      %2108 = vmatprep.subr.bf16.mxu0 0
      %2109 = vmatpush2.bf16.xpose.msra.mxu0 0
      %2110 = vmatprep.subr.bf16.mxu0 0
      %2111 = vmatpush2.bf16.xpose.msra.mxu0 0
      %2112 = vmatprep.mubr.bf16.mxu0 0
      %2113 = vmatmul.mubr.bf16.gmra.mxu0 %v2075
      %v2114 = vpop.f32.mrf.mxu0
      %v2115 = vadd.f32 0.0, %v2114
      %v2116 = vpop.f32.mrf.mxu0
      %v2117 = vpop.f32.mrf.mxu0
      %v2118 = vadd.f32 0.0, %v2117
      %v2119 = vpop.f32.mrf.mxu0
      %2120 = vdwg.mxu0
      %v2122 = vsel %vm2026, %v2020, 0
      %v2125 = vsel %vm2026, %v2024, 0
      %2127 = vmatprep.subr.bf16.mxu0 0
      %2128 = vmatpush1.bf16.xpose.msra.mxu0 0
      %2129 = vmatprep.subr.bf16.mxu0 0
      %2130 = vmatpush1.bf16.xpose.msra.mxu0 0
      %2131 = vmatprep.subr.bf16.mxu0 0
      %2132 = vmatpush1.bf16.xpose.msra.mxu0 0
      %2133 = vmatprep.subr.bf16.mxu0 0
      %2134 = vmatpush1.bf16.xpose.msra.mxu0 0
      %2135 = vmatprep.subr.bf16.mxu0 0
      %2136 = vmatpush1.bf16.xpose.msra.mxu0 0
      %2137 = vmatprep.subr.bf16.mxu0 0
      %2138 = vmatpush1.bf16.xpose.msra.mxu0 0
      %2139 = vmatprep.subr.bf16.mxu0 0
      %2140 = vmatpush1.bf16.xpose.msra.mxu0 0
      %2141 = vmatprep.subr.bf16.mxu0 0
      %2142 = vmatpush1.bf16.xpose.msra.mxu0 %v2125
      %2143 = vmatprep.subr.bf16.mxu0 0
      %2144 = vmatpush2.bf16.xpose.msra.mxu0 0
      %2145 = vmatprep.subr.bf16.mxu0 0
      %2146 = vmatpush2.bf16.xpose.msra.mxu0 0
      %2147 = vmatprep.subr.bf16.mxu0 0
      %2148 = vmatpush2.bf16.xpose.msra.mxu0 0
      %2149 = vmatprep.subr.bf16.mxu0 0
      %2150 = vmatpush2.bf16.xpose.msra.mxu0 0
      %2151 = vmatprep.subr.bf16.mxu0 0
      %2152 = vmatpush2.bf16.xpose.msra.mxu0 0
      %2153 = vmatprep.subr.bf16.mxu0 0
      %2154 = vmatpush2.bf16.xpose.msra.mxu0 0
      %2155 = vmatprep.subr.bf16.mxu0 0
      %2156 = vmatpush2.bf16.xpose.msra.mxu0 0
      %2157 = vmatprep.subr.bf16.mxu0 0
      %2158 = vmatpush2.bf16.xpose.msra.mxu0 0
      %2159 = vmatprep.mubr.bf16.mxu0 0
      %2160 = vmatmul.mubr.bf16.gmra.mxu0 %v2122
      %v2161 = vpop.f32.mrf.mxu0
      %v2162 = vadd.f32 0.0, %v2161
      %v2163 = vpop.f32.mrf.mxu0
      %v2164 = vpop.f32.mrf.mxu0
      %v2165 = vadd.f32 0.0, %v2164
      %v2166 = vpop.f32.mrf.mxu0
      %2167 = vdwg.mxu0
      %v2169 = vsel %vm2026, %v2021, 0
      %v2172 = vsel %vm2026, %v2025, 0
      %2174 = vmatprep.subr.bf16.mxu0 0
      %2175 = vmatpush1.bf16.xpose.msra.mxu0 0
      %2176 = vmatprep.subr.bf16.mxu0 0
      %2177 = vmatpush1.bf16.xpose.msra.mxu0 0
      %2178 = vmatprep.subr.bf16.mxu0 0
      %2179 = vmatpush1.bf16.xpose.msra.mxu0 0
      %2180 = vmatprep.subr.bf16.mxu0 0
      %2181 = vmatpush1.bf16.xpose.msra.mxu0 0
      %2182 = vmatprep.subr.bf16.mxu0 0
      %2183 = vmatpush1.bf16.xpose.msra.mxu0 0
      %2184 = vmatprep.subr.bf16.mxu0 0
      %2185 = vmatpush1.bf16.xpose.msra.mxu0 0
      %2186 = vmatprep.subr.bf16.mxu0 0
      %2187 = vmatpush1.bf16.xpose.msra.mxu0 0
      %2188 = vmatprep.subr.bf16.mxu0 0
      %2189 = vmatpush1.bf16.xpose.msra.mxu0 %v2172
      %2190 = vmatprep.subr.bf16.mxu0 0
      %2191 = vmatpush2.bf16.xpose.msra.mxu0 0
      %2192 = vmatprep.subr.bf16.mxu0 0
      %2193 = vmatpush2.bf16.xpose.msra.mxu0 0
      %2194 = vmatprep.subr.bf16.mxu0 0
      %2195 = vmatpush2.bf16.xpose.msra.mxu0 0
      %2196 = vmatprep.subr.bf16.mxu0 0
      %2197 = vmatpush2.bf16.xpose.msra.mxu0 0
      %2198 = vmatprep.subr.bf16.mxu0 0
      %2199 = vmatpush2.bf16.xpose.msra.mxu0 0
      %2200 = vmatprep.subr.bf16.mxu0 0
      %2201 = vmatpush2.bf16.xpose.msra.mxu0 0
      %2202 = vmatprep.subr.bf16.mxu0 0
      %2203 = vmatpush2.bf16.xpose.msra.mxu0 0
      %2204 = vmatprep.subr.bf16.mxu0 0
      %2205 = vmatpush2.bf16.xpose.msra.mxu0 0
      %2206 = vmatprep.mubr.bf16.mxu0 0
      %2207 = vmatmul.mubr.bf16.gmra.mxu0 %v2169
      %v2208 = vpop.f32.mrf.mxu0
      %v2209 = vadd.f32 0.0, %v2208
      %v2210 = vpop.f32.mrf.mxu0
      %v2211 = vpop.f32.mrf.mxu0
      %v2212 = vadd.f32 0.0, %v2211
      %v2213 = vpop.f32.mrf.mxu0
      %2214 = vdwg.mxu0
      %v2215 = vmul.f32 %v2068, 0.35355338
      %v2216 = vmul.f32 %v2071, 0.35355338
      %v2217 = vmul.f32 %v2115, 0.35355338
      %v2218 = vmul.f32 %v2118, 0.35355338
      %v2219 = vmul.f32 %v2162, 0.35355338
      %v2220 = vmul.f32 %v2165, 0.35355338
      %v2221 = vmul.f32 %v2209, 0.35355338
      %v2222 = vmul.f32 %v2212, 0.35355338
      %vm2223 = vcmask 121856
      %v2224 = vsel %vm2223, %v2215, -inf
      %2225 = vmax.xlane.f32.xlu0 %v2224
      %v2226 = vpop.xlane.xlu0 %2225
      %vm2227 = vcmask 120832
      %v2228 = vsel %vm2227, %v2216, -inf
      %2229 = vmax.xlane.f32.xlu0 %v2228
      %v2230 = vpop.xlane.xlu0 %2229
      %v2231 = vsel %vm2223, %v2217, -inf
      %2232 = vmax.xlane.f32.xlu0 %v2231
      %v2233 = vpop.xlane.xlu0 %2232
      %v2234 = vsel %vm2227, %v2218, -inf
      %2235 = vmax.xlane.f32.xlu0 %v2234
      %v2236 = vpop.xlane.xlu0 %2235
      %v2237 = vsel %vm2223, %v2219, -inf
      %2238 = vmax.xlane.f32.xlu0 %v2237
      %v2239 = vpop.xlane.xlu0 %2238
      %v2240 = vsel %vm2227, %v2220, -inf
      %2241 = vmax.xlane.f32.xlu0 %v2240
      %v2242 = vpop.xlane.xlu0 %2241
      %v2243 = vsel %vm2223, %v2221, -inf
      %2244 = vmax.xlane.f32.xlu0 %v2243
      %v2245 = vpop.xlane.xlu0 %2244
      %v2246 = vsel %vm2227, %v2222, -inf
      %2247 = vmax.xlane.f32.xlu0 %v2246
      %v2248 = vpop.xlane.xlu0 %2247
      %v2249 = vsub.f32 %v2215, %v2226
      %v2250 = vsub.f32 %v2216, %v2230
      %v2251 = vsub.f32 %v2217, %v2233
      %v2252 = vsub.f32 %v2218, %v2236
      %v2253 = vsub.f32 %v2219, %v2239
      %v2254 = vsub.f32 %v2220, %v2242
      %v2255 = vsub.f32 %v2221, %v2245
      %v2256 = vsub.f32 %v2222, %v2248
      %v2257 = vmul.f32 %v2249, 1.442695
      %v2258 = vpow.pop %v2257
      %v2259 = vmul.f32 %v2250, 1.442695
      %v2260 = vpow.pop %v2259
      %v2261 = vmul.f32 %v2251, 1.442695
      %v2262 = vpow.pop %v2261
      %v2263 = vmul.f32 %v2252, 1.442695
      %v2264 = vpow.pop %v2263
      %v2265 = vmul.f32 %v2253, 1.442695
      %v2266 = vpow.pop %v2265
      %v2267 = vmul.f32 %v2254, 1.442695
      %v2268 = vpow.pop %v2267
      %v2269 = vmul.f32 %v2255, 1.442695
      %v2270 = vpow.pop %v2269
      %v2271 = vmul.f32 %v2256, 1.442695
      %v2272 = vpow.pop %v2271
      %v2273 = vsel %vm2223, %v2258, 0.0
      %2274 = vadd.xlane.f32.xlu0 %v2273
      %v2275 = vpop.xlane.xlu0 %2274
      %v2276 = vsel %vm2227, %v2260, 0.0
      %2277 = vadd.xlane.f32.xlu0 %v2276
      %v2278 = vpop.xlane.xlu0 %2277
      %v2279 = vsel %vm2223, %v2262, 0.0
      %2280 = vadd.xlane.f32.xlu0 %v2279
      %v2281 = vpop.xlane.xlu0 %2280
      %v2282 = vsel %vm2227, %v2264, 0.0
      %2283 = vadd.xlane.f32.xlu0 %v2282
      %v2284 = vpop.xlane.xlu0 %2283
      %v2285 = vsel %vm2223, %v2266, 0.0
      %2286 = vadd.xlane.f32.xlu0 %v2285
      %v2287 = vpop.xlane.xlu0 %2286
      %v2288 = vsel %vm2227, %v2268, 0.0
      %2289 = vadd.xlane.f32.xlu0 %v2288
      %v2290 = vpop.xlane.xlu0 %2289
      %v2291 = vsel %vm2223, %v2270, 0.0
      %2292 = vadd.xlane.f32.xlu0 %v2291
      %v2293 = vpop.xlane.xlu0 %2292
      %v2294 = vsel %vm2227, %v2272, 0.0
      %2295 = vadd.xlane.f32.xlu0 %v2294
      %v2296 = vpop.xlane.xlu0 %2295
      %v2297 = vrcp.pop %v2275
      %v2298 = vrcp.pop %v2278
      %v2299 = vrcp.pop %v2281
      %v2300 = vrcp.pop %v2284
      %v2301 = vrcp.pop %v2287
      %v2302 = vrcp.pop %v2290
      %v2303 = vrcp.pop %v2293
      %v2304 = vrcp.pop %v2296
      %v2305 = vmul.f32 %v2258, %v2297
      %v2306 = vmul.f32 %v2260, %v2298
      %v2307 = vmul.f32 %v2262, %v2299
      %v2308 = vmul.f32 %v2264, %v2300
      %v2309 = vmul.f32 %v2266, %v2301
      %v2310 = vmul.f32 %v2268, %v2302
      %v2311 = vmul.f32 %v2270, %v2303
      %v2312 = vmul.f32 %v2272, %v2304
      %v2313 = vpack.c.bf16 %v2306, %v2305
      %v2314 = vpack.c.bf16 %v2308, %v2307
      %v2315 = vpack.c.bf16 %v2310, %v2309
      %v2316 = vpack.c.bf16 %v2312, %v2311
      %v2317 = vpack.c.bf16 %v1748, %v1745
      %v2318 = vpack.c.bf16 %v1837, %v1834
      %v2319 = vpack.c.bf16 %v1926, %v1923
      %v2320 = vpack.c.bf16 %v2015, %v2012
      %v2322 = vsel %vm2223, %v2313, 0
      %vm2324 = vcmask 1047552
      %v2325 = vsel %vm715, 4294967295, 65535
      %v2326 = vsel %vm2324, %v2325, 0
      %v2328 = vand.u32 %v2317, %v2326
      %2330 = vmatprep.subr.bf16.mxu0 0
      %2331 = vmatpush1.bf16.msra.mxu0 0
      %2332 = vmatprep.subr.bf16.mxu0 0
      %2333 = vmatpush1.bf16.msra.mxu0 0
      %2334 = vmatprep.subr.bf16.mxu0 0
      %2335 = vmatpush1.bf16.msra.mxu0 0
      %2336 = vmatprep.subr.bf16.mxu0 0
      %2337 = vmatpush1.bf16.msra.mxu0 0
      %2338 = vmatprep.subr.bf16.mxu0 0
      %2339 = vmatpush1.bf16.msra.mxu0 0
      %2340 = vmatprep.subr.bf16.mxu0 0
      %2341 = vmatpush1.bf16.msra.mxu0 0
      %2342 = vmatprep.subr.bf16.mxu0 0
      %2343 = vmatpush1.bf16.msra.mxu0 0
      %2344 = vmatprep.subr.bf16.mxu0 0
      %2345 = vmatpush1.bf16.msra.mxu0 %v2328
      %2346 = vmatprep.subr.bf16.mxu0 0
      %2347 = vmatpush2.bf16.msra.mxu0 0
      %2348 = vmatprep.subr.bf16.mxu0 0
      %2349 = vmatpush2.bf16.msra.mxu0 0
      %2350 = vmatprep.subr.bf16.mxu0 0
      %2351 = vmatpush2.bf16.msra.mxu0 0
      %2352 = vmatprep.subr.bf16.mxu0 0
      %2353 = vmatpush2.bf16.msra.mxu0 0
      %2354 = vmatprep.subr.bf16.mxu0 0
      %2355 = vmatpush2.bf16.msra.mxu0 0
      %2356 = vmatprep.subr.bf16.mxu0 0
      %2357 = vmatpush2.bf16.msra.mxu0 0
      %2358 = vmatprep.subr.bf16.mxu0 0
      %2359 = vmatpush2.bf16.msra.mxu0 0
      %2360 = vmatprep.subr.bf16.mxu0 0
      %2361 = vmatpush2.bf16.msra.mxu0 0
      %2362 = vmatprep.mubr.bf16.mxu0 0
      %2363 = vmatmul.mubr.bf16.gmra.mxu0 %v2322
      %v2364 = vpop.f32.mrf.mxu0
      %v2365 = vadd.f32 0.0, %v2364
      %v2366 = vpop.f32.mrf.mxu0
      %v2367 = vpop.f32.mrf.mxu0
      %v2368 = vadd.f32 0.0, %v2367
      %v2369 = vpop.f32.mrf.mxu0
      %2370 = vdwg.mxu0
      %v2372 = vsel %vm2223, %v2314, 0
      %v2375 = vand.u32 %v2318, %v2326
      %2377 = vmatprep.subr.bf16.mxu0 0
      %2378 = vmatpush1.bf16.msra.mxu0 0
      %2379 = vmatprep.subr.bf16.mxu0 0
      %2380 = vmatpush1.bf16.msra.mxu0 0
      %2381 = vmatprep.subr.bf16.mxu0 0
      %2382 = vmatpush1.bf16.msra.mxu0 0
      %2383 = vmatprep.subr.bf16.mxu0 0
      %2384 = vmatpush1.bf16.msra.mxu0 0
      %2385 = vmatprep.subr.bf16.mxu0 0
      %2386 = vmatpush1.bf16.msra.mxu0 0
      %2387 = vmatprep.subr.bf16.mxu0 0
      %2388 = vmatpush1.bf16.msra.mxu0 0
      %2389 = vmatprep.subr.bf16.mxu0 0
      %2390 = vmatpush1.bf16.msra.mxu0 0
      %2391 = vmatprep.subr.bf16.mxu0 0
      %2392 = vmatpush1.bf16.msra.mxu0 %v2375
      %2393 = vmatprep.subr.bf16.mxu0 0
      %2394 = vmatpush2.bf16.msra.mxu0 0
      %2395 = vmatprep.subr.bf16.mxu0 0
      %2396 = vmatpush2.bf16.msra.mxu0 0
      %2397 = vmatprep.subr.bf16.mxu0 0
      %2398 = vmatpush2.bf16.msra.mxu0 0
      %2399 = vmatprep.subr.bf16.mxu0 0
      %2400 = vmatpush2.bf16.msra.mxu0 0
      %2401 = vmatprep.subr.bf16.mxu0 0
      %2402 = vmatpush2.bf16.msra.mxu0 0
      %2403 = vmatprep.subr.bf16.mxu0 0
      %2404 = vmatpush2.bf16.msra.mxu0 0
      %2405 = vmatprep.subr.bf16.mxu0 0
      %2406 = vmatpush2.bf16.msra.mxu0 0
      %2407 = vmatprep.subr.bf16.mxu0 0
      %2408 = vmatpush2.bf16.msra.mxu0 0
      %2409 = vmatprep.mubr.bf16.mxu0 0
      %2410 = vmatmul.mubr.bf16.gmra.mxu0 %v2372
      %v2411 = vpop.f32.mrf.mxu0
      %v2412 = vadd.f32 0.0, %v2411
      %v2413 = vpop.f32.mrf.mxu0
      %v2414 = vpop.f32.mrf.mxu0
      %v2415 = vadd.f32 0.0, %v2414
      %v2416 = vpop.f32.mrf.mxu0
      %2417 = vdwg.mxu0
      %v2419 = vsel %vm2223, %v2315, 0
      %v2422 = vand.u32 %v2319, %v2326
      %2424 = vmatprep.subr.bf16.mxu0 0
      %2425 = vmatpush1.bf16.msra.mxu0 0
      %2426 = vmatprep.subr.bf16.mxu0 0
      %2427 = vmatpush1.bf16.msra.mxu0 0
      %2428 = vmatprep.subr.bf16.mxu0 0
      %2429 = vmatpush1.bf16.msra.mxu0 0
      %2430 = vmatprep.subr.bf16.mxu0 0
      %2431 = vmatpush1.bf16.msra.mxu0 0
      %2432 = vmatprep.subr.bf16.mxu0 0
      %2433 = vmatpush1.bf16.msra.mxu0 0
      %2434 = vmatprep.subr.bf16.mxu0 0
      %2435 = vmatpush1.bf16.msra.mxu0 0
      %2436 = vmatprep.subr.bf16.mxu0 0
      %2437 = vmatpush1.bf16.msra.mxu0 0
      %2438 = vmatprep.subr.bf16.mxu0 0
      %2439 = vmatpush1.bf16.msra.mxu0 %v2422
      %2440 = vmatprep.subr.bf16.mxu0 0
      %2441 = vmatpush2.bf16.msra.mxu0 0
      %2442 = vmatprep.subr.bf16.mxu0 0
      %2443 = vmatpush2.bf16.msra.mxu0 0
      %2444 = vmatprep.subr.bf16.mxu0 0
      %2445 = vmatpush2.bf16.msra.mxu0 0
      %2446 = vmatprep.subr.bf16.mxu0 0
      %2447 = vmatpush2.bf16.msra.mxu0 0
      %2448 = vmatprep.subr.bf16.mxu0 0
      %2449 = vmatpush2.bf16.msra.mxu0 0
      %2450 = vmatprep.subr.bf16.mxu0 0
      %2451 = vmatpush2.bf16.msra.mxu0 0
      %2452 = vmatprep.subr.bf16.mxu0 0
      %2453 = vmatpush2.bf16.msra.mxu0 0
      %2454 = vmatprep.subr.bf16.mxu0 0
      %2455 = vmatpush2.bf16.msra.mxu0 0
      %2456 = vmatprep.mubr.bf16.mxu0 0
      %2457 = vmatmul.mubr.bf16.gmra.mxu0 %v2419
      %v2458 = vpop.f32.mrf.mxu0
      %v2459 = vadd.f32 0.0, %v2458
      %v2460 = vpop.f32.mrf.mxu0
      %v2461 = vpop.f32.mrf.mxu0
      %v2462 = vadd.f32 0.0, %v2461
      %v2463 = vpop.f32.mrf.mxu0
      %2464 = vdwg.mxu0
      %v2466 = vsel %vm2223, %v2316, 0
      %v2469 = vand.u32 %v2320, %v2326
      %2471 = vmatprep.subr.bf16.mxu0 0
      %2472 = vmatpush1.bf16.msra.mxu0 0
      %2473 = vmatprep.subr.bf16.mxu0 0
      %2474 = vmatpush1.bf16.msra.mxu0 0
      %2475 = vmatprep.subr.bf16.mxu0 0
      %2476 = vmatpush1.bf16.msra.mxu0 0
      %2477 = vmatprep.subr.bf16.mxu0 0
      %2478 = vmatpush1.bf16.msra.mxu0 0
      %2479 = vmatprep.subr.bf16.mxu0 0
      %2480 = vmatpush1.bf16.msra.mxu0 0
      %2481 = vmatprep.subr.bf16.mxu0 0
      %2482 = vmatpush1.bf16.msra.mxu0 0
      %2483 = vmatprep.subr.bf16.mxu0 0
      %2484 = vmatpush1.bf16.msra.mxu0 0
      %2485 = vmatprep.subr.bf16.mxu0 0
      %2486 = vmatpush1.bf16.msra.mxu0 %v2469
      %2487 = vmatprep.subr.bf16.mxu0 0
      %2488 = vmatpush2.bf16.msra.mxu0 0
      %2489 = vmatprep.subr.bf16.mxu0 0
      %2490 = vmatpush2.bf16.msra.mxu0 0
      %2491 = vmatprep.subr.bf16.mxu0 0
      %2492 = vmatpush2.bf16.msra.mxu0 0
      %2493 = vmatprep.subr.bf16.mxu0 0
      %2494 = vmatpush2.bf16.msra.mxu0 0
      %2495 = vmatprep.subr.bf16.mxu0 0
      %2496 = vmatpush2.bf16.msra.mxu0 0
      %2497 = vmatprep.subr.bf16.mxu0 0
      %2498 = vmatpush2.bf16.msra.mxu0 0
      %2499 = vmatprep.subr.bf16.mxu0 0
      %2500 = vmatpush2.bf16.msra.mxu0 0
      %2501 = vmatprep.subr.bf16.mxu0 0
      %2502 = vmatpush2.bf16.msra.mxu0 0
      %2503 = vmatprep.mubr.bf16.mxu0 0
      %2504 = vmatmul.mubr.bf16.gmra.mxu0 %v2466
      %v2505 = vpop.f32.mrf.mxu0
      %v2506 = vadd.f32 0.0, %v2505
      %v2507 = vpop.f32.mrf.mxu0
      %v2508 = vpop.f32.mrf.mxu0
      %v2509 = vadd.f32 0.0, %v2508
      %v2510 = vpop.f32.mrf.mxu0
      %2511 = vdwg.mxu0
      %v2512 = vpack.c.bf16 %v2368, %v2365
      %v2513 = vpack.c.bf16 %v2415, %v2412
      %v2514 = vpack.c.bf16 %v2462, %v2459
      %v2515 = vpack.c.bf16 %v2509, %v2506
      %v2516 = vld [vmem:[%s667] sm:$0xf]
      %v2517 = vld [vmem:[%s667 + $0x4] sm:$0xf]
      %v2518 = vld [vmem:[%s667 + $0x8] sm:$0xf]
      %v2519 = vld [vmem:[%s667 + $0xc] sm:$0xf]
      %v2521 = vsel %vm2026, %v2512, 0
      %vm2523 = vcmask 1043456
      %v2525 = vsel %vm2523, %v2516, 0
      %2527 = vmatprep.subr.bf16.mxu0 0
      %2528 = vmatpush1.bf16.msra.mxu0 0
      %2529 = vmatprep.subr.bf16.mxu0 0
      %2530 = vmatpush1.bf16.msra.mxu0 0
      %2531 = vmatprep.subr.bf16.mxu0 0
      %2532 = vmatpush1.bf16.msra.mxu0 0
      %2533 = vmatprep.subr.bf16.mxu0 0
      %2534 = vmatpush1.bf16.msra.mxu0 0
      %2535 = vmatprep.subr.bf16.mxu0 0
      %2536 = vmatpush1.bf16.msra.mxu0 0
      %2537 = vmatprep.subr.bf16.mxu0 0
      %2538 = vmatpush1.bf16.msra.mxu0 0
      %2539 = vmatprep.subr.bf16.mxu0 0
      %2540 = vmatpush1.bf16.msra.mxu0 0
      %2541 = vmatprep.subr.bf16.mxu0 0
      %2542 = vmatpush1.bf16.msra.mxu0 %v2525
      %2543 = vmatprep.subr.bf16.mxu0 0
      %2544 = vmatpush2.bf16.msra.mxu0 0
      %2545 = vmatprep.subr.bf16.mxu0 0
      %2546 = vmatpush2.bf16.msra.mxu0 0
      %2547 = vmatprep.subr.bf16.mxu0 0
      %2548 = vmatpush2.bf16.msra.mxu0 0
      %2549 = vmatprep.subr.bf16.mxu0 0
      %2550 = vmatpush2.bf16.msra.mxu0 0
      %2551 = vmatprep.subr.bf16.mxu0 0
      %2552 = vmatpush2.bf16.msra.mxu0 0
      %2553 = vmatprep.subr.bf16.mxu0 0
      %2554 = vmatpush2.bf16.msra.mxu0 0
      %2555 = vmatprep.subr.bf16.mxu0 0
      %2556 = vmatpush2.bf16.msra.mxu0 0
      %2557 = vmatprep.subr.bf16.mxu0 0
      %2558 = vmatpush2.bf16.msra.mxu0 0
      %2559 = vmatprep.mubr.bf16.mxu0 0
      %2560 = vmatmul.mubr.bf16.gmra.mxu0 %v2521
      %v2561 = vpop.f32.mrf.mxu0
      %v2562 = vadd.f32 0.0, %v2561
      %v2563 = vpop.f32.mrf.mxu0
      %v2564 = vpop.f32.mrf.mxu0
      %v2565 = vadd.f32 0.0, %v2564
      %v2566 = vpop.f32.mrf.mxu0
      %2567 = vdwg.mxu0
      %v2569 = vsel %vm2026, %v2513, 0
      %v2572 = vsel %vm2523, %v2517, 0
      %2574 = vmatprep.subr.bf16.mxu0 0
      %2575 = vmatpush1.bf16.msra.mxu0 0
      %2576 = vmatprep.subr.bf16.mxu0 0
      %2577 = vmatpush1.bf16.msra.mxu0 0
      %2578 = vmatprep.subr.bf16.mxu0 0
      %2579 = vmatpush1.bf16.msra.mxu0 0
      %2580 = vmatprep.subr.bf16.mxu0 0
      %2581 = vmatpush1.bf16.msra.mxu0 0
      %2582 = vmatprep.subr.bf16.mxu0 0
      %2583 = vmatpush1.bf16.msra.mxu0 0
      %2584 = vmatprep.subr.bf16.mxu0 0
      %2585 = vmatpush1.bf16.msra.mxu0 0
      %2586 = vmatprep.subr.bf16.mxu0 0
      %2587 = vmatpush1.bf16.msra.mxu0 0
      %2588 = vmatprep.subr.bf16.mxu0 0
      %2589 = vmatpush1.bf16.msra.mxu0 %v2572
      %2590 = vmatprep.subr.bf16.mxu0 0
      %2591 = vmatpush2.bf16.msra.mxu0 0
      %2592 = vmatprep.subr.bf16.mxu0 0
      %2593 = vmatpush2.bf16.msra.mxu0 0
      %2594 = vmatprep.subr.bf16.mxu0 0
      %2595 = vmatpush2.bf16.msra.mxu0 0
      %2596 = vmatprep.subr.bf16.mxu0 0
      %2597 = vmatpush2.bf16.msra.mxu0 0
      %2598 = vmatprep.subr.bf16.mxu0 0
      %2599 = vmatpush2.bf16.msra.mxu0 0
      %2600 = vmatprep.subr.bf16.mxu0 0
      %2601 = vmatpush2.bf16.msra.mxu0 0
      %2602 = vmatprep.subr.bf16.mxu0 0
      %2603 = vmatpush2.bf16.msra.mxu0 0
      %2604 = vmatprep.subr.bf16.mxu0 0
      %2605 = vmatpush2.bf16.msra.mxu0 0
      %2606 = vmatprep.mubr.bf16.mxu0 0
      %2607 = vmatmul.mubr.bf16.gmra.mxu0 %v2569
      %v2608 = vpop.f32.mrf.mxu0
      %v2609 = vadd.f32 0.0, %v2608
      %v2610 = vpop.f32.mrf.mxu0
      %v2611 = vpop.f32.mrf.mxu0
      %v2612 = vadd.f32 0.0, %v2611
      %v2613 = vpop.f32.mrf.mxu0
      %2614 = vdwg.mxu0
      %v2616 = vsel %vm2026, %v2514, 0
      %v2619 = vsel %vm2523, %v2518, 0
      %2621 = vmatprep.subr.bf16.mxu0 0
      %2622 = vmatpush1.bf16.msra.mxu0 0
      %2623 = vmatprep.subr.bf16.mxu0 0
      %2624 = vmatpush1.bf16.msra.mxu0 0
      %2625 = vmatprep.subr.bf16.mxu0 0
      %2626 = vmatpush1.bf16.msra.mxu0 0
      %2627 = vmatprep.subr.bf16.mxu0 0
      %2628 = vmatpush1.bf16.msra.mxu0 0
      %2629 = vmatprep.subr.bf16.mxu0 0
      %2630 = vmatpush1.bf16.msra.mxu0 0
      %2631 = vmatprep.subr.bf16.mxu0 0
      %2632 = vmatpush1.bf16.msra.mxu0 0
      %2633 = vmatprep.subr.bf16.mxu0 0
      %2634 = vmatpush1.bf16.msra.mxu0 0
      %2635 = vmatprep.subr.bf16.mxu0 0
      %2636 = vmatpush1.bf16.msra.mxu0 %v2619
      %2637 = vmatprep.subr.bf16.mxu0 0
      %2638 = vmatpush2.bf16.msra.mxu0 0
      %2639 = vmatprep.subr.bf16.mxu0 0
      %2640 = vmatpush2.bf16.msra.mxu0 0
      %2641 = vmatprep.subr.bf16.mxu0 0
      %2642 = vmatpush2.bf16.msra.mxu0 0
      %2643 = vmatprep.subr.bf16.mxu0 0
      %2644 = vmatpush2.bf16.msra.mxu0 0
      %2645 = vmatprep.subr.bf16.mxu0 0
      %2646 = vmatpush2.bf16.msra.mxu0 0
      %2647 = vmatprep.subr.bf16.mxu0 0
      %2648 = vmatpush2.bf16.msra.mxu0 0
      %2649 = vmatprep.subr.bf16.mxu0 0
      %2650 = vmatpush2.bf16.msra.mxu0 0
      %2651 = vmatprep.subr.bf16.mxu0 0
      %2652 = vmatpush2.bf16.msra.mxu0 0
      %2653 = vmatprep.mubr.bf16.mxu0 0
      %2654 = vmatmul.mubr.bf16.gmra.mxu0 %v2616
      %v2655 = vpop.f32.mrf.mxu0
      %v2656 = vadd.f32 0.0, %v2655
      %v2657 = vpop.f32.mrf.mxu0
      %v2658 = vpop.f32.mrf.mxu0
      %v2659 = vadd.f32 0.0, %v2658
      %v2660 = vpop.f32.mrf.mxu0
      %2661 = vdwg.mxu0
      %v2663 = vsel %vm2026, %v2515, 0
      %v2666 = vsel %vm2523, %v2519, 0
      %2668 = vmatprep.subr.bf16.mxu0 0
      %2669 = vmatpush1.bf16.msra.mxu0 0
      %2670 = vmatprep.subr.bf16.mxu0 0
      %2671 = vmatpush1.bf16.msra.mxu0 0
      %2672 = vmatprep.subr.bf16.mxu0 0
      %2673 = vmatpush1.bf16.msra.mxu0 0
      %2674 = vmatprep.subr.bf16.mxu0 0
      %2675 = vmatpush1.bf16.msra.mxu0 0
      %2676 = vmatprep.subr.bf16.mxu0 0
      %2677 = vmatpush1.bf16.msra.mxu0 0
      %2678 = vmatprep.subr.bf16.mxu0 0
      %2679 = vmatpush1.bf16.msra.mxu0 0
      %2680 = vmatprep.subr.bf16.mxu0 0
      %2681 = vmatpush1.bf16.msra.mxu0 0
      %2682 = vmatprep.subr.bf16.mxu0 0
      %2683 = vmatpush1.bf16.msra.mxu0 %v2666
      %2684 = vmatprep.subr.bf16.mxu0 0
      %2685 = vmatpush2.bf16.msra.mxu0 0
      %2686 = vmatprep.subr.bf16.mxu0 0
      %2687 = vmatpush2.bf16.msra.mxu0 0
      %2688 = vmatprep.subr.bf16.mxu0 0
      %2689 = vmatpush2.bf16.msra.mxu0 0
      %2690 = vmatprep.subr.bf16.mxu0 0
      %2691 = vmatpush2.bf16.msra.mxu0 0
      %2692 = vmatprep.subr.bf16.mxu0 0
      %2693 = vmatpush2.bf16.msra.mxu0 0
      %2694 = vmatprep.subr.bf16.mxu0 0
      %2695 = vmatpush2.bf16.msra.mxu0 0
      %2696 = vmatprep.subr.bf16.mxu0 0
      %2697 = vmatpush2.bf16.msra.mxu0 0
      %2698 = vmatprep.subr.bf16.mxu0 0
      %2699 = vmatpush2.bf16.msra.mxu0 0
      %2700 = vmatprep.mubr.bf16.mxu0 0
      %2701 = vmatmul.mubr.bf16.gmra.mxu0 %v2663
      %v2702 = vpop.f32.mrf.mxu0
      %v2703 = vadd.f32 0.0, %v2702
      %v2704 = vpop.f32.mrf.mxu0
      %v2705 = vpop.f32.mrf.mxu0
      %v2706 = vadd.f32 0.0, %v2705
      %v2707 = vpop.f32.mrf.mxu0
      %2708 = vdwg.mxu0
      %v2709 = vadd.f32 %v2562, %v2609
      %v2710 = vadd.f32 %v2709, %v2656
      %v2711 = vadd.f32 %v2710, %v2703
      %v2712 = vsel %vm715, %v2565, 0.0
      %v2713 = vsel %vm715, %v2612, 0.0
      %v2714 = vadd.f32 %v2712, %v2713
      %v2715 = vsel %vm715, %v2659, 0.0
      %v2716 = vadd.f32 %v2714, %v2715
      %v2717 = vsel %vm715, %v2706, 0.0
      %v2718 = vadd.f32 %v2716, %v2717
      %v2719 = vadd.f32 %v707, %v2711
      %v2720 = vadd.f32 %v708, %v2718
      %v2721 = vld [vmem:[%s670] sm:$0x1]
      %v2723 = vlaneseq
      %v2724 = vshrl.u32 %v2723, 7
      %v2725 = vsub.s32 0, %v2724
      %v2726 = vrot.slane %v2721, %v2725
      %v2728 = vadd.f32 %v2719, %v2726
      %v2729 = vadd.f32 %v2720, %v2726
      %v2730 = vld [vmem:[%s673] sm:$0x1]
      %v2731 = vld [vmem:[%s676] sm:$0x1]
      %2732 = vadd.xlane.f32.xlu0 %v2728
      %v2733 = vpop.xlane.xlu0 %2732
      %v2734 = vsel %vm715, %v2729, 0.0
      %2735 = vadd.xlane.f32.xlu0 %v2734
      %v2736 = vpop.xlane.xlu0 %2735
      %v2737 = vmul.f32 %v2733, 0.03125
      %v2738 = vmul.f32 %v2736, 0.03125
      %v2739 = vsub.f32 %v2728, %v2737
      %v2740 = vsub.f32 %v2729, %v2738
      %v2741 = vsel %vm721, %v2739, 0.0
      %v2742 = vsel %vm721, %v2740, 0.0
      %v2743 = vmul.f32 %v2741, %v2741
      %v2744 = vmul.f32 %v2742, %v2742
      %2745 = vadd.xlane.f32.xlu0 %v2743
      %v2746 = vpop.xlane.xlu0 %2745
      %v2747 = vsel %vm715, %v2744, 0.0
      %2748 = vadd.xlane.f32.xlu0 %v2747
      %v2749 = vpop.xlane.xlu0 %2748
      %v2750 = vmul.f32 %v2746, 0.03125
      %v2751 = vmul.f32 %v2749, 0.03125
      %v2752 = vadd.f32 %v2750, 1e-05
      %v2753 = vadd.f32 %v2751, 1e-05
      %v2754 = vrsqrt.pop %v2752
      %v2755 = vrsqrt.pop %v2753
      %v2756 = vmul.f32 %v2741, %v2754
      %v2757 = vmul.f32 %v2742, %v2755
      %v2759 = vlaneseq
      %v2760 = vshrl.u32 %v2759, 7
      %v2761 = vsub.s32 0, %v2760
      %v2762 = vrot.slane %v2730, %v2761
      %v2764 = vmul.f32 %v2756, %v2762
      %v2765 = vmul.f32 %v2757, %v2762
      %v2767 = vlaneseq
      %v2768 = vshrl.u32 %v2767, 7
      %v2769 = vsub.s32 0, %v2768
      %v2770 = vrot.slane %v2731, %v2769
      %v2772 = vadd.f32 %v2764, %v2770
      %v2773 = vadd.f32 %v2765, %v2770
      %v2774 = vpack.c.bf16 %v2773, %v2772
      %v2775 = vld [vmem:[%s681] sm:$0xf]
      %v2776 = vld [vmem:[%s681 + $0x4] sm:$0xf]
      %v2777 = vld [vmem:[%s681 + $0x8] sm:$0xf]
      %v2778 = vld [vmem:[%s681 + $0xc] sm:$0xf]
      %v2779 = vld [vmem:[%s681 + $0x10] sm:$0xf]
      %v2780 = vld [vmem:[%s681 + $0x14] sm:$0xf]
      %v2781 = vld [vmem:[%s681 + $0x18] sm:$0xf]
      %v2782 = vld [vmem:[%s681 + $0x1c] sm:$0xf]
      %v2783 = vld [vmem:[%s681 + $0x20] sm:$0xf]
      %v2784 = vld [vmem:[%s681 + $0x24] sm:$0xf]
      %v2785 = vld [vmem:[%s681 + $0x28] sm:$0xf]
      %v2786 = vld [vmem:[%s681 + $0x2c] sm:$0xf]
      %v2787 = vld [vmem:[%s681 + $0x30] sm:$0xf]
      %v2788 = vld [vmem:[%s681 + $0x34] sm:$0xf]
      %v2789 = vld [vmem:[%s681 + $0x38] sm:$0xf]
      %v2790 = vld [vmem:[%s681 + $0x3c] sm:$0xf]
      %v2791 = vld [vmem:[%s684] sm:$0x1]
      %v2793 = vlaneseq
      %v2794 = vshrl.u32 %v2793, 7
      %v2795 = vsub.s32 0, %v2794
      %v2796 = vrot.slane %v2791, %v2795
      %v2814 = vunpack.c.l.b16 %v2775
      %v2815 = vunpack.c.l.b16 %v2776
      %v2816 = vunpack.c.l.b16 %v2777
      %v2817 = vunpack.c.l.b16 %v2778
      %v2818 = vunpack.c.l.b16 %v2779
      %v2819 = vunpack.c.l.b16 %v2780
      %v2820 = vunpack.c.l.b16 %v2781
      %v2821 = vunpack.c.l.b16 %v2782
      %v2822 = vunpack.c.l.b16 %v2783
      %v2823 = vunpack.c.l.b16 %v2784
      %v2824 = vunpack.c.l.b16 %v2785
      %v2825 = vunpack.c.l.b16 %v2786
      %v2826 = vunpack.c.l.b16 %v2787
      %v2827 = vunpack.c.l.b16 %v2788
      %v2828 = vunpack.c.l.b16 %v2789
      %v2829 = vunpack.c.l.b16 %v2790
      %v2830 = vpack.c.b16 %v2815, %v2814
      %v2831 = vpack.c.b16 %v2817, %v2816
      %v2832 = vpack.c.b16 %v2819, %v2818
      %v2833 = vpack.c.b16 %v2821, %v2820
      %v2834 = vpack.c.b16 %v2823, %v2822
      %v2835 = vpack.c.b16 %v2825, %v2824
      %v2836 = vpack.c.b16 %v2827, %v2826
      %v2837 = vpack.c.b16 %v2829, %v2828
      %2846 = vmatprep.subr.bf16.mxu0 0
      %2847 = vmatpush1.bf16.msra.mxu0 %v2837
      %2848 = vmatprep.subr.bf16.mxu0 0
      %2849 = vmatpush1.bf16.msra.mxu0 %v2836
      %2850 = vmatprep.subr.bf16.mxu0 0
      %2851 = vmatpush1.bf16.msra.mxu0 %v2835
      %2852 = vmatprep.subr.bf16.mxu0 0
      %2853 = vmatpush1.bf16.msra.mxu0 %v2834
      %2854 = vmatprep.subr.bf16.mxu0 0
      %2855 = vmatpush1.bf16.msra.mxu0 %v2833
      %2856 = vmatprep.subr.bf16.mxu0 0
      %2857 = vmatpush1.bf16.msra.mxu0 %v2832
      %2858 = vmatprep.subr.bf16.mxu0 0
      %2859 = vmatpush1.bf16.msra.mxu0 %v2831
      %2860 = vmatprep.subr.bf16.mxu0 0
      %2861 = vmatpush1.bf16.msra.mxu0 %v2830
      %2862 = vmatprep.subr.bf16.mxu0 0
      %2863 = vmatpush2.bf16.msra.mxu0 0
      %2864 = vmatprep.subr.bf16.mxu0 0
      %2865 = vmatpush2.bf16.msra.mxu0 0
      %2866 = vmatprep.subr.bf16.mxu0 0
      %2867 = vmatpush2.bf16.msra.mxu0 0
      %2868 = vmatprep.subr.bf16.mxu0 0
      %2869 = vmatpush2.bf16.msra.mxu0 0
      %2870 = vmatprep.subr.bf16.mxu0 0
      %2871 = vmatpush2.bf16.msra.mxu0 0
      %2872 = vmatprep.subr.bf16.mxu0 0
      %2873 = vmatpush2.bf16.msra.mxu0 0
      %2874 = vmatprep.subr.bf16.mxu0 0
      %2875 = vmatpush2.bf16.msra.mxu0 0
      %2876 = vmatprep.subr.bf16.mxu0 0
      %2877 = vmatpush2.bf16.msra.mxu0 0
      %2878 = vmatprep.mubr.bf16.mxu0 0
      %2879 = vmatmul.mubr.bf16.gmra.mxu0 %v2774
      %v2880 = vpop.f32.mrf.mxu0
      %v2881 = vadd.f32 %v2796, %v2880
      %v2882 = vpop.f32.mrf.mxu0
      %v2883 = vpop.f32.mrf.mxu0
      %v2884 = vadd.f32 %v2796, %v2883
      %v2885 = vpop.f32.mrf.mxu0
      %2886 = vdwg.mxu0
      %v2887 = vmul.f32 %v2881, 0.5
      %v2888 = vmul.f32 %v2884, 0.5
      %v2889 = vmul.f32 %v2881, 0.70710677
      %v2890 = vmul.f32 %v2884, 0.70710677
      %v2891 = verf.f32.pop %v2889
      %v2892 = verf.f32.pop %v2890
      %v2893 = vadd.f32 %v2891, 1.0
      %v2894 = vadd.f32 %v2892, 1.0
      %v2895 = vmul.f32 %v2887, %v2893
      %v2896 = vmul.f32 %v2888, %v2894
      %v2897 = vpack.c.bf16 %v2896, %v2895
      %v2898 = vld [vmem:[%s689] sm:$0xf]
      %v2899 = vld [vmem:[%s689 + $0x4] sm:$0xf]
      %v2900 = vld [vmem:[%s689 + $0x8] sm:$0xf]
      %v2901 = vld [vmem:[%s689 + $0xc] sm:$0xf]
      %v2902 = vld [vmem:[%s689 + $0x10] sm:$0xf]
      %v2903 = vld [vmem:[%s689 + $0x14] sm:$0xf]
      %v2904 = vld [vmem:[%s689 + $0x18] sm:$0xf]
      %v2905 = vld [vmem:[%s689 + $0x1c] sm:$0xf]
      %v2906 = vld [vmem:[%s689 + $0x20] sm:$0xf]
      %v2907 = vld [vmem:[%s689 + $0x24] sm:$0xf]
      %v2908 = vld [vmem:[%s689 + $0x28] sm:$0xf]
      %v2909 = vld [vmem:[%s689 + $0x2c] sm:$0xf]
      %v2910 = vld [vmem:[%s689 + $0x30] sm:$0xf]
      %v2911 = vld [vmem:[%s689 + $0x34] sm:$0xf]
      %v2912 = vld [vmem:[%s689 + $0x38] sm:$0xf]
      %v2913 = vld [vmem:[%s689 + $0x3c] sm:$0xf]
      %v2914 = vld [vmem:[%s692] sm:$0x1]
      %v2916 = vlaneseq
      %v2917 = vshrl.u32 %v2916, 7
      %v2918 = vsub.s32 0, %v2917
      %v2919 = vrot.slane %v2914, %v2918
      %v2937 = vunpack.c.l.b16 %v2898
      %v2938 = vunpack.c.l.b16 %v2899
      %v2939 = vunpack.c.l.b16 %v2900
      %v2940 = vunpack.c.l.b16 %v2901
      %v2941 = vunpack.c.l.b16 %v2902
      %v2942 = vunpack.c.l.b16 %v2903
      %v2943 = vunpack.c.l.b16 %v2904
      %v2944 = vunpack.c.l.b16 %v2905
      %v2945 = vunpack.c.l.b16 %v2906
      %v2946 = vunpack.c.l.b16 %v2907
      %v2947 = vunpack.c.l.b16 %v2908
      %v2948 = vunpack.c.l.b16 %v2909
      %v2949 = vunpack.c.l.b16 %v2910
      %v2950 = vunpack.c.l.b16 %v2911
      %v2951 = vunpack.c.l.b16 %v2912
      %v2952 = vunpack.c.l.b16 %v2913
      %v2953 = vpack.c.b16 %v2938, %v2937
      %v2954 = vpack.c.b16 %v2940, %v2939
      %v2955 = vpack.c.b16 %v2942, %v2941
      %v2956 = vpack.c.b16 %v2944, %v2943
      %v2957 = vpack.c.b16 %v2946, %v2945
      %v2958 = vpack.c.b16 %v2948, %v2947
      %v2959 = vpack.c.b16 %v2950, %v2949
      %v2960 = vpack.c.b16 %v2952, %v2951
      %2969 = vmatprep.subr.bf16.mxu0 0
      %2970 = vmatpush1.bf16.msra.mxu0 %v2960
      %2971 = vmatprep.subr.bf16.mxu0 0
      %2972 = vmatpush1.bf16.msra.mxu0 %v2959
      %2973 = vmatprep.subr.bf16.mxu0 0
      %2974 = vmatpush1.bf16.msra.mxu0 %v2958
      %2975 = vmatprep.subr.bf16.mxu0 0
      %2976 = vmatpush1.bf16.msra.mxu0 %v2957
      %2977 = vmatprep.subr.bf16.mxu0 0
      %2978 = vmatpush1.bf16.msra.mxu0 %v2956
      %2979 = vmatprep.subr.bf16.mxu0 0
      %2980 = vmatpush1.bf16.msra.mxu0 %v2955
      %2981 = vmatprep.subr.bf16.mxu0 0
      %2982 = vmatpush1.bf16.msra.mxu0 %v2954
      %2983 = vmatprep.subr.bf16.mxu0 0
      %2984 = vmatpush1.bf16.msra.mxu0 %v2953
      %2985 = vmatprep.subr.bf16.mxu0 0
      %2986 = vmatpush2.bf16.msra.mxu0 0
      %2987 = vmatprep.subr.bf16.mxu0 0
      %2988 = vmatpush2.bf16.msra.mxu0 0
      %2989 = vmatprep.subr.bf16.mxu0 0
      %2990 = vmatpush2.bf16.msra.mxu0 0
      %2991 = vmatprep.subr.bf16.mxu0 0
      %2992 = vmatpush2.bf16.msra.mxu0 0
      %2993 = vmatprep.subr.bf16.mxu0 0
      %2994 = vmatpush2.bf16.msra.mxu0 0
      %2995 = vmatprep.subr.bf16.mxu0 0
      %2996 = vmatpush2.bf16.msra.mxu0 0
      %2997 = vmatprep.subr.bf16.mxu0 0
      %2998 = vmatpush2.bf16.msra.mxu0 0
      %2999 = vmatprep.subr.bf16.mxu0 0
      %3000 = vmatpush2.bf16.msra.mxu0 0
      %3001 = vmatprep.mubr.bf16.mxu0 0
      %3002 = vmatmul.mubr.bf16.gmra.mxu0 %v2897
      %v3003 = vpop.f32.mrf.mxu0
      %v3004 = vadd.f32 %v2919, %v3003
      %v3005 = vpop.f32.mrf.mxu0
      %v3006 = vpop.f32.mrf.mxu0
      %v3007 = vadd.f32 %v2919, %v3006
      %v3008 = vpop.f32.mrf.mxu0
      %3009 = vdwg.mxu0
      %v3010 = vadd.f32 %v2728, %v3004
      %v3011 = vadd.f32 %v2729, %v3007
      %3012 = vst [vmem:[%s697] sm:$0xff] %v3010
      %3013 = vst [vmem:[%s697 + $0x8] sm:$0x7f] %v3011
      %p3014 = scmp.lt.s32.totalorder %s29, 1
      %s3015 = scalar_select %p3014, %s29, 1
      %s3016 = smul.addr %s3015, 2
      %s3017 = smul.addr %s3016, 8
      %s3018 = scalar_lea.vmem %s14, %s3017
      // Predicated region
      $region81: #{_lambda_.7} parent=75 // pred_check
        %p3019 = pneg %p419
      $region82: #{_lambda_.7} parent=75 // pred_check_branch
        %3021 = sbr.rel (%p3019) target = $region84
      $region83: #{_lambda_.7} parent=75 // pred_region
        _
      $region84: #{_lambda_.7} parent=75 // pred_fallthru
        _
    $region76: #{_lambda_.7} parent=5 // pred_fallthru
      _
    %p3022 = scmp.le.s32.totalorder 2, %s20
    // Predicated region
    $region85: #{_lambda_.7} parent=5 // pred_check
      %p3023 = pneg %p3022
    $region86: #{_lambda_.7} parent=5 // pred_check_branch
      %3025 = sbr.rel (%p3023) target = $region88
    $region87: #{_lambda_.7} parent=5 // pred_region
      %s3026 = ssub.s32 %s20, 2
      // Predicated region
      $region89: #{_lambda_.7} parent=87 // pred_check
        %p3027 = pneg %p425
      $region90: #{_lambda_.7} parent=87 // pred_check_branch
        %3029 = sbr.rel (%p3027) target = $region92
      $region91: #{_lambda_.7} parent=87 // pred_region
        %p3030 = scmp.lt.s32.totalorder %s31, 1
        %s3031 = scalar_select %p3030, %s31, 1
        %s3032 = smul.addr %s3031, 2
        %s3033 = smul.addr %s3032, 8
        %s3034 = scalar_lea.vmem %s14, %s3033
      $region92: #{_lambda_.7} parent=87 // pred_fallthru
        _
    $region88: #{_lambda_.7} parent=5 // pred_fallthru
      _
  $region6: #{_lambda_.7} parent=0 // loop_footer
    %s24 = sadd.s32 1, %s20
  $region7: #{_lambda_.7} parent=0 // loop_footer_branch
    %19 = sbr.rel target = $region3
  $region8: #{_lambda_.7} parent=0 // loop_exit
    _

</llo_original>
